<compile_context>
chip_gen: v5e
topology: v5e:2x2
jax: 0.10.0
libtpu: 0.0.40
codegen_flags: <defaults>
</compile_context>

<pallas_src>
import functools

import jax
import jax.numpy as jnp
from jax.experimental import pallas as pl
from jax.experimental.pallas import tpu as pltpu


def _round_up(x, m):
    return (x + m - 1) // m * m


def _vmem_capacity_bytes():
    try:
        info = pltpu.get_tpu_info()
        for attr in ("vmem_capacity_bytes", "vmem_bytes", "vmem_size_bytes"):
            v = getattr(info, attr, None)
            if v:
                return int(v)
    except Exception:
        pass
    return 64 * 1024 * 1024              # conservative default (v7x per-TC)


def _num_tensorcores():
    """Per-chip TensorCore count (megacore split only pays off when > 1)."""
    try:
        info = pltpu.get_tpu_info()
        for attr in ("num_cores", "core_count", "num_tensor_cores",
                     "tensorcore_count"):
            v = getattr(info, attr, None)
            if v:
                return max(1, min(2, int(v)))
    except Exception:
        pass
    try:
        kind = jax.devices()[0].device_kind.lower()
        if ("v7" in kind) or ("v5p" in kind) or ("v4" in kind):
            return 2
    except Exception:
        pass
    return 1                              # v5e / v6e: single TensorCore


def _vmem_budget_and_limit():
    cap = _vmem_capacity_bytes()
    # ~44 MiB on v7x (64 MiB physical), ~90 MiB on v5e/v6e (128 MiB physical)
    budget = min(int(cap * 0.70), 96 * 1024 * 1024)
    limit = min(cap - 2 * 1024 * 1024, budget + 16 * 1024 * 1024)
    return budget, int(limit)


def _pick_tm(M, Ck_pad, Cout_pad, K, halo, out_bytes, budget):
    """Largest row tile whose buffers (honestly accounted) fit the budget."""
    tm = 2048
    while tm > 128:
        need = (2 * (tm + halo) * Ck_pad * 2        # bf16 slab, double-buffered
                + 2 * tm * Cout_pad * out_bytes      # pipelined output buffers
                + tm * Cout_pad * 4                  # f32 accumulator
                + 2 * tm * K * Ck_pad * 2            # fattened-LHS temporaries
                + K * K * Ck_pad * Cout_pad * 2      # single-buffered weights
                + Cout_pad * 4)                      # bias
        if need <= budget:
            break
        tm //= 2
    return max(128, min(tm, _round_up(M, 128)))


def _conv_taps_kernel(x_hbm, w_ref, b_ref, o_ref, slab, sem, *,
                      n_inner, tm, slab_rows, row_stride, K, apply_relu):
    o_idx = pl.program_id(0)               # "parallel" axis (megacore on 2-TC)
    j = pl.program_id(1)                   # sequential per-core axis
    tile = o_idx * n_inner + j
    slot = j % 2

    def _copy(tile_idx, slot_idx):
        start = pl.multiple_of(tile_idx * tm, 128)
        return pltpu.make_async_copy(
            x_hbm.at[pl.ds(start, slab_rows)], slab.at[slot_idx],
            sem.at[slot_idx])

    @pl.when(j == 0)                       # prime this core's pipeline
    def _():
        _copy(tile, slot).start()

    @pl.when(j + 1 < n_inner)              # prefetch next slab (other slot)
    def _():
        _copy(tile + 1, 1 - slot).start()

    # wait for the current slab (identical descriptor as the one started)
    _copy(tile, slot).wait()

    cur = slab[slot]                       # (slab_rows, Ck_pad) bf16
    acc = None
    for kh in range(K):                    # K fat matmuls of depth K*Ck_pad
        base = kh * row_stride             # sublane-aligned (row_stride % 16 == 0)
        lhs = jnp.concatenate(
            [cur[base + kw:base + kw + tm, :] for kw in range(K)], axis=-1)
        part = jnp.dot(lhs, w_ref[kh], preferred_element_type=jnp.float32)
        acc = part if acc is None else acc + part
    y = acc + b_ref[...]                   # folded conv-bias + inference BN
    if apply_relu:
        y = jnp.maximum(y, 0.0)
    o_ref[...] = y.astype(o_ref.dtype)


def _conv3x3_bn(x_nhwc, w, b, gamma, beta, mean, var, *,
                stride, relu, out_dtype, eps=1e-5):
    """3x3 conv (pad=1, stride 1 or 2) + folded inference BN (+ optional ReLU).

    x_nhwc: (N, H, W, Cp), Cp >= w.shape[1]; extra channels must be zero.
    Returns (N, Ho, Wo, Cout_pad) in out_dtype, channels zero-padded to 128.
    """
    N, H, W, Cp = x_nhwc.shape
    C_out, c_in = int(w.shape[0]), int(w.shape[1])

    x = x_nhwc.astype(jnp.bfloat16)
    w_t = jnp.transpose(w, (2, 3, 1, 0)).astype(jnp.float32)   # (3,3,cin,Cout)
    if Cp > c_in:      # activation carries zero-padded channels -> pad w rows
        w_t = jnp.pad(w_t, ((0, 0), (0, 0), (0, Cp - c_in), (0, 0)))

    if stride == 1:
        K = 3
        Ck = Cp
        Ck_pad = _round_up(Ck, 128)
        Hi = H + 2
        Wp = _round_up(W + 2, 16)          # aligned row stride
        # single fused pad: spatial halo + width alignment + channel alignment
        xv = jnp.pad(x, ((0, 0), (1, 1), (1, Wp - W - 1), (0, Ck_pad - Ck)))
        Ho, Wo = H, W
        w_k = w_t                                              # (3,3,Ck,Cout)
    elif stride == 2:
        K = 2
        ph, pw = H % 2, W % 2
        xp = jnp.pad(x, ((0, 0), (1, 1 + ph), (1, 1 + pw), (0, 0)))
        Hp, Wq = H + 2 + ph, W + 2 + pw
        # space-to-depth: stride-2 3x3 conv == stride-1 2x2 conv on 4*Cp input
        xv = (xp.reshape(N, Hp // 2, 2, Wq // 2, 2, Cp)
                .transpose(0, 1, 3, 2, 4, 5)
                .reshape(N, Hp // 2, Wq // 2, 4 * Cp))
        Hi, Wb = Hp // 2, Wq // 2
        Ck = 4 * Cp
        Ck_pad = _round_up(Ck, 128)
        Wp = _round_up(Wb, 16)
        xv = jnp.pad(xv, ((0, 0), (0, 0), (0, Wp - Wb), (0, Ck_pad - Ck)))
        Ho, Wo = Hi - 1, Wb - 1
        w4 = jnp.pad(w_t, ((0, 1), (0, 1), (0, 0), (0, 0)))    # (4,4,Cp,Cout)
        w4 = w4.reshape(2, 2, 2, 2, Cp, C_out).transpose(0, 2, 1, 3, 4, 5)
        w_k = w4.reshape(2, 2, 4 * Cp, C_out)                  # (2,2,Ck,Cout)
    else:
        raise NotImplementedError("only stride 1 or 2 supported")

    # fold conv bias + inference-mode BatchNorm into the weights / bias
    scale = gamma / jnp.sqrt(var + eps)                        # (Cout,)
    bias = beta + scale * (b - mean)                           # (Cout,)
    w_k = w_k * scale                                          # scale out cols

    Cout_pad = _round_up(C_out, 128)                           # lane-dense out
    w_k = jnp.pad(w_k, ((0, 0), (0, 0), (0, Ck_pad - Ck), (0, Cout_pad - C_out)))
    bias = jnp.pad(bias, (0, Cout_pad - C_out))
    # (K, K*Ck_pad, Cout_pad): row index = kw*Ck_pad + c (matches concat LHS)
    w_flat = w_k.reshape(K, K * Ck_pad, Cout_pad).astype(jnp.bfloat16)
    bias2 = bias.reshape(1, Cout_pad).astype(jnp.float32)

    out_bytes = jnp.dtype(out_dtype).itemsize
    budget, vmem_limit = _vmem_budget_and_limit()
    M = N * Hi * Wp
    halo = _round_up((K - 1) * (Wp + 1), 16)   # max tap row offset, aligned
    tm = _pick_tm(M, Ck_pad, Cout_pad, K, halo, out_bytes, budget)
    slab_rows = tm + halo

    n_tiles = pl.cdiv(M, tm)
    n_outer = max(1, min(_num_tensorcores(), n_tiles))   # 2-way only on 2-TC
    n_inner = pl.cdiv(n_tiles, n_outer)
    total = n_outer * n_inner
    M_pad = total * tm

    # flat row-matrix view of the padded activation (stays in HBM)
    xf = xv.reshape(M, Ck_pad)
    xf = jnp.pad(xf, ((0, M_pad + halo - M), (0, 0)))
    # TODO(synk): fold this flat row padding into the 4-D pad above.

    kernel = functools.partial(
        _conv_taps_kernel, n_inner=n_inner, tm=tm, slab_rows=slab_rows,
        row_stride=Wp, K=K, apply_relu=relu)

    flops = 2 * M_pad * (K * K * Ck_pad) * Cout_pad
    bytes_accessed = ((M_pad + halo) * Ck_pad * 2
                      + M_pad * Cout_pad * out_bytes
                      + K * K * Ck_pad * Cout_pad * 2)

    out = pl.pallas_call(
        kernel,
        out_shape=jax.ShapeDtypeStruct((M_pad, Cout_pad), out_dtype),
        grid_spec=pltpu.PrefetchScalarGridSpec(
            num_scalar_prefetch=0,
            grid=(n_outer, n_inner),
            in_specs=[
                pl.BlockSpec(memory_space=pl.ANY),                    # xf (HBM)
                pl.BlockSpec(memory_space=pltpu.MemorySpace.VMEM),    # weights, 1 copy
                pl.BlockSpec(memory_space=pltpu.MemorySpace.VMEM),    # bias, 1 copy
            ],
            out_specs=pl.BlockSpec((tm, Cout_pad),
                                   lambda o, j: (o * n_inner + j, 0)),
            scratch_shapes=[
                pltpu.VMEM((2, slab_rows, Ck_pad), jnp.bfloat16),     # dbl buffer
                pltpu.SemaphoreType.DMA((2,)),
            ],
        ),
        compiler_params=pltpu.CompilerParams(
            dimension_semantics=("parallel", "arbitrary"),
            vmem_limit_bytes=vmem_limit,
        ),
        cost_estimate=pl.CostEstimate(
            flops=int(flops), transcendentals=0,
            bytes_accessed=int(bytes_accessed)),
    )(xf, w_flat, bias2)

    # crop junk rows/cols; KEEP the 128-padded channel dim (consumed by conv2)
    out = out[:M].reshape(N, Hi, Wp, Cout_pad)[:, :Ho, :Wo, :]
    return out                                      # NHWC, out_dtype


def res_basic_block(x_nchw, p, stride):
    x = jnp.transpose(x_nchw, (0, 2, 3, 1))         # NCHW -> NHWC once
    c_out = int(p["w1"].shape[0])
    h = _conv3x3_bn(x, p["w1"], p["b1"], p["g1"], p["be1"], p["m1"], p["v1"],
                    stride=stride, relu=True, out_dtype=jnp.bfloat16)
    # h carries its 128-padded channel dim straight into conv2 (no strip/re-pad)
    y = _conv3x3_bn(h, p["w2"], p["b2"], p["g2"], p["be2"], p["m2"], p["v2"],
                    stride=1, relu=False, out_dtype=jnp.bfloat16)
    y = y[..., :c_out]                              # strip channel pad once
    return jnp.transpose(y, (0, 3, 1, 2)).astype(x_nchw.dtype)   # back to NCHW


# ---- pure-JAX reference (lax conv, f32) for the correctness check ----
def _ref_conv_bn(x, w, b, gamma, beta, mean, var, *, stride, relu, eps=1e-5):
    y = jax.lax.conv_general_dilated(
        x, w, (stride, stride), ((1, 1), (1, 1)),
        dimension_numbers=("NCHW", "OIHW", "NCHW"))
    y = y + b.reshape(1, -1, 1, 1)
    y = (y - mean.reshape(1, -1, 1, 1)) / jnp.sqrt(var.reshape(1, -1, 1, 1) + eps)
    y = y * gamma.reshape(1, -1, 1, 1) + beta.reshape(1, -1, 1, 1)
    return jnp.maximum(y, 0.0) if relu else y


def _ref_block(x, p, stride):
    h = _ref_conv_bn(x, p["w1"], p["b1"], p["g1"], p["be1"], p["m1"], p["v1"],
                     stride=stride, relu=True)
    return _ref_conv_bn(h, p["w2"], p["b2"], p["g2"], p["be2"], p["m2"], p["v2"],
                        stride=1, relu=False)


if __name__ == "__main__":
    N, C_in, H, W = 2, 4, 16, 16
    C_out, stride = 8, 2

    key = jax.random.PRNGKey(0)
    ks = jax.random.split(key, 13)
    x = jax.random.normal(ks[0], (N, C_in, H, W), jnp.float32)

    params = dict(
        # conv1 (c_in -> c_out, stride) + BN1
        w1=jax.random.normal(ks[1], (C_out, C_in, 3, 3), jnp.float32) * 0.1,
        b1=jax.random.normal(ks[2], (C_out,), jnp.float32) * 0.1,
        g1=1.0 + jax.random.normal(ks[3], (C_out,), jnp.float32) * 0.1,
        be1=jax.random.normal(ks[4], (C_out,), jnp.float32) * 0.1,
        m1=jax.random.normal(ks[5], (C_out,), jnp.float32) * 0.1,
        v1=0.9 + jnp.abs(jax.random.normal(ks[6], (C_out,), jnp.float32)) * 0.1,
        # conv2 (c_out -> c_out, stride 1) + BN2
        w2=jax.random.normal(ks[7], (C_out, C_out, 3, 3), jnp.float32) * 0.1,
        b2=jax.random.normal(ks[8], (C_out,), jnp.float32) * 0.1,
        g2=1.0 + jax.random.normal(ks[9], (C_out,), jnp.float32) * 0.1,
        be2=jax.random.normal(ks[10], (C_out,), jnp.float32) * 0.1,
        m2=jax.random.normal(ks[11], (C_out,), jnp.float32) * 0.1,
        v2=0.9 + jnp.abs(jax.random.normal(ks[12], (C_out,), jnp.float32)) * 0.1,
    )

    block = jax.jit(functools.partial(res_basic_block, stride=stride))
    out = jax.block_until_ready(block(x, params))
    ref = jax.block_until_ready(_ref_block(x, params, stride))

    assert out.shape == (N, C_out, H // stride, W // stride), out.shape
    max_err = float(jnp.max(jnp.abs(out - ref)))
    # bf16 MXU inputs + bf16 intermediates -> loosened tolerance vs f32 reference
    assert jnp.allclose(out, ref, atol=5e-2, rtol=5e-2), max_err
    print("KERNEL_OK")
</pallas_src>

<mosaic_0001>
module attributes {stable_mosaic.version = 11 : i64} {
  func.func @_conv_taps_kernel(%arg0: i32, %arg1: i32, %arg2: memref<416x128xbf16, #tpu.memory_space<any>>, %arg3: memref<2x256x128xbf16, #tpu.memory_space<vmem>>, %arg4: memref<1x128xf32, #tpu.memory_space<vmem>>, %arg5: memref<384x128xbf16, #tpu.memory_space<vmem>>, %arg6: memref<2x416x128xbf16, #tpu.memory_space<vmem>>, %arg7: memref<2x!tpu.dma_semaphore, #tpu.memory_space<semaphore_mem>>) attributes {dimension_semantics = [#tpu.dimension_semantics<parallel>, #tpu.dimension_semantics<arbitrary>], iteration_bounds = array<i64: 1, 1>, scalar_prefetch = 0 : i64, scratch_operands = 2 : i64, tpu.core_type = #tpu.core_type<tc>, window_params = [{}, {pipeline_mode = #tpu.pipeline_mode<synchronous>, transform_indices = @transform_1, window_bounds = array<i64: 2, 256, 128>}, {pipeline_mode = #tpu.pipeline_mode<synchronous>, transform_indices = @transform_2, window_bounds = array<i64: 1, 128>}, {transform_indices = @transform_3, window_bounds = array<i64: 384, 128>}]} {
    %c1_i32 = arith.constant 1 : i32
    %0 = arith.muli %arg0, %c1_i32 : i32
    %1 = arith.addi %0, %arg1 : i32
    %c2_i32 = arith.constant 2 : i32
    %c0_i32 = arith.constant 0 : i32
    %2 = arith.cmpi eq, %c2_i32, %c0_i32 : i32
    %c1_i32_0 = arith.constant 1 : i32
    %3 = arith.select %2, %c1_i32_0, %c2_i32 : i32
    %4 = arith.remsi %arg1, %3 : i32
    %c0_i32_1 = arith.constant 0 : i32
    %5 = arith.cmpi ne, %4, %c0_i32_1 : i32
    %c0_i32_2 = arith.constant 0 : i32
    %6 = arith.cmpi slt, %4, %c0_i32_2 : i32
    %c0_i32_3 = arith.constant 0 : i32
    %7 = arith.cmpi slt, %3, %c0_i32_3 : i32
    %8 = arith.xori %6, %7 : i1
    %9 = arith.andi %8, %5 : i1
    %10 = arith.addi %4, %3 : i32
    %11 = arith.select %9, %10, %4 : i32
    %c0_i32_4 = arith.constant 0 : i32
    %12 = arith.cmpi eq, %arg1, %c0_i32_4 : i32
    %13 = arith.extui %12 : i1 to i32
    %c0_i32_5 = arith.constant 0 : i32
    %14 = arith.cmpi ne, %13, %c0_i32_5 : i32
    scf.if %14 {
      %c384_i32_24 = arith.constant 384 : i32
      %49 = arith.muli %1, %c384_i32_24 : i32
      %50 = tpu.assume_multiple %49, 128 : i32
      %c0_i32_25 = arith.constant 0 : i32
      %51 = tpu.memref_slice %arg2[%50, %c0_i32_25] : memref<416x128xbf16, #tpu.memory_space<any>> -> memref<416x128xbf16, #tpu.memory_space<any>>
      %c0_i32_26 = arith.constant 0 : i32
      %c0_i32_27 = arith.constant 0 : i32
      %52 = tpu.memref_slice %arg6[%11, %c0_i32_26, %c0_i32_27] : memref<2x416x128xbf16, #tpu.memory_space<vmem>> -> memref<1x416x128xbf16, #tpu.memory_space<vmem>>
      %53 = tpu.memref_squeeze %52 : memref<1x416x128xbf16, #tpu.memory_space<vmem>> -> memref<416x128xbf16, #tpu.memory_space<vmem>>
      %54 = tpu.memref_slice %arg7[%11] : memref<2x!tpu.dma_semaphore, #tpu.memory_space<semaphore_mem>> -> memref<1x!tpu.dma_semaphore, #tpu.memory_space<semaphore_mem>>
      %55 = tpu.memref_squeeze %54 : memref<1x!tpu.dma_semaphore, #tpu.memory_space<semaphore_mem>> -> memref<!tpu.dma_semaphore, #tpu.memory_space<semaphore_mem>>
      tpu.enqueue_dma source(%51 : memref<416x128xbf16, #tpu.memory_space<any>>) target(%53 : memref<416x128xbf16, #tpu.memory_space<vmem>>) target_semaphore(%55 : memref<!tpu.dma_semaphore, #tpu.memory_space<semaphore_mem>>)
    } else {
    }
    %c1_i32_6 = arith.constant 1 : i32
    %15 = arith.addi %arg1, %c1_i32_6 : i32
    %c1_i32_7 = arith.constant 1 : i32
    %16 = arith.cmpi slt, %15, %c1_i32_7 : i32
    %17 = arith.extui %16 : i1 to i32
    %c0_i32_8 = arith.constant 0 : i32
    %18 = arith.cmpi ne, %17, %c0_i32_8 : i32
    scf.if %18 {
      %c1_i32_24 = arith.constant 1 : i32
      %49 = arith.addi %1, %c1_i32_24 : i32
      %c1_i32_25 = arith.constant 1 : i32
      %50 = arith.subi %c1_i32_25, %11 : i32
      %c384_i32_26 = arith.constant 384 : i32
      %51 = arith.muli %49, %c384_i32_26 : i32
      %52 = tpu.assume_multiple %51, 128 : i32
      %c0_i32_27 = arith.constant 0 : i32
      %53 = tpu.memref_slice %arg2[%52, %c0_i32_27] : memref<416x128xbf16, #tpu.memory_space<any>> -> memref<416x128xbf16, #tpu.memory_space<any>>
      %c0_i32_28 = arith.constant 0 : i32
      %c0_i32_29 = arith.constant 0 : i32
      %54 = tpu.memref_slice %arg6[%50, %c0_i32_28, %c0_i32_29] : memref<2x416x128xbf16, #tpu.memory_space<vmem>> -> memref<1x416x128xbf16, #tpu.memory_space<vmem>>
      %55 = tpu.memref_squeeze %54 : memref<1x416x128xbf16, #tpu.memory_space<vmem>> -> memref<416x128xbf16, #tpu.memory_space<vmem>>
      %56 = tpu.memref_slice %arg7[%50] : memref<2x!tpu.dma_semaphore, #tpu.memory_space<semaphore_mem>> -> memref<1x!tpu.dma_semaphore, #tpu.memory_space<semaphore_mem>>
      %57 = tpu.memref_squeeze %56 : memref<1x!tpu.dma_semaphore, #tpu.memory_space<semaphore_mem>> -> memref<!tpu.dma_semaphore, #tpu.memory_space<semaphore_mem>>
      tpu.enqueue_dma source(%53 : memref<416x128xbf16, #tpu.memory_space<any>>) target(%55 : memref<416x128xbf16, #tpu.memory_space<vmem>>) target_semaphore(%57 : memref<!tpu.dma_semaphore, #tpu.memory_space<semaphore_mem>>)
    } else {
    }
    %c384_i32 = arith.constant 384 : i32
    %19 = arith.muli %1, %c384_i32 : i32
    %20 = tpu.assume_multiple %19, 128 : i32
    %c0_i32_9 = arith.constant 0 : i32
    %21 = tpu.memref_slice %arg2[%20, %c0_i32_9] : memref<416x128xbf16, #tpu.memory_space<any>> -> memref<416x128xbf16, #tpu.memory_space<any>>
    %c0_i32_10 = arith.constant 0 : i32
    %c0_i32_11 = arith.constant 0 : i32
    %22 = tpu.memref_slice %arg6[%11, %c0_i32_10, %c0_i32_11] : memref<2x416x128xbf16, #tpu.memory_space<vmem>> -> memref<1x416x128xbf16, #tpu.memory_space<vmem>>
    %23 = tpu.memref_squeeze %22 : memref<1x416x128xbf16, #tpu.memory_space<vmem>> -> memref<416x128xbf16, #tpu.memory_space<vmem>>
    %24 = tpu.memref_slice %arg7[%11] : memref<2x!tpu.dma_semaphore, #tpu.memory_space<semaphore_mem>> -> memref<1x!tpu.dma_semaphore, #tpu.memory_space<semaphore_mem>>
    %25 = tpu.memref_squeeze %24 : memref<1x!tpu.dma_semaphore, #tpu.memory_space<semaphore_mem>> -> memref<!tpu.dma_semaphore, #tpu.memory_space<semaphore_mem>>
    tpu.wait_dma2 semaphore(%25 : memref<!tpu.dma_semaphore, #tpu.memory_space<semaphore_mem>>) src(%21 : memref<416x128xbf16, #tpu.memory_space<any>>) dst(%23 : memref<416x128xbf16, #tpu.memory_space<vmem>>)
    %26 = arith.index_cast %11 : i32 to index
    %c0 = arith.constant 0 : index
    %c0_12 = arith.constant 0 : index
    %27 = vector.load %arg6[%26, %c0, %c0_12] : memref<2x416x128xbf16, #tpu.memory_space<vmem>>, vector<1x416x128xbf16>
    %28 = vector.shape_cast %27 : vector<1x416x128xbf16> to vector<416x128xbf16>
    %29 = vector.extract_strided_slice %28 {offsets = [0, 0], sizes = [384, 128], strides = [1, 1]} : vector<416x128xbf16> to vector<384x128xbf16>
    %30 = vector.extract_strided_slice %28 {offsets = [1, 0], sizes = [384, 128], strides = [1, 1]} : vector<416x128xbf16> to vector<384x128xbf16>
    %31 = tpu.concatenate %29, %30 in 1 : vector<384x128xbf16>, vector<384x128xbf16> -> vector<384x256xbf16>
    %c0_13 = arith.constant 0 : index
    %c0_14 = arith.constant 0 : index
    %c0_15 = arith.constant 0 : index
    %32 = vector.load %arg3[%c0_13, %c0_14, %c0_15] : memref<2x256x128xbf16, #tpu.memory_space<vmem>>, vector<1x256x128xbf16>
    %33 = vector.shape_cast %32 : vector<1x256x128xbf16> to vector<256x128xbf16>
    %cst = arith.constant dense<0.000000e+00> : vector<384x128xf32>
    %34 = tpu.matmul %31, %33, %cst {dimension_numbers = #tpu.dot_dimension_numbers<[1], [0], [0], [1], [0, 0, 1, 1], [], []>} : vector<384x256xbf16>, vector<256x128xbf16>, vector<384x128xf32> -> vector<384x128xf32>
    %35 = vector.extract_strided_slice %28 {offsets = [16, 0], sizes = [384, 128], strides = [1, 1]} : vector<416x128xbf16> to vector<384x128xbf16>
    %36 = vector.extract_strided_slice %28 {offsets = [17, 0], sizes = [384, 128], strides = [1, 1]} : vector<416x128xbf16> to vector<384x128xbf16>
    %37 = tpu.concatenate %35, %36 in 1 : vector<384x128xbf16>, vector<384x128xbf16> -> vector<384x256xbf16>
    %c1 = arith.constant 1 : index
    %c0_16 = arith.constant 0 : index
    %c0_17 = arith.constant 0 : index
    %38 = vector.load %arg3[%c1, %c0_16, %c0_17] : memref<2x256x128xbf16, #tpu.memory_space<vmem>>, vector<1x256x128xbf16>
    %39 = vector.shape_cast %38 : vector<1x256x128xbf16> to vector<256x128xbf16>
    %cst_18 = arith.constant dense<0.000000e+00> : vector<384x128xf32>
    %40 = tpu.matmul %37, %39, %cst_18 {dimension_numbers = #tpu.dot_dimension_numbers<[1], [0], [0], [1], [0, 0, 1, 1], [], []>} : vector<384x256xbf16>, vector<256x128xbf16>, vector<384x128xf32> -> vector<384x128xf32>
    %41 = arith.addf %34, %40 : vector<384x128xf32>
    %c0_19 = arith.constant 0 : index
    %c0_20 = arith.constant 0 : index
    %42 = vector.load %arg4[%c0_19, %c0_20] : memref<1x128xf32, #tpu.memory_space<vmem>>, vector<1x128xf32>
    %43 = vector.broadcast %42 : vector<1x128xf32> to vector<384x128xf32>
    %44 = arith.addf %41, %43 : vector<384x128xf32>
    %cst_21 = arith.constant 0.000000e+00 : f32
    %45 = vector.broadcast %cst_21 : f32 to vector<384x128xf32>
    %46 = arith.maximumf %44, %45 : vector<384x128xf32>
    %47 = arith.truncf %46 : vector<384x128xf32> to vector<384x128xbf16>
    %c0_22 = arith.constant 0 : index
    %c0_23 = arith.constant 0 : index
    %48 = vector.load %arg5[%c0_22, %c0_23] : memref<384x128xbf16, #tpu.memory_space<vmem>>, vector<384x128xbf16>
    tpu.vector_store %arg5[%c0_22, %c0_23], %47 {strides = array<i32>} : memref<384x128xbf16, #tpu.memory_space<vmem>>, vector<384x128xbf16>,
    return
  }
  func.func @transform_1(%arg0: i32, %arg1: i32) -> (i32, i32, i32) {
    %c0_i32 = arith.constant 0 : i32
    %c0_i32_0 = arith.constant 0 : i32
    %c0_i32_1 = arith.constant 0 : i32
    %c0_i32_2 = arith.constant 0 : i32
    return %c0_i32, %c0_i32_0, %c0_i32_1 : i32, i32, i32
  }
  func.func @transform_2(%arg0: i32, %arg1: i32) -> (i32, i32) {
    %c0_i32 = arith.constant 0 : i32
    %c0_i32_0 = arith.constant 0 : i32
    %c0_i32_1 = arith.constant 0 : i32
    return %c0_i32, %c0_i32_0 : i32, i32
  }
  func.func @transform_3(%arg0: i32, %arg1: i32) -> (i32, i32) {
    %c1_i32 = arith.constant 1 : i32
    %0 = arith.muli %arg0, %c1_i32 : i32
    %1 = arith.addi %0, %arg1 : i32
    %c0_i32 = arith.constant 0 : i32
    %c0_i32_0 = arith.constant 0 : i32
    return %1, %c0_i32 : i32, i32
  }
}

module attributes {stable_mosaic.version = 11 : i64} {
  func.func @_conv_taps_kernel(%arg0: i32, %arg1: i32, %arg2: memref<432x128xbf16, #tpu.memory_space<any>>, %arg3: memref<3x384x128xbf16, #tpu.memory_space<vmem>>, %arg4: memref<1x128xf32, #tpu.memory_space<vmem>>, %arg5: memref<384x128xbf16, #tpu.memory_space<vmem>>, %arg6: memref<2x432x128xbf16, #tpu.memory_space<vmem>>, %arg7: memref<2x!tpu.dma_semaphore, #tpu.memory_space<semaphore_mem>>) attributes {dimension_semantics = [#tpu.dimension_semantics<parallel>, #tpu.dimension_semantics<arbitrary>], iteration_bounds = array<i64: 1, 1>, scalar_prefetch = 0 : i64, scratch_operands = 2 : i64, tpu.core_type = #tpu.core_type<tc>, window_params = [{}, {pipeline_mode = #tpu.pipeline_mode<synchronous>, transform_indices = @transform_1, window_bounds = array<i64: 3, 384, 128>}, {pipeline_mode = #tpu.pipeline_mode<synchronous>, transform_indices = @transform_2, window_bounds = array<i64: 1, 128>}, {transform_indices = @transform_3, window_bounds = array<i64: 384, 128>}]} {
    %c1_i32 = arith.constant 1 : i32
    %0 = arith.muli %arg0, %c1_i32 : i32
    %1 = arith.addi %0, %arg1 : i32
    %c2_i32 = arith.constant 2 : i32
    %c0_i32 = arith.constant 0 : i32
    %2 = arith.cmpi eq, %c2_i32, %c0_i32 : i32
    %c1_i32_0 = arith.constant 1 : i32
    %3 = arith.select %2, %c1_i32_0, %c2_i32 : i32
    %4 = arith.remsi %arg1, %3 : i32
    %c0_i32_1 = arith.constant 0 : i32
    %5 = arith.cmpi ne, %4, %c0_i32_1 : i32
    %c0_i32_2 = arith.constant 0 : i32
    %6 = arith.cmpi slt, %4, %c0_i32_2 : i32
    %c0_i32_3 = arith.constant 0 : i32
    %7 = arith.cmpi slt, %3, %c0_i32_3 : i32
    %8 = arith.xori %6, %7 : i1
    %9 = arith.andi %8, %5 : i1
    %10 = arith.addi %4, %3 : i32
    %11 = arith.select %9, %10, %4 : i32
    %c0_i32_4 = arith.constant 0 : i32
    %12 = arith.cmpi eq, %arg1, %c0_i32_4 : i32
    %13 = arith.extui %12 : i1 to i32
    %c0_i32_5 = arith.constant 0 : i32
    %14 = arith.cmpi ne, %13, %c0_i32_5 : i32
    scf.if %14 {
      %c384_i32_26 = arith.constant 384 : i32
      %57 = arith.muli %1, %c384_i32_26 : i32
      %58 = tpu.assume_multiple %57, 128 : i32
      %c0_i32_27 = arith.constant 0 : i32
      %59 = tpu.memref_slice %arg2[%58, %c0_i32_27] : memref<432x128xbf16, #tpu.memory_space<any>> -> memref<432x128xbf16, #tpu.memory_space<any>>
      %c0_i32_28 = arith.constant 0 : i32
      %c0_i32_29 = arith.constant 0 : i32
      %60 = tpu.memref_slice %arg6[%11, %c0_i32_28, %c0_i32_29] : memref<2x432x128xbf16, #tpu.memory_space<vmem>> -> memref<1x432x128xbf16, #tpu.memory_space<vmem>>
      %61 = tpu.memref_squeeze %60 : memref<1x432x128xbf16, #tpu.memory_space<vmem>> -> memref<432x128xbf16, #tpu.memory_space<vmem>>
      %62 = tpu.memref_slice %arg7[%11] : memref<2x!tpu.dma_semaphore, #tpu.memory_space<semaphore_mem>> -> memref<1x!tpu.dma_semaphore, #tpu.memory_space<semaphore_mem>>
      %63 = tpu.memref_squeeze %62 : memref<1x!tpu.dma_semaphore, #tpu.memory_space<semaphore_mem>> -> memref<!tpu.dma_semaphore, #tpu.memory_space<semaphore_mem>>
      tpu.enqueue_dma source(%59 : memref<432x128xbf16, #tpu.memory_space<any>>) target(%61 : memref<432x128xbf16, #tpu.memory_space<vmem>>) target_semaphore(%63 : memref<!tpu.dma_semaphore, #tpu.memory_space<semaphore_mem>>)
    } else {
    }
    %c1_i32_6 = arith.constant 1 : i32
    %15 = arith.addi %arg1, %c1_i32_6 : i32
    %c1_i32_7 = arith.constant 1 : i32
    %16 = arith.cmpi slt, %15, %c1_i32_7 : i32
    %17 = arith.extui %16 : i1 to i32
    %c0_i32_8 = arith.constant 0 : i32
    %18 = arith.cmpi ne, %17, %c0_i32_8 : i32
    scf.if %18 {
      %c1_i32_26 = arith.constant 1 : i32
      %57 = arith.addi %1, %c1_i32_26 : i32
      %c1_i32_27 = arith.constant 1 : i32
      %58 = arith.subi %c1_i32_27, %11 : i32
      %c384_i32_28 = arith.constant 384 : i32
      %59 = arith.muli %57, %c384_i32_28 : i32
      %60 = tpu.assume_multiple %59, 128 : i32
      %c0_i32_29 = arith.constant 0 : i32
      %61 = tpu.memref_slice %arg2[%60, %c0_i32_29] : memref<432x128xbf16, #tpu.memory_space<any>> -> memref<432x128xbf16, #tpu.memory_space<any>>
      %c0_i32_30 = arith.constant 0 : i32
      %c0_i32_31 = arith.constant 0 : i32
      %62 = tpu.memref_slice %arg6[%58, %c0_i32_30, %c0_i32_31] : memref<2x432x128xbf16, #tpu.memory_space<vmem>> -> memref<1x432x128xbf16, #tpu.memory_space<vmem>>
      %63 = tpu.memref_squeeze %62 : memref<1x432x128xbf16, #tpu.memory_space<vmem>> -> memref<432x128xbf16, #tpu.memory_space<vmem>>
      %64 = tpu.memref_slice %arg7[%58] : memref<2x!tpu.dma_semaphore, #tpu.memory_space<semaphore_mem>> -> memref<1x!tpu.dma_semaphore, #tpu.memory_space<semaphore_mem>>
      %65 = tpu.memref_squeeze %64 : memref<1x!tpu.dma_semaphore, #tpu.memory_space<semaphore_mem>> -> memref<!tpu.dma_semaphore, #tpu.memory_space<semaphore_mem>>
      tpu.enqueue_dma source(%61 : memref<432x128xbf16, #tpu.memory_space<any>>) target(%63 : memref<432x128xbf16, #tpu.memory_space<vmem>>) target_semaphore(%65 : memref<!tpu.dma_semaphore, #tpu.memory_space<semaphore_mem>>)
    } else {
    }
    %c384_i32 = arith.constant 384 : i32
    %19 = arith.muli %1, %c384_i32 : i32
    %20 = tpu.assume_multiple %19, 128 : i32
    %c0_i32_9 = arith.constant 0 : i32
    %21 = tpu.memref_slice %arg2[%20, %c0_i32_9] : memref<432x128xbf16, #tpu.memory_space<any>> -> memref<432x128xbf16, #tpu.memory_space<any>>
    %c0_i32_10 = arith.constant 0 : i32
    %c0_i32_11 = arith.constant 0 : i32
    %22 = tpu.memref_slice %arg6[%11, %c0_i32_10, %c0_i32_11] : memref<2x432x128xbf16, #tpu.memory_space<vmem>> -> memref<1x432x128xbf16, #tpu.memory_space<vmem>>
    %23 = tpu.memref_squeeze %22 : memref<1x432x128xbf16, #tpu.memory_space<vmem>> -> memref<432x128xbf16, #tpu.memory_space<vmem>>
    %24 = tpu.memref_slice %arg7[%11] : memref<2x!tpu.dma_semaphore, #tpu.memory_space<semaphore_mem>> -> memref<1x!tpu.dma_semaphore, #tpu.memory_space<semaphore_mem>>
    %25 = tpu.memref_squeeze %24 : memref<1x!tpu.dma_semaphore, #tpu.memory_space<semaphore_mem>> -> memref<!tpu.dma_semaphore, #tpu.memory_space<semaphore_mem>>
    tpu.wait_dma2 semaphore(%25 : memref<!tpu.dma_semaphore, #tpu.memory_space<semaphore_mem>>) src(%21 : memref<432x128xbf16, #tpu.memory_space<any>>) dst(%23 : memref<432x128xbf16, #tpu.memory_space<vmem>>)
    %26 = arith.index_cast %11 : i32 to index
    %c0 = arith.constant 0 : index
    %c0_12 = arith.constant 0 : index
    %27 = vector.load %arg6[%26, %c0, %c0_12] : memref<2x432x128xbf16, #tpu.memory_space<vmem>>, vector<1x432x128xbf16>
    %28 = vector.shape_cast %27 : vector<1x432x128xbf16> to vector<432x128xbf16>
    %29 = vector.extract_strided_slice %28 {offsets = [0, 0], sizes = [384, 128], strides = [1, 1]} : vector<432x128xbf16> to vector<384x128xbf16>
    %30 = vector.extract_strided_slice %28 {offsets = [1, 0], sizes = [384, 128], strides = [1, 1]} : vector<432x128xbf16> to vector<384x128xbf16>
    %31 = vector.extract_strided_slice %28 {offsets = [2, 0], sizes = [384, 128], strides = [1, 1]} : vector<432x128xbf16> to vector<384x128xbf16>
    %32 = tpu.concatenate %29, %30, %31 in 1 : vector<384x128xbf16>, vector<384x128xbf16>, vector<384x128xbf16> -> vector<384x384xbf16>
    %c0_13 = arith.constant 0 : index
    %c0_14 = arith.constant 0 : index
    %c0_15 = arith.constant 0 : index
    %33 = vector.load %arg3[%c0_13, %c0_14, %c0_15] : memref<3x384x128xbf16, #tpu.memory_space<vmem>>, vector<1x384x128xbf16>
    %34 = vector.shape_cast %33 : vector<1x384x128xbf16> to vector<384x128xbf16>
    %cst = arith.constant dense<0.000000e+00> : vector<384x128xf32>
    %35 = tpu.matmul %32, %34, %cst {dimension_numbers = #tpu.dot_dimension_numbers<[1], [0], [0], [1], [0, 0, 1, 1], [], []>} : vector<384x384xbf16>, vector<384x128xbf16>, vector<384x128xf32> -> vector<384x128xf32>
    %36 = vector.extract_strided_slice %28 {offsets = [16, 0], sizes = [384, 128], strides = [1, 1]} : vector<432x128xbf16> to vector<384x128xbf16>
    %37 = vector.extract_strided_slice %28 {offsets = [17, 0], sizes = [384, 128], strides = [1, 1]} : vector<432x128xbf16> to vector<384x128xbf16>
    %38 = vector.extract_strided_slice %28 {offsets = [18, 0], sizes = [384, 128], strides = [1, 1]} : vector<432x128xbf16> to vector<384x128xbf16>
    %39 = tpu.concatenate %36, %37, %38 in 1 : vector<384x128xbf16>, vector<384x128xbf16>, vector<384x128xbf16> -> vector<384x384xbf16>
    %c1 = arith.constant 1 : index
    %c0_16 = arith.constant 0 : index
    %c0_17 = arith.constant 0 : index
    %40 = vector.load %arg3[%c1, %c0_16, %c0_17] : memref<3x384x128xbf16, #tpu.memory_space<vmem>>, vector<1x384x128xbf16>
    %41 = vector.shape_cast %40 : vector<1x384x128xbf16> to vector<384x128xbf16>
    %cst_18 = arith.constant dense<0.000000e+00> : vector<384x128xf32>
    %42 = tpu.matmul %39, %41, %cst_18 {dimension_numbers = #tpu.dot_dimension_numbers<[1], [0], [0], [1], [0, 0, 1, 1], [], []>} : vector<384x384xbf16>, vector<384x128xbf16>, vector<384x128xf32> -> vector<384x128xf32>
    %43 = arith.addf %35, %42 : vector<384x128xf32>
    %44 = vector.extract_strided_slice %28 {offsets = [32, 0], sizes = [384, 128], strides = [1, 1]} : vector<432x128xbf16> to vector<384x128xbf16>
    %45 = vector.extract_strided_slice %28 {offsets = [33, 0], sizes = [384, 128], strides = [1, 1]} : vector<432x128xbf16> to vector<384x128xbf16>
    %46 = vector.extract_strided_slice %28 {offsets = [34, 0], sizes = [384, 128], strides = [1, 1]} : vector<432x128xbf16> to vector<384x128xbf16>
    %47 = tpu.concatenate %44, %45, %46 in 1 : vector<384x128xbf16>, vector<384x128xbf16>, vector<384x128xbf16> -> vector<384x384xbf16>
    %c2 = arith.constant 2 : index
    %c0_19 = arith.constant 0 : index
    %c0_20 = arith.constant 0 : index
    %48 = vector.load %arg3[%c2, %c0_19, %c0_20] : memref<3x384x128xbf16, #tpu.memory_space<vmem>>, vector<1x384x128xbf16>
    %49 = vector.shape_cast %48 : vector<1x384x128xbf16> to vector<384x128xbf16>
    %cst_21 = arith.constant dense<0.000000e+00> : vector<384x128xf32>
    %50 = tpu.matmul %47, %49, %cst_21 {dimension_numbers = #tpu.dot_dimension_numbers<[1], [0], [0], [1], [0, 0, 1, 1], [], []>} : vector<384x384xbf16>, vector<384x128xbf16>, vector<384x128xf32> -> vector<384x128xf32>
    %51 = arith.addf %43, %50 : vector<384x128xf32>
    %c0_22 = arith.constant 0 : index
    %c0_23 = arith.constant 0 : index
    %52 = vector.load %arg4[%c0_22, %c0_23] : memref<1x128xf32, #tpu.memory_space<vmem>>, vector<1x128xf32>
    %53 = vector.broadcast %52 : vector<1x128xf32> to vector<384x128xf32>
    %54 = arith.addf %51, %53 : vector<384x128xf32>
    %55 = arith.truncf %54 : vector<384x128xf32> to vector<384x128xbf16>
    %c0_24 = arith.constant 0 : index
    %c0_25 = arith.constant 0 : index
    %56 = vector.load %arg5[%c0_24, %c0_25] : memref<384x128xbf16, #tpu.memory_space<vmem>>, vector<384x128xbf16>
    tpu.vector_store %arg5[%c0_24, %c0_25], %55 {strides = array<i32>} : memref<384x128xbf16, #tpu.memory_space<vmem>>, vector<384x128xbf16>,
    return
  }
  func.func @transform_1(%arg0: i32, %arg1: i32) -> (i32, i32, i32) {
    %c0_i32 = arith.constant 0 : i32
    %c0_i32_0 = arith.constant 0 : i32
    %c0_i32_1 = arith.constant 0 : i32
    %c0_i32_2 = arith.constant 0 : i32
    return %c0_i32, %c0_i32_0, %c0_i32_1 : i32, i32, i32
  }
  func.func @transform_2(%arg0: i32, %arg1: i32) -> (i32, i32) {
    %c0_i32 = arith.constant 0 : i32
    %c0_i32_0 = arith.constant 0 : i32
    %c0_i32_1 = arith.constant 0 : i32
    return %c0_i32, %c0_i32_0 : i32, i32
  }
  func.func @transform_3(%arg0: i32, %arg1: i32) -> (i32, i32) {
    %c1_i32 = arith.constant 1 : i32
    %0 = arith.muli %arg0, %c1_i32 : i32
    %1 = arith.addi %0, %arg1 : i32
    %c0_i32 = arith.constant 0 : i32
    %c0_i32_0 = arith.constant 0 : i32
    return %1, %c0_i32 : i32, i32
  }
}

</mosaic_0001>

<llo_original>
// kernel: res_basic_block.2
$region0: #{res_basic_block.2}
  #allocation0 [shape = 'u32[]', space=smem, size = 0x4, offset = 0x4, fixed_abs, tag = 'smem constant byte address 0x4 - core index']
  #allocation1 [shape = 'u32[72,128]{1,0:T(1,128)}', space=vmem, size = 0x9000, scoped, tag = 'internal scratch']
  #allocation2 [shape = 'bf16[2,416,128]{2,1,0:T(8,128)(2,1)}', space=vmem, size = 0x34000, scoped, tag = 'scratch operand']
  #allocation3 [shape = 's32[2]{0}', space=sflag, size = 0x8, scoped, tag = 'scratch operand']
  #allocation4 [shape = 's32[]', space=sflag, size = 0x4, offset = 0, fixed_abs, tag = 'sflag constant byte address 0x0 - dummy sync flag']
  #allocation5 [shape = 's32[]', space=sflag, size = 0x4, offset = 0, fixed_abs, tag = 'sflag constant byte address 0x0 - dummy sync flag']
  %s0 = inlined_call_operand.vmem [shape: bf16[416,128], index: 0, kind: input, shape index: {}]
  %s1 = inlined_call_operand.vmem [shape: bf16[2,256,128], index: 1, kind: input, shape index: {}]
  %s2 = inlined_call_operand.vmem [shape: f32[1,128], index: 2, kind: input, shape index: {}]
  %s3 = inlined_call_operand.vmem [shape: bf16[384,128], index: 3, kind: output, shape index: {}]
  %s4 = sld [smem:[#allocation0]]
  $region64: #{res_basic_block.2} parent=0
    _
  %s6 = ssub.s32 1, %s4
  %s7 = scalar_select 0, %s6, %s4
  // Predicated region
  $region2: #{res_basic_block.2} parent=0 // pred_check
    _
  $region3: #{res_basic_block.2} parent=0 // pred_check_branch
    %9 = sbr.rel (0) target = $region5
  $region4: #{res_basic_block.2} parent=0 // pred_region
    _
  $region5: #{res_basic_block.2} parent=0 // pred_fallthru
    _
  // Predicated region
  $region6: #{res_basic_block.2} parent=0 // pred_check
    _
  $region7: #{res_basic_block.2} parent=0 // pred_check_branch
    %11 = sbr.rel (0) target = $region9
  $region8: #{res_basic_block.2} parent=0 // pred_region
    _
  $region9: #{res_basic_block.2} parent=0 // pred_fallthru
    _
  %s12 = sadd.s32 0, 0
  %s13 = smul.u32 48, %s12
  %p14 = scmp.lt.s32.totalorder %s13, 47
  %s15 = scalar_select %p14, %s13, 47
  %s16 = smul.addr %s15, 4
  %s17 = scalar_lea.vmem %s3, %s16
  %s18 = sadd.s32 0, 0
  %s19 = smul.u32 48, %s18
  %p20 = scmp.lt.s32.totalorder %s19, 47
  %s21 = scalar_select %p20, %s19, 47
  %s22 = smul.addr %s21, 4
  %s23 = scalar_lea.vmem %s3, %s22
  %s24 = sadd.s32 0, 0
  %s25 = smul.u32 48, %s24
  %s26 = sadd.s32 0, 0
  %s27 = ssub.s32 0, 0
  %s28 = ssub.s32 0, 0
  %p29 = scmp.ne.s32.totalorder 0, 0
  %p30 = scmp.lt.s32.totalorder 0, 0
  %p31 = pnand %p30, %p29
  %p32 = pneg %p31
  %s33 = sadd.s32 0, 2
  %s34 = scalar_select %p32, %s33, 0
  %p35 = scmp.eq.s32.totalorder 0, 0
  // Predicated region
  $region10: #{res_basic_block.2} parent=0 // pred_check
    %p36 = pneg %p35
  $region11: #{res_basic_block.2} parent=0 // pred_check_branch
    %38 = sbr.rel (%p36) target = $region13
  $region12: #{res_basic_block.2} parent=0 // pred_region
    %s39 = smul.u32 %s26, 384
    %s40 = sshra.s32 %s39, 3
    %s41 = sand.u32 %s39, 7
    %s42 = smul.addr %s40, 4
    %s43 = scalar_lea.vmem %s0, %s42
    %s44 = smul.u32 %s34, 52
    %s45 = smul.addr %s44, 4
    %s46 = scalar_lea.vmem [#allocation2], %s45
    %s47 = scalar_lea.sflag [#allocation3], %s34
    // Predicated region
    $region14: #{res_basic_block.2} parent=12 // pred_check
      _
    $region15: #{res_basic_block.2} parent=12 // pred_check_branch
      %49 = sbr.rel (0) target = $region17
    $region16: #{res_basic_block.2} parent=12 // pred_region
      loop: start=0, step=1, limit=1
      $region18: #{res_basic_block.2} parent=16 // loop_pre_header
        _
      $region19: #{res_basic_block.2} parent=16 // loop_header
        %s51 = sphi 0, %s55
        %p52 = scmp.ge.s32.totalorder %s51, 1
        %s56 = sphi %s43, %s43
        %s57 = sphi %s46, %s46
      $region20: #{res_basic_block.2} parent=16 // loop_header_branch
        %54 = sbr.rel (%p52) target = $region24
      $region21: #{res_basic_block.2} parent=16 // loop_body
        %v58 = vld [vmem:[%s56] sm:$0xff]
        %59 = vst [vmem:[%s57] sm:$0xff] %v58
        %v60 = vld [vmem:[%s56 + $0x8] sm:$0xff]
        %61 = vst [vmem:[%s57 + $0x8] sm:$0xff] %v60
        %v62 = vld [vmem:[%s56 + $0x10] sm:$0xff]
        %63 = vst [vmem:[%s57 + $0x10] sm:$0xff] %v62
        %v64 = vld [vmem:[%s56 + $0x18] sm:$0xff]
        %65 = vst [vmem:[%s57 + $0x18] sm:$0xff] %v64
        %v66 = vld [vmem:[%s56 + $0x20] sm:$0xff]
        %67 = vst [vmem:[%s57 + $0x20] sm:$0xff] %v66
        %v68 = vld [vmem:[%s56 + $0x28] sm:$0xff]
        %69 = vst [vmem:[%s57 + $0x28] sm:$0xff] %v68
        %v70 = vld [vmem:[%s56 + $0x30] sm:$0xff]
        %71 = vst [vmem:[%s57 + $0x30] sm:$0xff] %v70
        %v72 = vld [vmem:[%s56 + $0x38] sm:$0xff]
        %73 = vst [vmem:[%s57 + $0x38] sm:$0xff] %v72
        %v74 = vld [vmem:[%s56 + $0x40] sm:$0xff]
        %75 = vst [vmem:[%s57 + $0x40] sm:$0xff] %v74
        %v76 = vld [vmem:[%s56 + $0x48] sm:$0xff]
        %77 = vst [vmem:[%s57 + $0x48] sm:$0xff] %v76
        %v78 = vld [vmem:[%s56 + $0x50] sm:$0xff]
        %79 = vst [vmem:[%s57 + $0x50] sm:$0xff] %v78
        %v80 = vld [vmem:[%s56 + $0x58] sm:$0xff]
        %81 = vst [vmem:[%s57 + $0x58] sm:$0xff] %v80
        %v82 = vld [vmem:[%s56 + $0x60] sm:$0xff]
        %83 = vst [vmem:[%s57 + $0x60] sm:$0xff] %v82
        %v84 = vld [vmem:[%s56 + $0x68] sm:$0xff]
        %85 = vst [vmem:[%s57 + $0x68] sm:$0xff] %v84
        %v86 = vld [vmem:[%s56 + $0x70] sm:$0xff]
        %87 = vst [vmem:[%s57 + $0x70] sm:$0xff] %v86
        %v88 = vld [vmem:[%s56 + $0x78] sm:$0xff]
        %89 = vst [vmem:[%s57 + $0x78] sm:$0xff] %v88
        %v90 = vld [vmem:[%s56 + $0x80] sm:$0xff]
        %91 = vst [vmem:[%s57 + $0x80] sm:$0xff] %v90
        %v92 = vld [vmem:[%s56 + $0x88] sm:$0xff]
        %93 = vst [vmem:[%s57 + $0x88] sm:$0xff] %v92
        %v94 = vld [vmem:[%s56 + $0x90] sm:$0xff]
        %95 = vst [vmem:[%s57 + $0x90] sm:$0xff] %v94
        %v96 = vld [vmem:[%s56 + $0x98] sm:$0xff]
        %97 = vst [vmem:[%s57 + $0x98] sm:$0xff] %v96
        %v98 = vld [vmem:[%s56 + $0xa0] sm:$0xff]
        %99 = vst [vmem:[%s57 + $0xa0] sm:$0xff] %v98
        %v100 = vld [vmem:[%s56 + $0xa8] sm:$0xff]
        %101 = vst [vmem:[%s57 + $0xa8] sm:$0xff] %v100
        %v102 = vld [vmem:[%s56 + $0xb0] sm:$0xff]
        %103 = vst [vmem:[%s57 + $0xb0] sm:$0xff] %v102
        %v104 = vld [vmem:[%s56 + $0xb8] sm:$0xff]
        %105 = vst [vmem:[%s57 + $0xb8] sm:$0xff] %v104
        %v106 = vld [vmem:[%s56 + $0xc0] sm:$0xff]
        %107 = vst [vmem:[%s57 + $0xc0] sm:$0xff] %v106
        %v108 = vld [vmem:[%s56 + $0xc8] sm:$0xff]
        %109 = vst [vmem:[%s57 + $0xc8] sm:$0xff] %v108
      $region22: #{res_basic_block.2} parent=16 // loop_footer
        %s55 = sadd.s32 1, %s51
      $region23: #{res_basic_block.2} parent=16 // loop_footer_branch
        %50 = sbr.rel target = $region19
      $region24: #{res_basic_block.2} parent=16 // loop_exit
        _
    $region17: #{res_basic_block.2} parent=12 // pred_fallthru
      _
    // Predicated region
    $region25: #{res_basic_block.2} parent=12 // pred_check
      _
    $region26: #{res_basic_block.2} parent=12 // pred_check_branch
      %111 = sbr.rel target = $region28
    $region27: #{res_basic_block.2} parent=12 // pred_region
      _
    $region28: #{res_basic_block.2} parent=12 // pred_fallthru
      _
    // Predicated region
    $region29: #{res_basic_block.2} parent=12 // pred_check
      _
    $region30: #{res_basic_block.2} parent=12 // pred_check_branch
      %114 = sbr.rel (0) target = $region32
    $region31: #{res_basic_block.2} parent=12 // pred_region
      %115 = vsyncadd %s47, 3328
    $region32: #{res_basic_block.2} parent=12 // pred_fallthru
      _
  $region13: #{res_basic_block.2} parent=0 // pred_fallthru
    _
  %s116 = sadd.s32 0, 1
  %p117 = scmp.lt.s32.totalorder %s116, 1
  // Predicated region
  $region33: #{res_basic_block.2} parent=0 // pred_check
    %p118 = pneg %p117
  $region34: #{res_basic_block.2} parent=0 // pred_check_branch
    %120 = sbr.rel (%p118) target = $region36
  $region35: #{res_basic_block.2} parent=0 // pred_region
    %s121 = sadd.s32 %s26, 1
    %s122 = ssub.s32 1, %s34
    %s123 = smul.u32 %s121, 384
    %s124 = sshra.s32 %s123, 3
    %s125 = sand.u32 %s123, 7
    %s126 = smul.addr %s124, 4
    %s127 = scalar_lea.vmem %s0, %s126
    %s128 = smul.u32 %s122, 52
    %s129 = smul.addr %s128, 4
    %s130 = scalar_lea.vmem [#allocation2], %s129
    %s131 = scalar_lea.sflag [#allocation3], %s122
    // Predicated region
    $region37: #{res_basic_block.2} parent=35 // pred_check
      _
    $region38: #{res_basic_block.2} parent=35 // pred_check_branch
      %133 = sbr.rel (0) target = $region40
    $region39: #{res_basic_block.2} parent=35 // pred_region
      loop: start=0, step=1, limit=1
      $region41: #{res_basic_block.2} parent=39 // loop_pre_header
        _
      $region42: #{res_basic_block.2} parent=39 // loop_header
        %s135 = sphi 0, %s139
        %p136 = scmp.ge.s32.totalorder %s135, 1
        %s140 = sphi %s127, %s127
        %s141 = sphi %s130, %s130
      $region43: #{res_basic_block.2} parent=39 // loop_header_branch
        %138 = sbr.rel (%p136) target = $region47
      $region44: #{res_basic_block.2} parent=39 // loop_body
        %v142 = vld [vmem:[%s140] sm:$0xff]
        %143 = vst [vmem:[%s141] sm:$0xff] %v142
        %v144 = vld [vmem:[%s140 + $0x8] sm:$0xff]
        %145 = vst [vmem:[%s141 + $0x8] sm:$0xff] %v144
        %v146 = vld [vmem:[%s140 + $0x10] sm:$0xff]
        %147 = vst [vmem:[%s141 + $0x10] sm:$0xff] %v146
        %v148 = vld [vmem:[%s140 + $0x18] sm:$0xff]
        %149 = vst [vmem:[%s141 + $0x18] sm:$0xff] %v148
        %v150 = vld [vmem:[%s140 + $0x20] sm:$0xff]
        %151 = vst [vmem:[%s141 + $0x20] sm:$0xff] %v150
        %v152 = vld [vmem:[%s140 + $0x28] sm:$0xff]
        %153 = vst [vmem:[%s141 + $0x28] sm:$0xff] %v152
        %v154 = vld [vmem:[%s140 + $0x30] sm:$0xff]
        %155 = vst [vmem:[%s141 + $0x30] sm:$0xff] %v154
        %v156 = vld [vmem:[%s140 + $0x38] sm:$0xff]
        %157 = vst [vmem:[%s141 + $0x38] sm:$0xff] %v156
        %v158 = vld [vmem:[%s140 + $0x40] sm:$0xff]
        %159 = vst [vmem:[%s141 + $0x40] sm:$0xff] %v158
        %v160 = vld [vmem:[%s140 + $0x48] sm:$0xff]
        %161 = vst [vmem:[%s141 + $0x48] sm:$0xff] %v160
        %v162 = vld [vmem:[%s140 + $0x50] sm:$0xff]
        %163 = vst [vmem:[%s141 + $0x50] sm:$0xff] %v162
        %v164 = vld [vmem:[%s140 + $0x58] sm:$0xff]
        %165 = vst [vmem:[%s141 + $0x58] sm:$0xff] %v164
        %v166 = vld [vmem:[%s140 + $0x60] sm:$0xff]
        %167 = vst [vmem:[%s141 + $0x60] sm:$0xff] %v166
        %v168 = vld [vmem:[%s140 + $0x68] sm:$0xff]
        %169 = vst [vmem:[%s141 + $0x68] sm:$0xff] %v168
        %v170 = vld [vmem:[%s140 + $0x70] sm:$0xff]
        %171 = vst [vmem:[%s141 + $0x70] sm:$0xff] %v170
        %v172 = vld [vmem:[%s140 + $0x78] sm:$0xff]
        %173 = vst [vmem:[%s141 + $0x78] sm:$0xff] %v172
        %v174 = vld [vmem:[%s140 + $0x80] sm:$0xff]
        %175 = vst [vmem:[%s141 + $0x80] sm:$0xff] %v174
        %v176 = vld [vmem:[%s140 + $0x88] sm:$0xff]
        %177 = vst [vmem:[%s141 + $0x88] sm:$0xff] %v176
        %v178 = vld [vmem:[%s140 + $0x90] sm:$0xff]
        %179 = vst [vmem:[%s141 + $0x90] sm:$0xff] %v178
        %v180 = vld [vmem:[%s140 + $0x98] sm:$0xff]
        %181 = vst [vmem:[%s141 + $0x98] sm:$0xff] %v180
        %v182 = vld [vmem:[%s140 + $0xa0] sm:$0xff]
        %183 = vst [vmem:[%s141 + $0xa0] sm:$0xff] %v182
        %v184 = vld [vmem:[%s140 + $0xa8] sm:$0xff]
        %185 = vst [vmem:[%s141 + $0xa8] sm:$0xff] %v184
        %v186 = vld [vmem:[%s140 + $0xb0] sm:$0xff]
        %187 = vst [vmem:[%s141 + $0xb0] sm:$0xff] %v186
        %v188 = vld [vmem:[%s140 + $0xb8] sm:$0xff]
        %189 = vst [vmem:[%s141 + $0xb8] sm:$0xff] %v188
        %v190 = vld [vmem:[%s140 + $0xc0] sm:$0xff]
        %191 = vst [vmem:[%s141 + $0xc0] sm:$0xff] %v190
        %v192 = vld [vmem:[%s140 + $0xc8] sm:$0xff]
        %193 = vst [vmem:[%s141 + $0xc8] sm:$0xff] %v192
      $region45: #{res_basic_block.2} parent=39 // loop_footer
        %s139 = sadd.s32 1, %s135
      $region46: #{res_basic_block.2} parent=39 // loop_footer_branch
        %134 = sbr.rel target = $region42
      $region47: #{res_basic_block.2} parent=39 // loop_exit
        _
    $region40: #{res_basic_block.2} parent=35 // pred_fallthru
      _
    // Predicated region
    $region48: #{res_basic_block.2} parent=35 // pred_check
      _
    $region49: #{res_basic_block.2} parent=35 // pred_check_branch
      %195 = sbr.rel target = $region51
    $region50: #{res_basic_block.2} parent=35 // pred_region
      _
    $region51: #{res_basic_block.2} parent=35 // pred_fallthru
      _
    // Predicated region
    $region52: #{res_basic_block.2} parent=35 // pred_check
      _
    $region53: #{res_basic_block.2} parent=35 // pred_check_branch
      %198 = sbr.rel (0) target = $region55
    $region54: #{res_basic_block.2} parent=35 // pred_region
      %199 = vsyncadd %s131, 3328
    $region55: #{res_basic_block.2} parent=35 // pred_fallthru
      _
  $region36: #{res_basic_block.2} parent=0 // pred_fallthru
    _
  %s200 = smul.u32 %s26, 384
  %s201 = smul.u32 %s34, 52
  %s202 = smul.addr %s201, 4
  %s203 = scalar_lea.vmem [#allocation2], %s202
  %s204 = scalar_lea.sflag [#allocation3], %s34
  %s205 = smul.u32 4, 52
  %s206 = smul.u32 %s205, 1
  %s207 = sshll.u32 %s206, 4
  %208 = dma.done %s204, %s207
  %v209 = vld [vmem:[%s203] sm:$0xf]
  %v210 = vld [vmem:[%s203 + $0x4] sm:$0xf]
  %v211 = vld [vmem:[%s203 + $0x8] sm:$0xf]
  %v212 = vld [vmem:[%s203 + $0xc] sm:$0xf]
  %v213 = vld [vmem:[%s203 + $0x10] sm:$0xf]
  %v214 = vld [vmem:[%s203 + $0x14] sm:$0xf]
  %v215 = vld [vmem:[%s203 + $0x18] sm:$0xf]
  %v216 = vld [vmem:[%s203 + $0x1c] sm:$0xf]
  %v217 = vld [vmem:[%s203 + $0x20] sm:$0xf]
  %v218 = vld [vmem:[%s203 + $0x24] sm:$0xf]
  %v219 = vld [vmem:[%s203 + $0x28] sm:$0xf]
  %v220 = vld [vmem:[%s203 + $0x2c] sm:$0xf]
  %v221 = vld [vmem:[%s203 + $0x30] sm:$0xf]
  %v222 = vld [vmem:[%s203 + $0x34] sm:$0xf]
  %v223 = vld [vmem:[%s203 + $0x38] sm:$0xf]
  %v224 = vld [vmem:[%s203 + $0x3c] sm:$0xf]
  %v225 = vld [vmem:[%s203 + $0x40] sm:$0xf]
  %v226 = vld [vmem:[%s203 + $0x44] sm:$0xf]
  %v227 = vld [vmem:[%s203 + $0x48] sm:$0xf]
  %v228 = vld [vmem:[%s203 + $0x4c] sm:$0xf]
  %v229 = vld [vmem:[%s203 + $0x50] sm:$0xf]
  %v230 = vld [vmem:[%s203 + $0x54] sm:$0xf]
  %v231 = vld [vmem:[%s203 + $0x58] sm:$0xf]
  %v232 = vld [vmem:[%s203 + $0x5c] sm:$0xf]
  %v233 = vld [vmem:[%s203 + $0x60] sm:$0xf]
  %v234 = vld [vmem:[%s203 + $0x64] sm:$0xf]
  %v235 = vld [vmem:[%s203 + $0x68] sm:$0xf]
  %v236 = vld [vmem:[%s203 + $0x6c] sm:$0xf]
  %v237 = vld [vmem:[%s203 + $0x70] sm:$0xf]
  %v238 = vld [vmem:[%s203 + $0x74] sm:$0xf]
  %v239 = vld [vmem:[%s203 + $0x78] sm:$0xf]
  %v240 = vld [vmem:[%s203 + $0x7c] sm:$0xf]
  %v241 = vld [vmem:[%s203 + $0x80] sm:$0xf]
  %v242 = vld [vmem:[%s203 + $0x84] sm:$0xf]
  %v243 = vld [vmem:[%s203 + $0x88] sm:$0xf]
  %v244 = vld [vmem:[%s203 + $0x8c] sm:$0xf]
  %v245 = vld [vmem:[%s203 + $0x90] sm:$0xf]
  %v246 = vld [vmem:[%s203 + $0x94] sm:$0xf]
  %v247 = vld [vmem:[%s203 + $0x98] sm:$0xf]
  %v248 = vld [vmem:[%s203 + $0x9c] sm:$0xf]
  %v249 = vld [vmem:[%s203 + $0xa0] sm:$0xf]
  %v250 = vld [vmem:[%s203 + $0xa4] sm:$0xf]
  %v251 = vld [vmem:[%s203 + $0xa8] sm:$0xf]
  %v252 = vld [vmem:[%s203 + $0xac] sm:$0xf]
  %v253 = vld [vmem:[%s203 + $0xb0] sm:$0xf]
  %v254 = vld [vmem:[%s203 + $0xb4] sm:$0xf]
  %v255 = vld [vmem:[%s203 + $0xb8] sm:$0xf]
  %v256 = vld [vmem:[%s203 + $0xbc] sm:$0xf]
  %v257 = vld [vmem:[%s203 + $0xc0] sm:$0xf]
  %v258 = vld [vmem:[%s203 + $0xc4] sm:$0xf]
  %v259 = vld [vmem:[%s203 + $0xc8] sm:$0xf]
  %v308 = vunpack.c.l.b16 %v209
  %v309 = vunpack.c.l.b16 %v210
  %v310 = vunpack.c.l.b16 %v211
  %v311 = vunpack.c.l.b16 %v212
  %v312 = vunpack.c.l.b16 %v213
  %v313 = vunpack.c.l.b16 %v214
  %v314 = vunpack.c.l.b16 %v215
  %v315 = vunpack.c.l.b16 %v216
  %v316 = vunpack.c.l.b16 %v217
  %v317 = vunpack.c.l.b16 %v218
  %v318 = vunpack.c.l.b16 %v219
  %v319 = vunpack.c.l.b16 %v220
  %v320 = vunpack.c.l.b16 %v221
  %v321 = vunpack.c.l.b16 %v222
  %v322 = vunpack.c.l.b16 %v223
  %v323 = vunpack.c.l.b16 %v224
  %v324 = vunpack.c.l.b16 %v225
  %v325 = vunpack.c.l.b16 %v226
  %v326 = vunpack.c.l.b16 %v227
  %v327 = vunpack.c.l.b16 %v228
  %v328 = vunpack.c.l.b16 %v229
  %v329 = vunpack.c.l.b16 %v230
  %v330 = vunpack.c.l.b16 %v231
  %v331 = vunpack.c.l.b16 %v232
  %v332 = vunpack.c.l.b16 %v233
  %v333 = vunpack.c.l.b16 %v234
  %v334 = vunpack.c.l.b16 %v235
  %v335 = vunpack.c.l.b16 %v236
  %v336 = vunpack.c.l.b16 %v237
  %v337 = vunpack.c.l.b16 %v238
  %v338 = vunpack.c.l.b16 %v239
  %v339 = vunpack.c.l.b16 %v240
  %v340 = vunpack.c.l.b16 %v241
  %v341 = vunpack.c.l.b16 %v242
  %v342 = vunpack.c.l.b16 %v243
  %v343 = vunpack.c.l.b16 %v244
  %v344 = vunpack.c.l.b16 %v245
  %v345 = vunpack.c.l.b16 %v246
  %v346 = vunpack.c.l.b16 %v247
  %v347 = vunpack.c.l.b16 %v248
  %v348 = vunpack.c.l.b16 %v249
  %v349 = vunpack.c.l.b16 %v250
  %v350 = vunpack.c.l.b16 %v251
  %v351 = vunpack.c.l.b16 %v252
  %v352 = vunpack.c.l.b16 %v253
  %v353 = vunpack.c.l.b16 %v254
  %v354 = vunpack.c.l.b16 %v255
  %v355 = vunpack.c.l.b16 %v256
  %v356 = vpack.c.b16 %v309, %v308
  %v357 = vpack.c.b16 %v311, %v310
  %v358 = vpack.c.b16 %v313, %v312
  %v359 = vpack.c.b16 %v315, %v314
  %v360 = vpack.c.b16 %v317, %v316
  %v361 = vpack.c.b16 %v319, %v318
  %v362 = vpack.c.b16 %v321, %v320
  %v363 = vpack.c.b16 %v323, %v322
  %v364 = vpack.c.b16 %v325, %v324
  %v365 = vpack.c.b16 %v327, %v326
  %v366 = vpack.c.b16 %v329, %v328
  %v367 = vpack.c.b16 %v331, %v330
  %v368 = vpack.c.b16 %v333, %v332
  %v369 = vpack.c.b16 %v335, %v334
  %v370 = vpack.c.b16 %v337, %v336
  %v371 = vpack.c.b16 %v339, %v338
  %v372 = vpack.c.b16 %v341, %v340
  %v373 = vpack.c.b16 %v343, %v342
  %v374 = vpack.c.b16 %v345, %v344
  %v375 = vpack.c.b16 %v347, %v346
  %v376 = vpack.c.b16 %v349, %v348
  %v377 = vpack.c.b16 %v351, %v350
  %v378 = vpack.c.b16 %v353, %v352
  %v379 = vpack.c.b16 %v355, %v354
  %v405 = vunpack.c.l.b16 %v257
  %v406 = vpack.c.b16 %v405, %v405
  %vm407 = vsmask.f32 7424
  %v409 = vshrl.u32 %v356, 16
  %v411 = vshll.u32 %v356, 16
  %v413 = vrot.slane %v411, 1
  %v414 = vor.u32 %v409, %v413
  %v416 = vshll.u32 %v357, 16
  %v418 = vrot.slane %v416, 1
  %v419 = vsel %vm407, %v414, %v418
  %v420 = vshrl.u32 %v357, 16
  %v422 = vor.u32 %v420, %v418
  %v424 = vshll.u32 %v358, 16
  %v426 = vrot.slane %v424, 1
  %v427 = vsel %vm407, %v422, %v426
  %v428 = vshrl.u32 %v358, 16
  %v430 = vor.u32 %v428, %v426
  %v432 = vshll.u32 %v359, 16
  %v434 = vrot.slane %v432, 1
  %v435 = vsel %vm407, %v430, %v434
  %v436 = vshrl.u32 %v359, 16
  %v438 = vor.u32 %v436, %v434
  %v440 = vshll.u32 %v360, 16
  %v442 = vrot.slane %v440, 1
  %v443 = vsel %vm407, %v438, %v442
  %v444 = vshrl.u32 %v360, 16
  %v446 = vor.u32 %v444, %v442
  %v448 = vshll.u32 %v361, 16
  %v450 = vrot.slane %v448, 1
  %v451 = vsel %vm407, %v446, %v450
  %v452 = vshrl.u32 %v361, 16
  %v454 = vor.u32 %v452, %v450
  %v456 = vshll.u32 %v362, 16
  %v458 = vrot.slane %v456, 1
  %v459 = vsel %vm407, %v454, %v458
  %v460 = vshrl.u32 %v362, 16
  %v462 = vor.u32 %v460, %v458
  %v464 = vshll.u32 %v363, 16
  %v466 = vrot.slane %v464, 1
  %v467 = vsel %vm407, %v462, %v466
  %v468 = vshrl.u32 %v363, 16
  %v470 = vor.u32 %v468, %v466
  %v472 = vshll.u32 %v364, 16
  %v474 = vrot.slane %v472, 1
  %v475 = vsel %vm407, %v470, %v474
  %v476 = vshrl.u32 %v364, 16
  %v478 = vor.u32 %v476, %v474
  %v480 = vshll.u32 %v365, 16
  %v482 = vrot.slane %v480, 1
  %v483 = vsel %vm407, %v478, %v482
  %v484 = vshrl.u32 %v365, 16
  %v486 = vor.u32 %v484, %v482
  %v488 = vshll.u32 %v366, 16
  %v490 = vrot.slane %v488, 1
  %v491 = vsel %vm407, %v486, %v490
  %v492 = vshrl.u32 %v366, 16
  %v494 = vor.u32 %v492, %v490
  %v496 = vshll.u32 %v367, 16
  %v498 = vrot.slane %v496, 1
  %v499 = vsel %vm407, %v494, %v498
  %v500 = vshrl.u32 %v367, 16
  %v502 = vor.u32 %v500, %v498
  %v504 = vshll.u32 %v368, 16
  %v506 = vrot.slane %v504, 1
  %v507 = vsel %vm407, %v502, %v506
  %v508 = vshrl.u32 %v368, 16
  %v510 = vor.u32 %v508, %v506
  %v512 = vshll.u32 %v369, 16
  %v514 = vrot.slane %v512, 1
  %v515 = vsel %vm407, %v510, %v514
  %v516 = vshrl.u32 %v369, 16
  %v518 = vor.u32 %v516, %v514
  %v520 = vshll.u32 %v370, 16
  %v522 = vrot.slane %v520, 1
  %v523 = vsel %vm407, %v518, %v522
  %v524 = vshrl.u32 %v370, 16
  %v526 = vor.u32 %v524, %v522
  %v528 = vshll.u32 %v371, 16
  %v530 = vrot.slane %v528, 1
  %v531 = vsel %vm407, %v526, %v530
  %v532 = vshrl.u32 %v371, 16
  %v534 = vor.u32 %v532, %v530
  %v536 = vshll.u32 %v372, 16
  %v538 = vrot.slane %v536, 1
  %v539 = vsel %vm407, %v534, %v538
  %v540 = vshrl.u32 %v372, 16
  %v542 = vor.u32 %v540, %v538
  %v544 = vshll.u32 %v373, 16
  %v546 = vrot.slane %v544, 1
  %v547 = vsel %vm407, %v542, %v546
  %v548 = vshrl.u32 %v373, 16
  %v550 = vor.u32 %v548, %v546
  %v552 = vshll.u32 %v374, 16
  %v554 = vrot.slane %v552, 1
  %v555 = vsel %vm407, %v550, %v554
  %v556 = vshrl.u32 %v374, 16
  %v558 = vor.u32 %v556, %v554
  %v560 = vshll.u32 %v375, 16
  %v562 = vrot.slane %v560, 1
  %v563 = vsel %vm407, %v558, %v562
  %v564 = vshrl.u32 %v375, 16
  %v566 = vor.u32 %v564, %v562
  %v568 = vshll.u32 %v376, 16
  %v570 = vrot.slane %v568, 1
  %v571 = vsel %vm407, %v566, %v570
  %v572 = vshrl.u32 %v376, 16
  %v574 = vor.u32 %v572, %v570
  %v576 = vshll.u32 %v377, 16
  %v578 = vrot.slane %v576, 1
  %v579 = vsel %vm407, %v574, %v578
  %v580 = vshrl.u32 %v377, 16
  %v582 = vor.u32 %v580, %v578
  %v584 = vshll.u32 %v378, 16
  %v586 = vrot.slane %v584, 1
  %v587 = vsel %vm407, %v582, %v586
  %v588 = vshrl.u32 %v378, 16
  %v590 = vor.u32 %v588, %v586
  %v592 = vshll.u32 %v379, 16
  %v594 = vrot.slane %v592, 1
  %v595 = vsel %vm407, %v590, %v594
  %v596 = vshrl.u32 %v379, 16
  %v598 = vor.u32 %v596, %v594
  %v600 = vshll.u32 %v406, 16
  %v602 = vrot.slane %v600, 1
  %v603 = vsel %vm407, %v598, %v602
  %v628 = vld [vmem:[%s1] sm:$0xf]
  %v629 = vld [vmem:[%s1 + $0x4] sm:$0xf]
  %v630 = vld [vmem:[%s1 + $0x8] sm:$0xf]
  %v631 = vld [vmem:[%s1 + $0xc] sm:$0xf]
  %v632 = vld [vmem:[%s1 + $0x10] sm:$0xf]
  %v633 = vld [vmem:[%s1 + $0x14] sm:$0xf]
  %v634 = vld [vmem:[%s1 + $0x18] sm:$0xf]
  %v635 = vld [vmem:[%s1 + $0x1c] sm:$0xf]
  %v636 = vld [vmem:[%s1 + $0x20] sm:$0xf]
  %v637 = vld [vmem:[%s1 + $0x24] sm:$0xf]
  %v638 = vld [vmem:[%s1 + $0x28] sm:$0xf]
  %v639 = vld [vmem:[%s1 + $0x2c] sm:$0xf]
  %v640 = vld [vmem:[%s1 + $0x30] sm:$0xf]
  %v641 = vld [vmem:[%s1 + $0x34] sm:$0xf]
  %v642 = vld [vmem:[%s1 + $0x38] sm:$0xf]
  %v643 = vld [vmem:[%s1 + $0x3c] sm:$0xf]
  %v644 = vld [vmem:[%s1 + $0x40] sm:$0xf]
  %v645 = vld [vmem:[%s1 + $0x44] sm:$0xf]
  %v646 = vld [vmem:[%s1 + $0x48] sm:$0xf]
  %v647 = vld [vmem:[%s1 + $0x4c] sm:$0xf]
  %v648 = vld [vmem:[%s1 + $0x50] sm:$0xf]
  %v649 = vld [vmem:[%s1 + $0x54] sm:$0xf]
  %v650 = vld [vmem:[%s1 + $0x58] sm:$0xf]
  %v651 = vld [vmem:[%s1 + $0x5c] sm:$0xf]
  %v652 = vld [vmem:[%s1 + $0x60] sm:$0xf]
  %v653 = vld [vmem:[%s1 + $0x64] sm:$0xf]
  %v654 = vld [vmem:[%s1 + $0x68] sm:$0xf]
  %v655 = vld [vmem:[%s1 + $0x6c] sm:$0xf]
  %v656 = vld [vmem:[%s1 + $0x70] sm:$0xf]
  %v657 = vld [vmem:[%s1 + $0x74] sm:$0xf]
  %v658 = vld [vmem:[%s1 + $0x78] sm:$0xf]
  %v659 = vld [vmem:[%s1 + $0x7c] sm:$0xf]
  %v661 = vunpack.c.l.b16 %v258
  %v662 = vpack.c.b16 %v661, %v405
  %v665 = vunpack.c.l.b16 %v259
  %v666 = vpack.c.b16 %v665, %v665
  %v668 = vshll.u32 %v662, 16
  %v670 = vrot.slane %v668, 1
  %v671 = vsel %vm407, %v598, %v670
  %v672 = vshrl.u32 %v662, 16
  %v674 = vor.u32 %v672, %v670
  %v676 = vshll.u32 %v666, 16
  %v678 = vrot.slane %v676, 1
  %v679 = vsel %vm407, %v674, %v678
  %s682 = scalar_lea.vmem %s1, 128
  %v683 = vld [vmem:[%s682] sm:$0xf]
  %v684 = vld [vmem:[%s682 + $0x4] sm:$0xf]
  %v685 = vld [vmem:[%s682 + $0x8] sm:$0xf]
  %v686 = vld [vmem:[%s682 + $0xc] sm:$0xf]
  %v687 = vld [vmem:[%s682 + $0x10] sm:$0xf]
  %v688 = vld [vmem:[%s682 + $0x14] sm:$0xf]
  %v689 = vld [vmem:[%s682 + $0x18] sm:$0xf]
  %v690 = vld [vmem:[%s682 + $0x1c] sm:$0xf]
  %v691 = vld [vmem:[%s682 + $0x20] sm:$0xf]
  %v692 = vld [vmem:[%s682 + $0x24] sm:$0xf]
  %v693 = vld [vmem:[%s682 + $0x28] sm:$0xf]
  %v694 = vld [vmem:[%s682 + $0x2c] sm:$0xf]
  %v695 = vld [vmem:[%s682 + $0x30] sm:$0xf]
  %v696 = vld [vmem:[%s682 + $0x34] sm:$0xf]
  %v697 = vld [vmem:[%s682 + $0x38] sm:$0xf]
  %v698 = vld [vmem:[%s682 + $0x3c] sm:$0xf]
  %v699 = vld [vmem:[%s682 + $0x40] sm:$0xf]
  %v700 = vld [vmem:[%s682 + $0x44] sm:$0xf]
  %v701 = vld [vmem:[%s682 + $0x48] sm:$0xf]
  %v702 = vld [vmem:[%s682 + $0x4c] sm:$0xf]
  %v703 = vld [vmem:[%s682 + $0x50] sm:$0xf]
  %v704 = vld [vmem:[%s682 + $0x54] sm:$0xf]
  %v705 = vld [vmem:[%s682 + $0x58] sm:$0xf]
  %v706 = vld [vmem:[%s682 + $0x5c] sm:$0xf]
  %v707 = vld [vmem:[%s682 + $0x60] sm:$0xf]
  %v708 = vld [vmem:[%s682 + $0x64] sm:$0xf]
  %v709 = vld [vmem:[%s682 + $0x68] sm:$0xf]
  %v710 = vld [vmem:[%s682 + $0x6c] sm:$0xf]
  %v711 = vld [vmem:[%s682 + $0x70] sm:$0xf]
  %v712 = vld [vmem:[%s682 + $0x74] sm:$0xf]
  %v713 = vld [vmem:[%s682 + $0x78] sm:$0xf]
  %v714 = vld [vmem:[%s682 + $0x7c] sm:$0xf]
  %v747 = vunpack.c.l.b16 %v683
  %v748 = vunpack.c.l.b16 %v684
  %v749 = vunpack.c.l.b16 %v685
  %v750 = vunpack.c.l.b16 %v686
  %v751 = vunpack.c.l.b16 %v687
  %v752 = vunpack.c.l.b16 %v688
  %v753 = vunpack.c.l.b16 %v689
  %v754 = vunpack.c.l.b16 %v690
  %v755 = vunpack.c.l.b16 %v691
  %v756 = vunpack.c.l.b16 %v692
  %v757 = vunpack.c.l.b16 %v693
  %v758 = vunpack.c.l.b16 %v694
  %v759 = vunpack.c.l.b16 %v695
  %v760 = vunpack.c.l.b16 %v696
  %v761 = vunpack.c.l.b16 %v697
  %v762 = vunpack.c.l.b16 %v698
  %v763 = vunpack.c.l.b16 %v699
  %v764 = vunpack.c.l.b16 %v700
  %v765 = vunpack.c.l.b16 %v701
  %v766 = vunpack.c.l.b16 %v702
  %v767 = vunpack.c.l.b16 %v703
  %v768 = vunpack.c.l.b16 %v704
  %v769 = vunpack.c.l.b16 %v705
  %v770 = vunpack.c.l.b16 %v706
  %v771 = vunpack.c.l.b16 %v707
  %v772 = vunpack.c.l.b16 %v708
  %v773 = vunpack.c.l.b16 %v709
  %v774 = vunpack.c.l.b16 %v710
  %v775 = vunpack.c.l.b16 %v711
  %v776 = vunpack.c.l.b16 %v712
  %v777 = vunpack.c.l.b16 %v713
  %v778 = vunpack.c.l.b16 %v714
  %v779 = vpack.c.b16 %v748, %v747
  %v780 = vpack.c.b16 %v750, %v749
  %v781 = vpack.c.b16 %v752, %v751
  %v782 = vpack.c.b16 %v754, %v753
  %v783 = vpack.c.b16 %v756, %v755
  %v784 = vpack.c.b16 %v758, %v757
  %v785 = vpack.c.b16 %v760, %v759
  %v786 = vpack.c.b16 %v762, %v761
  %v787 = vpack.c.b16 %v764, %v763
  %v788 = vpack.c.b16 %v766, %v765
  %v789 = vpack.c.b16 %v768, %v767
  %v790 = vpack.c.b16 %v770, %v769
  %v791 = vpack.c.b16 %v772, %v771
  %v792 = vpack.c.b16 %v774, %v773
  %v793 = vpack.c.b16 %v776, %v775
  %v794 = vpack.c.b16 %v778, %v777
  %811 = vmatpush.bf16.msra.mxu0 %v786
  %812 = vmatpush.bf16.msra.mxu0 %v785
  %813 = vmatpush.bf16.msra.mxu0 %v784
  %814 = vmatpush.bf16.msra.mxu0 %v783
  %815 = vmatpush.bf16.msra.mxu0 %v782
  %816 = vmatpush.bf16.msra.mxu0 %v781
  %817 = vmatpush.bf16.msra.mxu0 %v780
  %818 = vmatpush.bf16.msra.mxu0 %v779
  %819 = vmatmul.bf16.gmra.mxu0 %v357
  %v820 = vpop.f32.mrf.mxu0
  %v821 = vadd.f32 0.0, %v820
  %v822 = vpop.f32.mrf.mxu0
  %v823 = vadd.f32 0.0, %v822
  %824 = vmatmul.bf16.gmra.mxu0 %v358
  %v825 = vpop.f32.mrf.mxu0
  %v826 = vadd.f32 0.0, %v825
  %v827 = vpop.f32.mrf.mxu0
  %v828 = vadd.f32 0.0, %v827
  %829 = vmatmul.bf16.gmra.mxu0 %v359
  %v830 = vpop.f32.mrf.mxu0
  %v831 = vadd.f32 0.0, %v830
  %v832 = vpop.f32.mrf.mxu0
  %v833 = vadd.f32 0.0, %v832
  %834 = vmatmul.bf16.gmra.mxu0 %v360
  %v835 = vpop.f32.mrf.mxu0
  %v836 = vadd.f32 0.0, %v835
  %v837 = vpop.f32.mrf.mxu0
  %v838 = vadd.f32 0.0, %v837
  %839 = vmatmul.bf16.gmra.mxu0 %v361
  %v840 = vpop.f32.mrf.mxu0
  %v841 = vadd.f32 0.0, %v840
  %v842 = vpop.f32.mrf.mxu0
  %v843 = vadd.f32 0.0, %v842
  %844 = vmatmul.bf16.gmra.mxu0 %v362
  %v845 = vpop.f32.mrf.mxu0
  %v846 = vadd.f32 0.0, %v845
  %v847 = vpop.f32.mrf.mxu0
  %v848 = vadd.f32 0.0, %v847
  %849 = vmatmul.bf16.gmra.mxu0 %v363
  %v850 = vpop.f32.mrf.mxu0
  %v851 = vadd.f32 0.0, %v850
  %v852 = vpop.f32.mrf.mxu0
  %v853 = vadd.f32 0.0, %v852
  %854 = vmatmul.bf16.gmra.mxu0 %v364
  %v855 = vpop.f32.mrf.mxu0
  %v856 = vadd.f32 0.0, %v855
  %v857 = vpop.f32.mrf.mxu0
  %v858 = vadd.f32 0.0, %v857
  %859 = vmatmul.bf16.gmra.mxu0 %v365
  %v860 = vpop.f32.mrf.mxu0
  %v861 = vadd.f32 0.0, %v860
  %v862 = vpop.f32.mrf.mxu0
  %v863 = vadd.f32 0.0, %v862
  %864 = vmatmul.bf16.gmra.mxu0 %v366
  %v865 = vpop.f32.mrf.mxu0
  %v866 = vadd.f32 0.0, %v865
  %v867 = vpop.f32.mrf.mxu0
  %v868 = vadd.f32 0.0, %v867
  %869 = vmatmul.bf16.gmra.mxu0 %v367
  %v870 = vpop.f32.mrf.mxu0
  %v871 = vadd.f32 0.0, %v870
  %v872 = vpop.f32.mrf.mxu0
  %v873 = vadd.f32 0.0, %v872
  %874 = vmatmul.bf16.gmra.mxu0 %v368
  %v875 = vpop.f32.mrf.mxu0
  %v876 = vadd.f32 0.0, %v875
  %v877 = vpop.f32.mrf.mxu0
  %v878 = vadd.f32 0.0, %v877
  %879 = vmatmul.bf16.gmra.mxu0 %v369
  %v880 = vpop.f32.mrf.mxu0
  %v881 = vadd.f32 0.0, %v880
  %v882 = vpop.f32.mrf.mxu0
  %v883 = vadd.f32 0.0, %v882
  %884 = vmatmul.bf16.gmra.mxu0 %v370
  %v885 = vpop.f32.mrf.mxu0
  %v886 = vadd.f32 0.0, %v885
  %v887 = vpop.f32.mrf.mxu0
  %v888 = vadd.f32 0.0, %v887
  %889 = vmatmul.bf16.gmra.mxu0 %v371
  %v890 = vpop.f32.mrf.mxu0
  %v891 = vadd.f32 0.0, %v890
  %v892 = vpop.f32.mrf.mxu0
  %v893 = vadd.f32 0.0, %v892
  %894 = vmatmul.bf16.gmra.mxu0 %v372
  %v895 = vpop.f32.mrf.mxu0
  %v896 = vadd.f32 0.0, %v895
  %v897 = vpop.f32.mrf.mxu0
  %v898 = vadd.f32 0.0, %v897
  %899 = vmatmul.bf16.gmra.mxu0 %v373
  %v900 = vpop.f32.mrf.mxu0
  %v901 = vadd.f32 0.0, %v900
  %v902 = vpop.f32.mrf.mxu0
  %v903 = vadd.f32 0.0, %v902
  %904 = vmatmul.bf16.gmra.mxu0 %v374
  %v905 = vpop.f32.mrf.mxu0
  %v906 = vadd.f32 0.0, %v905
  %v907 = vpop.f32.mrf.mxu0
  %v908 = vadd.f32 0.0, %v907
  %909 = vmatmul.bf16.gmra.mxu0 %v375
  %v910 = vpop.f32.mrf.mxu0
  %v911 = vadd.f32 0.0, %v910
  %v912 = vpop.f32.mrf.mxu0
  %v913 = vadd.f32 0.0, %v912
  %914 = vmatmul.bf16.gmra.mxu0 %v376
  %v915 = vpop.f32.mrf.mxu0
  %v916 = vadd.f32 0.0, %v915
  %v917 = vpop.f32.mrf.mxu0
  %v918 = vadd.f32 0.0, %v917
  %919 = vmatmul.bf16.gmra.mxu0 %v377
  %v920 = vpop.f32.mrf.mxu0
  %v921 = vadd.f32 0.0, %v920
  %v922 = vpop.f32.mrf.mxu0
  %v923 = vadd.f32 0.0, %v922
  %924 = vmatmul.bf16.gmra.mxu0 %v378
  %v925 = vpop.f32.mrf.mxu0
  %v926 = vadd.f32 0.0, %v925
  %v927 = vpop.f32.mrf.mxu0
  %v928 = vadd.f32 0.0, %v927
  %929 = vmatmul.bf16.gmra.mxu0 %v379
  %v930 = vpop.f32.mrf.mxu0
  %v931 = vadd.f32 0.0, %v930
  %v932 = vpop.f32.mrf.mxu0
  %v933 = vadd.f32 0.0, %v932
  %934 = vmatmul.bf16.gmra.mxu0 %v662
  %v935 = vpop.f32.mrf.mxu0
  %v936 = vadd.f32 0.0, %v935
  %v937 = vpop.f32.mrf.mxu0
  %v938 = vadd.f32 0.0, %v937
  %939 = vdwg.mxu0
  %940 = vmatpush.bf16.msra.mxu0 %v794
  %941 = vmatpush.bf16.msra.mxu0 %v793
  %942 = vmatpush.bf16.msra.mxu0 %v792
  %943 = vmatpush.bf16.msra.mxu0 %v791
  %944 = vmatpush.bf16.msra.mxu0 %v790
  %945 = vmatpush.bf16.msra.mxu0 %v789
  %946 = vmatpush.bf16.msra.mxu0 %v788
  %947 = vmatpush.bf16.msra.mxu0 %v787
  %948 = vmatmul.bf16.gmra.mxu0 %v427
  %v949 = vpop.f32.mrf.mxu0
  %v950 = vadd.f32 %v821, %v949
  %v951 = vpop.f32.mrf.mxu0
  %v952 = vadd.f32 %v823, %v951
  %953 = vmatmul.bf16.gmra.mxu0 %v435
  %v954 = vpop.f32.mrf.mxu0
  %v955 = vadd.f32 %v826, %v954
  %v956 = vpop.f32.mrf.mxu0
  %v957 = vadd.f32 %v828, %v956
  %958 = vmatmul.bf16.gmra.mxu0 %v443
  %v959 = vpop.f32.mrf.mxu0
  %v960 = vadd.f32 %v831, %v959
  %v961 = vpop.f32.mrf.mxu0
  %v962 = vadd.f32 %v833, %v961
  %963 = vmatmul.bf16.gmra.mxu0 %v451
  %v964 = vpop.f32.mrf.mxu0
  %v965 = vadd.f32 %v836, %v964
  %v966 = vpop.f32.mrf.mxu0
  %v967 = vadd.f32 %v838, %v966
  %968 = vmatmul.bf16.gmra.mxu0 %v459
  %v969 = vpop.f32.mrf.mxu0
  %v970 = vadd.f32 %v841, %v969
  %v971 = vpop.f32.mrf.mxu0
  %v972 = vadd.f32 %v843, %v971
  %973 = vmatmul.bf16.gmra.mxu0 %v467
  %v974 = vpop.f32.mrf.mxu0
  %v975 = vadd.f32 %v846, %v974
  %v976 = vpop.f32.mrf.mxu0
  %v977 = vadd.f32 %v848, %v976
  %978 = vmatmul.bf16.gmra.mxu0 %v475
  %v979 = vpop.f32.mrf.mxu0
  %v980 = vadd.f32 %v851, %v979
  %v981 = vpop.f32.mrf.mxu0
  %v982 = vadd.f32 %v853, %v981
  %983 = vmatmul.bf16.gmra.mxu0 %v483
  %v984 = vpop.f32.mrf.mxu0
  %v985 = vadd.f32 %v856, %v984
  %v986 = vpop.f32.mrf.mxu0
  %v987 = vadd.f32 %v858, %v986
  %988 = vmatmul.bf16.gmra.mxu0 %v491
  %v989 = vpop.f32.mrf.mxu0
  %v990 = vadd.f32 %v861, %v989
  %v991 = vpop.f32.mrf.mxu0
  %v992 = vadd.f32 %v863, %v991
  %993 = vmatmul.bf16.gmra.mxu0 %v499
  %v994 = vpop.f32.mrf.mxu0
  %v995 = vadd.f32 %v866, %v994
  %v996 = vpop.f32.mrf.mxu0
  %v997 = vadd.f32 %v868, %v996
  %998 = vmatmul.bf16.gmra.mxu0 %v507
  %v999 = vpop.f32.mrf.mxu0
  %v1000 = vadd.f32 %v871, %v999
  %v1001 = vpop.f32.mrf.mxu0
  %v1002 = vadd.f32 %v873, %v1001
  %1003 = vmatmul.bf16.gmra.mxu0 %v515
  %v1004 = vpop.f32.mrf.mxu0
  %v1005 = vadd.f32 %v876, %v1004
  %v1006 = vpop.f32.mrf.mxu0
  %v1007 = vadd.f32 %v878, %v1006
  %1008 = vmatmul.bf16.gmra.mxu0 %v523
  %v1009 = vpop.f32.mrf.mxu0
  %v1010 = vadd.f32 %v881, %v1009
  %v1011 = vpop.f32.mrf.mxu0
  %v1012 = vadd.f32 %v883, %v1011
  %1013 = vmatmul.bf16.gmra.mxu0 %v531
  %v1014 = vpop.f32.mrf.mxu0
  %v1015 = vadd.f32 %v886, %v1014
  %v1016 = vpop.f32.mrf.mxu0
  %v1017 = vadd.f32 %v888, %v1016
  %1018 = vmatmul.bf16.gmra.mxu0 %v539
  %v1019 = vpop.f32.mrf.mxu0
  %v1020 = vadd.f32 %v891, %v1019
  %v1021 = vpop.f32.mrf.mxu0
  %v1022 = vadd.f32 %v893, %v1021
  %1023 = vmatmul.bf16.gmra.mxu0 %v547
  %v1024 = vpop.f32.mrf.mxu0
  %v1025 = vadd.f32 %v896, %v1024
  %v1026 = vpop.f32.mrf.mxu0
  %v1027 = vadd.f32 %v898, %v1026
  %1028 = vmatmul.bf16.gmra.mxu0 %v555
  %v1029 = vpop.f32.mrf.mxu0
  %v1030 = vadd.f32 %v901, %v1029
  %v1031 = vpop.f32.mrf.mxu0
  %v1032 = vadd.f32 %v903, %v1031
  %1033 = vmatmul.bf16.gmra.mxu0 %v563
  %v1034 = vpop.f32.mrf.mxu0
  %v1035 = vadd.f32 %v906, %v1034
  %v1036 = vpop.f32.mrf.mxu0
  %v1037 = vadd.f32 %v908, %v1036
  %1038 = vmatmul.bf16.gmra.mxu0 %v571
  %v1039 = vpop.f32.mrf.mxu0
  %v1040 = vadd.f32 %v911, %v1039
  %v1041 = vpop.f32.mrf.mxu0
  %v1042 = vadd.f32 %v913, %v1041
  %1043 = vmatmul.bf16.gmra.mxu0 %v579
  %v1044 = vpop.f32.mrf.mxu0
  %v1045 = vadd.f32 %v916, %v1044
  %v1046 = vpop.f32.mrf.mxu0
  %v1047 = vadd.f32 %v918, %v1046
  %1048 = vmatmul.bf16.gmra.mxu0 %v587
  %v1049 = vpop.f32.mrf.mxu0
  %v1050 = vadd.f32 %v921, %v1049
  %v1051 = vpop.f32.mrf.mxu0
  %v1052 = vadd.f32 %v923, %v1051
  %1053 = vmatmul.bf16.gmra.mxu0 %v595
  %v1054 = vpop.f32.mrf.mxu0
  %v1055 = vadd.f32 %v926, %v1054
  %v1056 = vpop.f32.mrf.mxu0
  %v1057 = vadd.f32 %v928, %v1056
  %1058 = vmatmul.bf16.gmra.mxu0 %v671
  %v1059 = vpop.f32.mrf.mxu0
  %v1060 = vadd.f32 %v931, %v1059
  %v1061 = vpop.f32.mrf.mxu0
  %v1062 = vadd.f32 %v933, %v1061
  %1063 = vmatmul.bf16.gmra.mxu0 %v679
  %v1064 = vpop.f32.mrf.mxu0
  %v1065 = vadd.f32 %v936, %v1064
  %v1066 = vpop.f32.mrf.mxu0
  %v1067 = vadd.f32 %v938, %v1066
  %1068 = vdwg.mxu0
  %v1101 = vunpack.c.l.b16 %v628
  %v1102 = vunpack.c.l.b16 %v629
  %v1103 = vunpack.c.l.b16 %v630
  %v1104 = vunpack.c.l.b16 %v631
  %v1105 = vunpack.c.l.b16 %v632
  %v1106 = vunpack.c.l.b16 %v633
  %v1107 = vunpack.c.l.b16 %v634
  %v1108 = vunpack.c.l.b16 %v635
  %v1109 = vunpack.c.l.b16 %v636
  %v1110 = vunpack.c.l.b16 %v637
  %v1111 = vunpack.c.l.b16 %v638
  %v1112 = vunpack.c.l.b16 %v639
  %v1113 = vunpack.c.l.b16 %v640
  %v1114 = vunpack.c.l.b16 %v641
  %v1115 = vunpack.c.l.b16 %v642
  %v1116 = vunpack.c.l.b16 %v643
  %v1117 = vunpack.c.l.b16 %v644
  %v1118 = vunpack.c.l.b16 %v645
  %v1119 = vunpack.c.l.b16 %v646
  %v1120 = vunpack.c.l.b16 %v647
  %v1121 = vunpack.c.l.b16 %v648
  %v1122 = vunpack.c.l.b16 %v649
  %v1123 = vunpack.c.l.b16 %v650
  %v1124 = vunpack.c.l.b16 %v651
  %v1125 = vunpack.c.l.b16 %v652
  %v1126 = vunpack.c.l.b16 %v653
  %v1127 = vunpack.c.l.b16 %v654
  %v1128 = vunpack.c.l.b16 %v655
  %v1129 = vunpack.c.l.b16 %v656
  %v1130 = vunpack.c.l.b16 %v657
  %v1131 = vunpack.c.l.b16 %v658
  %v1132 = vunpack.c.l.b16 %v659
  %v1133 = vpack.c.b16 %v1102, %v1101
  %v1134 = vpack.c.b16 %v1104, %v1103
  %v1135 = vpack.c.b16 %v1106, %v1105
  %v1136 = vpack.c.b16 %v1108, %v1107
  %v1137 = vpack.c.b16 %v1110, %v1109
  %v1138 = vpack.c.b16 %v1112, %v1111
  %v1139 = vpack.c.b16 %v1114, %v1113
  %v1140 = vpack.c.b16 %v1116, %v1115
  %v1141 = vpack.c.b16 %v1118, %v1117
  %v1142 = vpack.c.b16 %v1120, %v1119
  %v1143 = vpack.c.b16 %v1122, %v1121
  %v1144 = vpack.c.b16 %v1124, %v1123
  %v1145 = vpack.c.b16 %v1126, %v1125
  %v1146 = vpack.c.b16 %v1128, %v1127
  %v1147 = vpack.c.b16 %v1130, %v1129
  %v1148 = vpack.c.b16 %v1132, %v1131
  %1165 = vmatpush.bf16.msra.mxu0 %v1140
  %1166 = vmatpush.bf16.msra.mxu0 %v1139
  %1167 = vmatpush.bf16.msra.mxu0 %v1138
  %1168 = vmatpush.bf16.msra.mxu0 %v1137
  %1169 = vmatpush.bf16.msra.mxu0 %v1136
  %1170 = vmatpush.bf16.msra.mxu0 %v1135
  %1171 = vmatpush.bf16.msra.mxu0 %v1134
  %1172 = vmatpush.bf16.msra.mxu0 %v1133
  %1173 = vmatmul.bf16.gmra.mxu0 %v356
  %v1174 = vpop.f32.mrf.mxu0
  %v1175 = vadd.f32 %v950, %v1174
  %v1176 = vpop.f32.mrf.mxu0
  %v1177 = vadd.f32 %v952, %v1176
  %1178 = vmatmul.bf16.gmra.mxu0 %v357
  %v1179 = vpop.f32.mrf.mxu0
  %v1180 = vadd.f32 %v955, %v1179
  %v1181 = vpop.f32.mrf.mxu0
  %v1182 = vadd.f32 %v957, %v1181
  %1183 = vmatmul.bf16.gmra.mxu0 %v358
  %v1184 = vpop.f32.mrf.mxu0
  %v1185 = vadd.f32 %v960, %v1184
  %v1186 = vpop.f32.mrf.mxu0
  %v1187 = vadd.f32 %v962, %v1186
  %1188 = vmatmul.bf16.gmra.mxu0 %v359
  %v1189 = vpop.f32.mrf.mxu0
  %v1190 = vadd.f32 %v965, %v1189
  %v1191 = vpop.f32.mrf.mxu0
  %v1192 = vadd.f32 %v967, %v1191
  %1193 = vmatmul.bf16.gmra.mxu0 %v360
  %v1194 = vpop.f32.mrf.mxu0
  %v1195 = vadd.f32 %v970, %v1194
  %v1196 = vpop.f32.mrf.mxu0
  %v1197 = vadd.f32 %v972, %v1196
  %1198 = vmatmul.bf16.gmra.mxu0 %v361
  %v1199 = vpop.f32.mrf.mxu0
  %v1200 = vadd.f32 %v975, %v1199
  %v1201 = vpop.f32.mrf.mxu0
  %v1202 = vadd.f32 %v977, %v1201
  %1203 = vmatmul.bf16.gmra.mxu0 %v362
  %v1204 = vpop.f32.mrf.mxu0
  %v1205 = vadd.f32 %v980, %v1204
  %v1206 = vpop.f32.mrf.mxu0
  %v1207 = vadd.f32 %v982, %v1206
  %1208 = vmatmul.bf16.gmra.mxu0 %v363
  %v1209 = vpop.f32.mrf.mxu0
  %v1210 = vadd.f32 %v985, %v1209
  %v1211 = vpop.f32.mrf.mxu0
  %v1212 = vadd.f32 %v987, %v1211
  %1213 = vmatmul.bf16.gmra.mxu0 %v364
  %v1214 = vpop.f32.mrf.mxu0
  %v1215 = vadd.f32 %v990, %v1214
  %v1216 = vpop.f32.mrf.mxu0
  %v1217 = vadd.f32 %v992, %v1216
  %1218 = vmatmul.bf16.gmra.mxu0 %v365
  %v1219 = vpop.f32.mrf.mxu0
  %v1220 = vadd.f32 %v995, %v1219
  %v1221 = vpop.f32.mrf.mxu0
  %v1222 = vadd.f32 %v997, %v1221
  %1223 = vmatmul.bf16.gmra.mxu0 %v366
  %v1224 = vpop.f32.mrf.mxu0
  %v1225 = vadd.f32 %v1000, %v1224
  %v1226 = vpop.f32.mrf.mxu0
  %v1227 = vadd.f32 %v1002, %v1226
  %1228 = vmatmul.bf16.gmra.mxu0 %v367
  %v1229 = vpop.f32.mrf.mxu0
  %v1230 = vadd.f32 %v1005, %v1229
  %v1231 = vpop.f32.mrf.mxu0
  %v1232 = vadd.f32 %v1007, %v1231
  %1233 = vmatmul.bf16.gmra.mxu0 %v368
  %v1234 = vpop.f32.mrf.mxu0
  %v1235 = vadd.f32 %v1010, %v1234
  %v1236 = vpop.f32.mrf.mxu0
  %v1237 = vadd.f32 %v1012, %v1236
  %1238 = vmatmul.bf16.gmra.mxu0 %v369
  %v1239 = vpop.f32.mrf.mxu0
  %v1240 = vadd.f32 %v1015, %v1239
  %v1241 = vpop.f32.mrf.mxu0
  %v1242 = vadd.f32 %v1017, %v1241
  %1243 = vmatmul.bf16.gmra.mxu0 %v370
  %v1244 = vpop.f32.mrf.mxu0
  %v1245 = vadd.f32 %v1020, %v1244
  %v1246 = vpop.f32.mrf.mxu0
  %v1247 = vadd.f32 %v1022, %v1246
  %1248 = vmatmul.bf16.gmra.mxu0 %v371
  %v1249 = vpop.f32.mrf.mxu0
  %v1250 = vadd.f32 %v1025, %v1249
  %v1251 = vpop.f32.mrf.mxu0
  %v1252 = vadd.f32 %v1027, %v1251
  %1253 = vmatmul.bf16.gmra.mxu0 %v372
  %v1254 = vpop.f32.mrf.mxu0
  %v1255 = vadd.f32 %v1030, %v1254
  %v1256 = vpop.f32.mrf.mxu0
  %v1257 = vadd.f32 %v1032, %v1256
  %1258 = vmatmul.bf16.gmra.mxu0 %v373
  %v1259 = vpop.f32.mrf.mxu0
  %v1260 = vadd.f32 %v1035, %v1259
  %v1261 = vpop.f32.mrf.mxu0
  %v1262 = vadd.f32 %v1037, %v1261
  %1263 = vmatmul.bf16.gmra.mxu0 %v374
  %v1264 = vpop.f32.mrf.mxu0
  %v1265 = vadd.f32 %v1040, %v1264
  %v1266 = vpop.f32.mrf.mxu0
  %v1267 = vadd.f32 %v1042, %v1266
  %1268 = vmatmul.bf16.gmra.mxu0 %v375
  %v1269 = vpop.f32.mrf.mxu0
  %v1270 = vadd.f32 %v1045, %v1269
  %v1271 = vpop.f32.mrf.mxu0
  %v1272 = vadd.f32 %v1047, %v1271
  %1273 = vmatmul.bf16.gmra.mxu0 %v376
  %v1274 = vpop.f32.mrf.mxu0
  %v1275 = vadd.f32 %v1050, %v1274
  %v1276 = vpop.f32.mrf.mxu0
  %v1277 = vadd.f32 %v1052, %v1276
  %1278 = vmatmul.bf16.gmra.mxu0 %v377
  %v1279 = vpop.f32.mrf.mxu0
  %v1280 = vadd.f32 %v1055, %v1279
  %v1281 = vpop.f32.mrf.mxu0
  %v1282 = vadd.f32 %v1057, %v1281
  %1283 = vmatmul.bf16.gmra.mxu0 %v378
  %v1284 = vpop.f32.mrf.mxu0
  %v1285 = vadd.f32 %v1060, %v1284
  %v1286 = vpop.f32.mrf.mxu0
  %v1287 = vadd.f32 %v1062, %v1286
  %1288 = vmatmul.bf16.gmra.mxu0 %v379
  %v1289 = vpop.f32.mrf.mxu0
  %v1290 = vadd.f32 %v1065, %v1289
  %v1291 = vpop.f32.mrf.mxu0
  %v1292 = vadd.f32 %v1067, %v1291
  %1293 = vdwg.mxu0
  %1294 = vmatpush.bf16.msra.mxu0 %v1148
  %1295 = vmatpush.bf16.msra.mxu0 %v1147
  %1296 = vmatpush.bf16.msra.mxu0 %v1146
  %1297 = vmatpush.bf16.msra.mxu0 %v1145
  %1298 = vmatpush.bf16.msra.mxu0 %v1144
  %1299 = vmatpush.bf16.msra.mxu0 %v1143
  %1300 = vmatpush.bf16.msra.mxu0 %v1142
  %1301 = vmatpush.bf16.msra.mxu0 %v1141
  %1302 = vmatmul.bf16.gmra.mxu0 %v419
  %v1303 = vpop.f32.mrf.mxu0
  %v1304 = vadd.f32 %v1175, %v1303
  %v1305 = vpop.f32.mrf.mxu0
  %v1306 = vadd.f32 %v1177, %v1305
  %1307 = vmatmul.bf16.gmra.mxu0 %v427
  %v1308 = vpop.f32.mrf.mxu0
  %v1309 = vadd.f32 %v1180, %v1308
  %v1310 = vpop.f32.mrf.mxu0
  %v1311 = vadd.f32 %v1182, %v1310
  %1312 = vmatmul.bf16.gmra.mxu0 %v435
  %v1313 = vpop.f32.mrf.mxu0
  %v1314 = vadd.f32 %v1185, %v1313
  %v1315 = vpop.f32.mrf.mxu0
  %v1316 = vadd.f32 %v1187, %v1315
  %1317 = vmatmul.bf16.gmra.mxu0 %v443
  %v1318 = vpop.f32.mrf.mxu0
  %v1319 = vadd.f32 %v1190, %v1318
  %v1320 = vpop.f32.mrf.mxu0
  %v1321 = vadd.f32 %v1192, %v1320
  %1322 = vmatmul.bf16.gmra.mxu0 %v451
  %v1323 = vpop.f32.mrf.mxu0
  %v1324 = vadd.f32 %v1195, %v1323
  %v1325 = vpop.f32.mrf.mxu0
  %v1326 = vadd.f32 %v1197, %v1325
  %1327 = vmatmul.bf16.gmra.mxu0 %v459
  %v1328 = vpop.f32.mrf.mxu0
  %v1329 = vadd.f32 %v1200, %v1328
  %v1330 = vpop.f32.mrf.mxu0
  %v1331 = vadd.f32 %v1202, %v1330
  %1332 = vmatmul.bf16.gmra.mxu0 %v467
  %v1333 = vpop.f32.mrf.mxu0
  %v1334 = vadd.f32 %v1205, %v1333
  %v1335 = vpop.f32.mrf.mxu0
  %v1336 = vadd.f32 %v1207, %v1335
  %1337 = vmatmul.bf16.gmra.mxu0 %v475
  %v1338 = vpop.f32.mrf.mxu0
  %v1339 = vadd.f32 %v1210, %v1338
  %v1340 = vpop.f32.mrf.mxu0
  %v1341 = vadd.f32 %v1212, %v1340
  %1342 = vmatmul.bf16.gmra.mxu0 %v483
  %v1343 = vpop.f32.mrf.mxu0
  %v1344 = vadd.f32 %v1215, %v1343
  %v1345 = vpop.f32.mrf.mxu0
  %v1346 = vadd.f32 %v1217, %v1345
  %1347 = vmatmul.bf16.gmra.mxu0 %v491
  %v1348 = vpop.f32.mrf.mxu0
  %v1349 = vadd.f32 %v1220, %v1348
  %v1350 = vpop.f32.mrf.mxu0
  %v1351 = vadd.f32 %v1222, %v1350
  %1352 = vmatmul.bf16.gmra.mxu0 %v499
  %v1353 = vpop.f32.mrf.mxu0
  %v1354 = vadd.f32 %v1225, %v1353
  %v1355 = vpop.f32.mrf.mxu0
  %v1356 = vadd.f32 %v1227, %v1355
  %1357 = vmatmul.bf16.gmra.mxu0 %v507
  %v1358 = vpop.f32.mrf.mxu0
  %v1359 = vadd.f32 %v1230, %v1358
  %v1360 = vpop.f32.mrf.mxu0
  %v1361 = vadd.f32 %v1232, %v1360
  %1362 = vmatmul.bf16.gmra.mxu0 %v515
  %v1363 = vpop.f32.mrf.mxu0
  %v1364 = vadd.f32 %v1235, %v1363
  %v1365 = vpop.f32.mrf.mxu0
  %v1366 = vadd.f32 %v1237, %v1365
  %1367 = vmatmul.bf16.gmra.mxu0 %v523
  %v1368 = vpop.f32.mrf.mxu0
  %v1369 = vadd.f32 %v1240, %v1368
  %v1370 = vpop.f32.mrf.mxu0
  %v1371 = vadd.f32 %v1242, %v1370
  %1372 = vmatmul.bf16.gmra.mxu0 %v531
  %v1373 = vpop.f32.mrf.mxu0
  %v1374 = vadd.f32 %v1245, %v1373
  %v1375 = vpop.f32.mrf.mxu0
  %v1376 = vadd.f32 %v1247, %v1375
  %1377 = vmatmul.bf16.gmra.mxu0 %v539
  %v1378 = vpop.f32.mrf.mxu0
  %v1379 = vadd.f32 %v1250, %v1378
  %v1380 = vpop.f32.mrf.mxu0
  %v1381 = vadd.f32 %v1252, %v1380
  %1382 = vmatmul.bf16.gmra.mxu0 %v547
  %v1383 = vpop.f32.mrf.mxu0
  %v1384 = vadd.f32 %v1255, %v1383
  %v1385 = vpop.f32.mrf.mxu0
  %v1386 = vadd.f32 %v1257, %v1385
  %1387 = vmatmul.bf16.gmra.mxu0 %v555
  %v1388 = vpop.f32.mrf.mxu0
  %v1389 = vadd.f32 %v1260, %v1388
  %v1390 = vpop.f32.mrf.mxu0
  %v1391 = vadd.f32 %v1262, %v1390
  %1392 = vmatmul.bf16.gmra.mxu0 %v563
  %v1393 = vpop.f32.mrf.mxu0
  %v1394 = vadd.f32 %v1265, %v1393
  %v1395 = vpop.f32.mrf.mxu0
  %v1396 = vadd.f32 %v1267, %v1395
  %1397 = vmatmul.bf16.gmra.mxu0 %v571
  %v1398 = vpop.f32.mrf.mxu0
  %v1399 = vadd.f32 %v1270, %v1398
  %v1400 = vpop.f32.mrf.mxu0
  %v1401 = vadd.f32 %v1272, %v1400
  %1402 = vmatmul.bf16.gmra.mxu0 %v579
  %v1403 = vpop.f32.mrf.mxu0
  %v1404 = vadd.f32 %v1275, %v1403
  %v1405 = vpop.f32.mrf.mxu0
  %v1406 = vadd.f32 %v1277, %v1405
  %1407 = vmatmul.bf16.gmra.mxu0 %v587
  %v1408 = vpop.f32.mrf.mxu0
  %v1409 = vadd.f32 %v1280, %v1408
  %v1410 = vpop.f32.mrf.mxu0
  %v1411 = vadd.f32 %v1282, %v1410
  %1412 = vmatmul.bf16.gmra.mxu0 %v595
  %v1413 = vpop.f32.mrf.mxu0
  %v1414 = vadd.f32 %v1285, %v1413
  %v1415 = vpop.f32.mrf.mxu0
  %v1416 = vadd.f32 %v1287, %v1415
  %1417 = vmatmul.bf16.gmra.mxu0 %v603
  %v1418 = vpop.f32.mrf.mxu0
  %v1419 = vadd.f32 %v1290, %v1418
  %v1420 = vpop.f32.mrf.mxu0
  %v1421 = vadd.f32 %v1292, %v1420
  %1422 = vdwg.mxu0
  %v1423 = vld [vmem:[%s2] sm:$0x1]
  %v1425 = vperm.slane %v1423, 0
  %v1427 = vadd.f32 %v1304, %v1425
  %v1428 = vadd.f32 %v1306, %v1425
  %v1429 = vadd.f32 %v1309, %v1425
  %v1430 = vadd.f32 %v1311, %v1425
  %v1431 = vadd.f32 %v1314, %v1425
  %v1432 = vadd.f32 %v1316, %v1425
  %v1433 = vadd.f32 %v1319, %v1425
  %v1434 = vadd.f32 %v1321, %v1425
  %v1435 = vadd.f32 %v1324, %v1425
  %v1436 = vadd.f32 %v1326, %v1425
  %v1437 = vadd.f32 %v1329, %v1425
  %v1438 = vadd.f32 %v1331, %v1425
  %v1439 = vadd.f32 %v1334, %v1425
  %v1440 = vadd.f32 %v1336, %v1425
  %v1441 = vadd.f32 %v1339, %v1425
  %v1442 = vadd.f32 %v1341, %v1425
  %v1443 = vadd.f32 %v1344, %v1425
  %v1444 = vadd.f32 %v1346, %v1425
  %v1445 = vadd.f32 %v1349, %v1425
  %v1446 = vadd.f32 %v1351, %v1425
  %v1447 = vadd.f32 %v1354, %v1425
  %v1448 = vadd.f32 %v1356, %v1425
  %v1449 = vadd.f32 %v1359, %v1425
  %v1450 = vadd.f32 %v1361, %v1425
  %v1451 = vadd.f32 %v1364, %v1425
  %v1452 = vadd.f32 %v1366, %v1425
  %v1453 = vadd.f32 %v1369, %v1425
  %v1454 = vadd.f32 %v1371, %v1425
  %v1455 = vadd.f32 %v1374, %v1425
  %v1456 = vadd.f32 %v1376, %v1425
  %v1457 = vadd.f32 %v1379, %v1425
  %v1458 = vadd.f32 %v1381, %v1425
  %v1459 = vadd.f32 %v1384, %v1425
  %v1460 = vadd.f32 %v1386, %v1425
  %v1461 = vadd.f32 %v1389, %v1425
  %v1462 = vadd.f32 %v1391, %v1425
  %v1463 = vadd.f32 %v1394, %v1425
  %v1464 = vadd.f32 %v1396, %v1425
  %v1465 = vadd.f32 %v1399, %v1425
  %v1466 = vadd.f32 %v1401, %v1425
  %v1467 = vadd.f32 %v1404, %v1425
  %v1468 = vadd.f32 %v1406, %v1425
  %v1469 = vadd.f32 %v1409, %v1425
  %v1470 = vadd.f32 %v1411, %v1425
  %v1471 = vadd.f32 %v1414, %v1425
  %v1472 = vadd.f32 %v1416, %v1425
  %v1473 = vadd.f32 %v1419, %v1425
  %v1474 = vadd.f32 %v1421, %v1425
  %v1475 = vmax.f32 %v1427, 0.0
  %v1476 = vmax.f32 %v1428, 0.0
  %v1477 = vmax.f32 %v1429, 0.0
  %v1478 = vmax.f32 %v1430, 0.0
  %v1479 = vmax.f32 %v1431, 0.0
  %v1480 = vmax.f32 %v1432, 0.0
  %v1481 = vmax.f32 %v1433, 0.0
  %v1482 = vmax.f32 %v1434, 0.0
  %v1483 = vmax.f32 %v1435, 0.0
  %v1484 = vmax.f32 %v1436, 0.0
  %v1485 = vmax.f32 %v1437, 0.0
  %v1486 = vmax.f32 %v1438, 0.0
  %v1487 = vmax.f32 %v1439, 0.0
  %v1488 = vmax.f32 %v1440, 0.0
  %v1489 = vmax.f32 %v1441, 0.0
  %v1490 = vmax.f32 %v1442, 0.0
  %v1491 = vmax.f32 %v1443, 0.0
  %v1492 = vmax.f32 %v1444, 0.0
  %v1493 = vmax.f32 %v1445, 0.0
  %v1494 = vmax.f32 %v1446, 0.0
  %v1495 = vmax.f32 %v1447, 0.0
  %v1496 = vmax.f32 %v1448, 0.0
  %v1497 = vmax.f32 %v1449, 0.0
  %v1498 = vmax.f32 %v1450, 0.0
  %v1499 = vmax.f32 %v1451, 0.0
  %v1500 = vmax.f32 %v1452, 0.0
  %v1501 = vmax.f32 %v1453, 0.0
  %v1502 = vmax.f32 %v1454, 0.0
  %v1503 = vmax.f32 %v1455, 0.0
  %v1504 = vmax.f32 %v1456, 0.0
  %v1505 = vmax.f32 %v1457, 0.0
  %v1506 = vmax.f32 %v1458, 0.0
  %v1507 = vmax.f32 %v1459, 0.0
  %v1508 = vmax.f32 %v1460, 0.0
  %v1509 = vmax.f32 %v1461, 0.0
  %v1510 = vmax.f32 %v1462, 0.0
  %v1511 = vmax.f32 %v1463, 0.0
  %v1512 = vmax.f32 %v1464, 0.0
  %v1513 = vmax.f32 %v1465, 0.0
  %v1514 = vmax.f32 %v1466, 0.0
  %v1515 = vmax.f32 %v1467, 0.0
  %v1516 = vmax.f32 %v1468, 0.0
  %v1517 = vmax.f32 %v1469, 0.0
  %v1518 = vmax.f32 %v1470, 0.0
  %v1519 = vmax.f32 %v1471, 0.0
  %v1520 = vmax.f32 %v1472, 0.0
  %v1521 = vmax.f32 %v1473, 0.0
  %v1522 = vmax.f32 %v1474, 0.0
  %v1523 = vpack.c.bf16 %v1475, %v1475
  %v1524 = vpack.c.bf16 %v1476, %v1476
  %v1525 = vpack.c.bf16 %v1477, %v1477
  %v1526 = vpack.c.bf16 %v1478, %v1478
  %v1527 = vpack.c.bf16 %v1479, %v1479
  %v1528 = vpack.c.bf16 %v1480, %v1480
  %v1529 = vpack.c.bf16 %v1481, %v1481
  %v1530 = vpack.c.bf16 %v1482, %v1482
  %v1531 = vpack.c.bf16 %v1483, %v1483
  %v1532 = vpack.c.bf16 %v1484, %v1484
  %v1533 = vpack.c.bf16 %v1485, %v1485
  %v1534 = vpack.c.bf16 %v1486, %v1486
  %v1535 = vpack.c.bf16 %v1487, %v1487
  %v1536 = vpack.c.bf16 %v1488, %v1488
  %v1537 = vpack.c.bf16 %v1489, %v1489
  %v1538 = vpack.c.bf16 %v1490, %v1490
  %v1539 = vpack.c.bf16 %v1491, %v1491
  %v1540 = vpack.c.bf16 %v1492, %v1492
  %v1541 = vpack.c.bf16 %v1493, %v1493
  %v1542 = vpack.c.bf16 %v1494, %v1494
  %v1543 = vpack.c.bf16 %v1495, %v1495
  %v1544 = vpack.c.bf16 %v1496, %v1496
  %v1545 = vpack.c.bf16 %v1497, %v1497
  %v1546 = vpack.c.bf16 %v1498, %v1498
  %v1547 = vpack.c.bf16 %v1499, %v1499
  %v1548 = vpack.c.bf16 %v1500, %v1500
  %v1549 = vpack.c.bf16 %v1501, %v1501
  %v1550 = vpack.c.bf16 %v1502, %v1502
  %v1551 = vpack.c.bf16 %v1503, %v1503
  %v1552 = vpack.c.bf16 %v1504, %v1504
  %v1553 = vpack.c.bf16 %v1505, %v1505
  %v1554 = vpack.c.bf16 %v1506, %v1506
  %v1555 = vpack.c.bf16 %v1507, %v1507
  %v1556 = vpack.c.bf16 %v1508, %v1508
  %v1557 = vpack.c.bf16 %v1509, %v1509
  %v1558 = vpack.c.bf16 %v1510, %v1510
  %v1559 = vpack.c.bf16 %v1511, %v1511
  %v1560 = vpack.c.bf16 %v1512, %v1512
  %v1561 = vpack.c.bf16 %v1513, %v1513
  %v1562 = vpack.c.bf16 %v1514, %v1514
  %v1563 = vpack.c.bf16 %v1515, %v1515
  %v1564 = vpack.c.bf16 %v1516, %v1516
  %v1565 = vpack.c.bf16 %v1517, %v1517
  %v1566 = vpack.c.bf16 %v1518, %v1518
  %v1567 = vpack.c.bf16 %v1519, %v1519
  %v1568 = vpack.c.bf16 %v1520, %v1520
  %v1569 = vpack.c.bf16 %v1521, %v1521
  %v1570 = vpack.c.bf16 %v1522, %v1522
  %1571 = vst [vmem:[%s23] sm:$0xf] %v1523
  %1572 = vst [vmem:[%s23 + $0x4] sm:$0xf] %v1524
  %1573 = vst [vmem:[%s23 + $0x8] sm:$0xf] %v1525
  %1574 = vst [vmem:[%s23 + $0xc] sm:$0xf] %v1526
  %1575 = vst [vmem:[%s23 + $0x10] sm:$0xf] %v1527
  %1576 = vst [vmem:[%s23 + $0x14] sm:$0xf] %v1528
  %1577 = vst [vmem:[%s23 + $0x18] sm:$0xf] %v1529
  %1578 = vst [vmem:[%s23 + $0x1c] sm:$0xf] %v1530
  %1579 = vst [vmem:[%s23 + $0x20] sm:$0xf] %v1531
  %1580 = vst [vmem:[%s23 + $0x24] sm:$0xf] %v1532
  %1581 = vst [vmem:[%s23 + $0x28] sm:$0xf] %v1533
  %1582 = vst [vmem:[%s23 + $0x2c] sm:$0xf] %v1534
  %1583 = vst [vmem:[%s23 + $0x30] sm:$0xf] %v1535
  %1584 = vst [vmem:[%s23 + $0x34] sm:$0xf] %v1536
  %1585 = vst [vmem:[%s23 + $0x38] sm:$0xf] %v1537
  %1586 = vst [vmem:[%s23 + $0x3c] sm:$0xf] %v1538
  %1587 = vst [vmem:[%s23 + $0x40] sm:$0xf] %v1539
  %1588 = vst [vmem:[%s23 + $0x44] sm:$0xf] %v1540
  %1589 = vst [vmem:[%s23 + $0x48] sm:$0xf] %v1541
  %1590 = vst [vmem:[%s23 + $0x4c] sm:$0xf] %v1542
  %1591 = vst [vmem:[%s23 + $0x50] sm:$0xf] %v1543
  %1592 = vst [vmem:[%s23 + $0x54] sm:$0xf] %v1544
  %1593 = vst [vmem:[%s23 + $0x58] sm:$0xf] %v1545
  %1594 = vst [vmem:[%s23 + $0x5c] sm:$0xf] %v1546
  %1595 = vst [vmem:[%s23 + $0x60] sm:$0xf] %v1547
  %1596 = vst [vmem:[%s23 + $0x64] sm:$0xf] %v1548
  %1597 = vst [vmem:[%s23 + $0x68] sm:$0xf] %v1549
  %1598 = vst [vmem:[%s23 + $0x6c] sm:$0xf] %v1550
  %1599 = vst [vmem:[%s23 + $0x70] sm:$0xf] %v1551
  %1600 = vst [vmem:[%s23 + $0x74] sm:$0xf] %v1552
  %1601 = vst [vmem:[%s23 + $0x78] sm:$0xf] %v1553
  %1602 = vst [vmem:[%s23 + $0x7c] sm:$0xf] %v1554
  %1603 = vst [vmem:[%s23 + $0x80] sm:$0xf] %v1555
  %1604 = vst [vmem:[%s23 + $0x84] sm:$0xf] %v1556
  %1605 = vst [vmem:[%s23 + $0x88] sm:$0xf] %v1557
  %1606 = vst [vmem:[%s23 + $0x8c] sm:$0xf] %v1558
  %1607 = vst [vmem:[%s23 + $0x90] sm:$0xf] %v1559
  %1608 = vst [vmem:[%s23 + $0x94] sm:$0xf] %v1560
  %1609 = vst [vmem:[%s23 + $0x98] sm:$0xf] %v1561
  %1610 = vst [vmem:[%s23 + $0x9c] sm:$0xf] %v1562
  %1611 = vst [vmem:[%s23 + $0xa0] sm:$0xf] %v1563
  %1612 = vst [vmem:[%s23 + $0xa4] sm:$0xf] %v1564
  %1613 = vst [vmem:[%s23 + $0xa8] sm:$0xf] %v1565
  %1614 = vst [vmem:[%s23 + $0xac] sm:$0xf] %v1566
  %1615 = vst [vmem:[%s23 + $0xb0] sm:$0xf] %v1567
  %1616 = vst [vmem:[%s23 + $0xb4] sm:$0xf] %v1568
  %1617 = vst [vmem:[%s23 + $0xb8] sm:$0xf] %v1569
  %1618 = vst [vmem:[%s23 + $0xbc] sm:$0xf] %v1570
  %s1619 = sadd.s32 0, 0
  %s1620 = smul.u32 48, %s1619
  %p1621 = scmp.lt.s32.totalorder %s1620, 47
  %s1622 = scalar_select %p1621, %s1620, 47
  %s1623 = smul.addr %s1622, 4
  %s1624 = scalar_lea.vmem %s3, %s1623
  // Predicated region
  $region56: #{res_basic_block.2} parent=0 // pred_check
    _
  $region57: #{res_basic_block.2} parent=0 // pred_check_branch
    %1626 = sbr.rel (0) target = $region59
  $region58: #{res_basic_block.2} parent=0 // pred_region
    %s1627 = sadd.s32 0, 0
    %s1628 = smul.u32 48, %s1627
  $region59: #{res_basic_block.2} parent=0 // pred_fallthru
    _
  // Predicated region
  $region60: #{res_basic_block.2} parent=0 // pred_check
    _
  $region61: #{res_basic_block.2} parent=0 // pred_check_branch
    %1630 = sbr.rel (0) target = $region63
  $region62: #{res_basic_block.2} parent=0 // pred_region
    %s1631 = sadd.s32 0, 0
    %s1632 = smul.u32 48, %s1631
    %p1633 = scmp.lt.s32.totalorder %s1632, 47
    %s1634 = scalar_select %p1633, %s1632, 47
    %s1635 = smul.addr %s1634, 4
    %s1636 = scalar_lea.vmem %s3, %s1635
  $region63: #{res_basic_block.2} parent=0 // pred_fallthru
    _
  %1637 = vsyncmov [#allocation3]
  %s1638 = vpop.sfrf %1637
  %p1639 = scmp.eq.s32.totalorder %s1638, 0
  %p1640 = pneg %p1639
  %1642 = shalt.err (%p1640)
  %s1643 = scalar_lea.sflag [#allocation3], 1
  %1644 = vsyncmov %s1643
  %s1645 = vpop.sfrf %1644
  %p1646 = scmp.eq.s32.totalorder %s1645, 0
  %p1647 = pneg %p1646
  %1649 = shalt.err (%p1647)

// kernel: res_basic_block.3
$region0: #{res_basic_block.3}
  #allocation0 [shape = 'u32[]', space=smem, size = 0x4, offset = 0x4, fixed_abs, tag = 'smem constant byte address 0x4 - core index']
  #allocation1 [shape = 'u32[72,128]{1,0:T(1,128)}', space=vmem, size = 0x9000, scoped, tag = 'internal scratch']
  #allocation2 [shape = 'bf16[2,432,128]{2,1,0:T(8,128)(2,1)}', space=vmem, size = 0x36000, scoped, tag = 'scratch operand']
  #allocation3 [shape = 's32[2]{0}', space=sflag, size = 0x8, scoped, tag = 'scratch operand']
  #allocation4 [shape = 's32[]', space=sflag, size = 0x4, offset = 0, fixed_abs, tag = 'sflag constant byte address 0x0 - dummy sync flag']
  #allocation5 [shape = 's32[]', space=sflag, size = 0x4, offset = 0, fixed_abs, tag = 'sflag constant byte address 0x0 - dummy sync flag']
  %s0 = inlined_call_operand.vmem [shape: bf16[432,128], index: 0, kind: input, shape index: {}]
  %s1 = inlined_call_operand.vmem [shape: bf16[3,384,128], index: 1, kind: input, shape index: {}]
  %s2 = inlined_call_operand.vmem [shape: f32[1,128], index: 2, kind: input, shape index: {}]
  %s3 = inlined_call_operand.vmem [shape: bf16[384,128], index: 3, kind: output, shape index: {}]
  %s4 = sld [smem:[#allocation0]]
  $region64: #{res_basic_block.3} parent=0
    _
  %s6 = ssub.s32 1, %s4
  %s7 = scalar_select 0, %s6, %s4
  // Predicated region
  $region2: #{res_basic_block.3} parent=0 // pred_check
    _
  $region3: #{res_basic_block.3} parent=0 // pred_check_branch
    %9 = sbr.rel (0) target = $region5
  $region4: #{res_basic_block.3} parent=0 // pred_region
    _
  $region5: #{res_basic_block.3} parent=0 // pred_fallthru
    _
  // Predicated region
  $region6: #{res_basic_block.3} parent=0 // pred_check
    _
  $region7: #{res_basic_block.3} parent=0 // pred_check_branch
    %11 = sbr.rel (0) target = $region9
  $region8: #{res_basic_block.3} parent=0 // pred_region
    _
  $region9: #{res_basic_block.3} parent=0 // pred_fallthru
    _
  %s12 = sadd.s32 0, 0
  %s13 = smul.u32 48, %s12
  %p14 = scmp.lt.s32.totalorder %s13, 47
  %s15 = scalar_select %p14, %s13, 47
  %s16 = smul.addr %s15, 4
  %s17 = scalar_lea.vmem %s3, %s16
  %s18 = sadd.s32 0, 0
  %s19 = smul.u32 48, %s18
  %p20 = scmp.lt.s32.totalorder %s19, 47
  %s21 = scalar_select %p20, %s19, 47
  %s22 = smul.addr %s21, 4
  %s23 = scalar_lea.vmem %s3, %s22
  %s24 = sadd.s32 0, 0
  %s25 = smul.u32 48, %s24
  %s26 = sadd.s32 0, 0
  %s27 = ssub.s32 0, 0
  %s28 = ssub.s32 0, 0
  %p29 = scmp.ne.s32.totalorder 0, 0
  %p30 = scmp.lt.s32.totalorder 0, 0
  %p31 = pnand %p30, %p29
  %p32 = pneg %p31
  %s33 = sadd.s32 0, 2
  %s34 = scalar_select %p32, %s33, 0
  %p35 = scmp.eq.s32.totalorder 0, 0
  // Predicated region
  $region10: #{res_basic_block.3} parent=0 // pred_check
    %p36 = pneg %p35
  $region11: #{res_basic_block.3} parent=0 // pred_check_branch
    %38 = sbr.rel (%p36) target = $region13
  $region12: #{res_basic_block.3} parent=0 // pred_region
    %s39 = smul.u32 %s26, 384
    %s40 = sshra.s32 %s39, 3
    %s41 = sand.u32 %s39, 7
    %s42 = smul.addr %s40, 4
    %s43 = scalar_lea.vmem %s0, %s42
    %s44 = smul.u32 %s34, 54
    %s45 = smul.addr %s44, 4
    %s46 = scalar_lea.vmem [#allocation2], %s45
    %s47 = scalar_lea.sflag [#allocation3], %s34
    // Predicated region
    $region14: #{res_basic_block.3} parent=12 // pred_check
      _
    $region15: #{res_basic_block.3} parent=12 // pred_check_branch
      %49 = sbr.rel (0) target = $region17
    $region16: #{res_basic_block.3} parent=12 // pred_region
      loop: start=0, step=1, limit=1
      $region18: #{res_basic_block.3} parent=16 // loop_pre_header
        _
      $region19: #{res_basic_block.3} parent=16 // loop_header
        %s51 = sphi 0, %s55
        %p52 = scmp.ge.s32.totalorder %s51, 1
        %s56 = sphi %s43, %s43
        %s57 = sphi %s46, %s46
      $region20: #{res_basic_block.3} parent=16 // loop_header_branch
        %54 = sbr.rel (%p52) target = $region24
      $region21: #{res_basic_block.3} parent=16 // loop_body
        %v58 = vld [vmem:[%s56] sm:$0xff]
        %59 = vst [vmem:[%s57] sm:$0xff] %v58
        %v60 = vld [vmem:[%s56 + $0x8] sm:$0xff]
        %61 = vst [vmem:[%s57 + $0x8] sm:$0xff] %v60
        %v62 = vld [vmem:[%s56 + $0x10] sm:$0xff]
        %63 = vst [vmem:[%s57 + $0x10] sm:$0xff] %v62
        %v64 = vld [vmem:[%s56 + $0x18] sm:$0xff]
        %65 = vst [vmem:[%s57 + $0x18] sm:$0xff] %v64
        %v66 = vld [vmem:[%s56 + $0x20] sm:$0xff]
        %67 = vst [vmem:[%s57 + $0x20] sm:$0xff] %v66
        %v68 = vld [vmem:[%s56 + $0x28] sm:$0xff]
        %69 = vst [vmem:[%s57 + $0x28] sm:$0xff] %v68
        %v70 = vld [vmem:[%s56 + $0x30] sm:$0xff]
        %71 = vst [vmem:[%s57 + $0x30] sm:$0xff] %v70
        %v72 = vld [vmem:[%s56 + $0x38] sm:$0xff]
        %73 = vst [vmem:[%s57 + $0x38] sm:$0xff] %v72
        %v74 = vld [vmem:[%s56 + $0x40] sm:$0xff]
        %75 = vst [vmem:[%s57 + $0x40] sm:$0xff] %v74
        %v76 = vld [vmem:[%s56 + $0x48] sm:$0xff]
        %77 = vst [vmem:[%s57 + $0x48] sm:$0xff] %v76
        %v78 = vld [vmem:[%s56 + $0x50] sm:$0xff]
        %79 = vst [vmem:[%s57 + $0x50] sm:$0xff] %v78
        %v80 = vld [vmem:[%s56 + $0x58] sm:$0xff]
        %81 = vst [vmem:[%s57 + $0x58] sm:$0xff] %v80
        %v82 = vld [vmem:[%s56 + $0x60] sm:$0xff]
        %83 = vst [vmem:[%s57 + $0x60] sm:$0xff] %v82
        %v84 = vld [vmem:[%s56 + $0x68] sm:$0xff]
        %85 = vst [vmem:[%s57 + $0x68] sm:$0xff] %v84
        %v86 = vld [vmem:[%s56 + $0x70] sm:$0xff]
        %87 = vst [vmem:[%s57 + $0x70] sm:$0xff] %v86
        %v88 = vld [vmem:[%s56 + $0x78] sm:$0xff]
        %89 = vst [vmem:[%s57 + $0x78] sm:$0xff] %v88
        %v90 = vld [vmem:[%s56 + $0x80] sm:$0xff]
        %91 = vst [vmem:[%s57 + $0x80] sm:$0xff] %v90
        %v92 = vld [vmem:[%s56 + $0x88] sm:$0xff]
        %93 = vst [vmem:[%s57 + $0x88] sm:$0xff] %v92
        %v94 = vld [vmem:[%s56 + $0x90] sm:$0xff]
        %95 = vst [vmem:[%s57 + $0x90] sm:$0xff] %v94
        %v96 = vld [vmem:[%s56 + $0x98] sm:$0xff]
        %97 = vst [vmem:[%s57 + $0x98] sm:$0xff] %v96
        %v98 = vld [vmem:[%s56 + $0xa0] sm:$0xff]
        %99 = vst [vmem:[%s57 + $0xa0] sm:$0xff] %v98
        %v100 = vld [vmem:[%s56 + $0xa8] sm:$0xff]
        %101 = vst [vmem:[%s57 + $0xa8] sm:$0xff] %v100
        %v102 = vld [vmem:[%s56 + $0xb0] sm:$0xff]
        %103 = vst [vmem:[%s57 + $0xb0] sm:$0xff] %v102
        %v104 = vld [vmem:[%s56 + $0xb8] sm:$0xff]
        %105 = vst [vmem:[%s57 + $0xb8] sm:$0xff] %v104
        %v106 = vld [vmem:[%s56 + $0xc0] sm:$0xff]
        %107 = vst [vmem:[%s57 + $0xc0] sm:$0xff] %v106
        %v108 = vld [vmem:[%s56 + $0xc8] sm:$0xff]
        %109 = vst [vmem:[%s57 + $0xc8] sm:$0xff] %v108
        %v110 = vld [vmem:[%s56 + $0xd0] sm:$0xff]
        %111 = vst [vmem:[%s57 + $0xd0] sm:$0xff] %v110
      $region22: #{res_basic_block.3} parent=16 // loop_footer
        %s55 = sadd.s32 1, %s51
      $region23: #{res_basic_block.3} parent=16 // loop_footer_branch
        %50 = sbr.rel target = $region19
      $region24: #{res_basic_block.3} parent=16 // loop_exit
        _
    $region17: #{res_basic_block.3} parent=12 // pred_fallthru
      _
    // Predicated region
    $region25: #{res_basic_block.3} parent=12 // pred_check
      _
    $region26: #{res_basic_block.3} parent=12 // pred_check_branch
      %113 = sbr.rel target = $region28
    $region27: #{res_basic_block.3} parent=12 // pred_region
      _
    $region28: #{res_basic_block.3} parent=12 // pred_fallthru
      _
    // Predicated region
    $region29: #{res_basic_block.3} parent=12 // pred_check
      _
    $region30: #{res_basic_block.3} parent=12 // pred_check_branch
      %116 = sbr.rel (0) target = $region32
    $region31: #{res_basic_block.3} parent=12 // pred_region
      %117 = vsyncadd %s47, 3456
    $region32: #{res_basic_block.3} parent=12 // pred_fallthru
      _
  $region13: #{res_basic_block.3} parent=0 // pred_fallthru
    _
  %s118 = sadd.s32 0, 1
  %p119 = scmp.lt.s32.totalorder %s118, 1
  // Predicated region
  $region33: #{res_basic_block.3} parent=0 // pred_check
    %p120 = pneg %p119
  $region34: #{res_basic_block.3} parent=0 // pred_check_branch
    %122 = sbr.rel (%p120) target = $region36
  $region35: #{res_basic_block.3} parent=0 // pred_region
    %s123 = sadd.s32 %s26, 1
    %s124 = ssub.s32 1, %s34
    %s125 = smul.u32 %s123, 384
    %s126 = sshra.s32 %s125, 3
    %s127 = sand.u32 %s125, 7
    %s128 = smul.addr %s126, 4
    %s129 = scalar_lea.vmem %s0, %s128
    %s130 = smul.u32 %s124, 54
    %s131 = smul.addr %s130, 4
    %s132 = scalar_lea.vmem [#allocation2], %s131
    %s133 = scalar_lea.sflag [#allocation3], %s124
    // Predicated region
    $region37: #{res_basic_block.3} parent=35 // pred_check
      _
    $region38: #{res_basic_block.3} parent=35 // pred_check_branch
      %135 = sbr.rel (0) target = $region40
    $region39: #{res_basic_block.3} parent=35 // pred_region
      loop: start=0, step=1, limit=1
      $region41: #{res_basic_block.3} parent=39 // loop_pre_header
        _
      $region42: #{res_basic_block.3} parent=39 // loop_header
        %s137 = sphi 0, %s141
        %p138 = scmp.ge.s32.totalorder %s137, 1
        %s142 = sphi %s129, %s129
        %s143 = sphi %s132, %s132
      $region43: #{res_basic_block.3} parent=39 // loop_header_branch
        %140 = sbr.rel (%p138) target = $region47
      $region44: #{res_basic_block.3} parent=39 // loop_body
        %v144 = vld [vmem:[%s142] sm:$0xff]
        %145 = vst [vmem:[%s143] sm:$0xff] %v144
        %v146 = vld [vmem:[%s142 + $0x8] sm:$0xff]
        %147 = vst [vmem:[%s143 + $0x8] sm:$0xff] %v146
        %v148 = vld [vmem:[%s142 + $0x10] sm:$0xff]
        %149 = vst [vmem:[%s143 + $0x10] sm:$0xff] %v148
        %v150 = vld [vmem:[%s142 + $0x18] sm:$0xff]
        %151 = vst [vmem:[%s143 + $0x18] sm:$0xff] %v150
        %v152 = vld [vmem:[%s142 + $0x20] sm:$0xff]
        %153 = vst [vmem:[%s143 + $0x20] sm:$0xff] %v152
        %v154 = vld [vmem:[%s142 + $0x28] sm:$0xff]
        %155 = vst [vmem:[%s143 + $0x28] sm:$0xff] %v154
        %v156 = vld [vmem:[%s142 + $0x30] sm:$0xff]
        %157 = vst [vmem:[%s143 + $0x30] sm:$0xff] %v156
        %v158 = vld [vmem:[%s142 + $0x38] sm:$0xff]
        %159 = vst [vmem:[%s143 + $0x38] sm:$0xff] %v158
        %v160 = vld [vmem:[%s142 + $0x40] sm:$0xff]
        %161 = vst [vmem:[%s143 + $0x40] sm:$0xff] %v160
        %v162 = vld [vmem:[%s142 + $0x48] sm:$0xff]
        %163 = vst [vmem:[%s143 + $0x48] sm:$0xff] %v162
        %v164 = vld [vmem:[%s142 + $0x50] sm:$0xff]
        %165 = vst [vmem:[%s143 + $0x50] sm:$0xff] %v164
        %v166 = vld [vmem:[%s142 + $0x58] sm:$0xff]
        %167 = vst [vmem:[%s143 + $0x58] sm:$0xff] %v166
        %v168 = vld [vmem:[%s142 + $0x60] sm:$0xff]
        %169 = vst [vmem:[%s143 + $0x60] sm:$0xff] %v168
        %v170 = vld [vmem:[%s142 + $0x68] sm:$0xff]
        %171 = vst [vmem:[%s143 + $0x68] sm:$0xff] %v170
        %v172 = vld [vmem:[%s142 + $0x70] sm:$0xff]
        %173 = vst [vmem:[%s143 + $0x70] sm:$0xff] %v172
        %v174 = vld [vmem:[%s142 + $0x78] sm:$0xff]
        %175 = vst [vmem:[%s143 + $0x78] sm:$0xff] %v174
        %v176 = vld [vmem:[%s142 + $0x80] sm:$0xff]
        %177 = vst [vmem:[%s143 + $0x80] sm:$0xff] %v176
        %v178 = vld [vmem:[%s142 + $0x88] sm:$0xff]
        %179 = vst [vmem:[%s143 + $0x88] sm:$0xff] %v178
        %v180 = vld [vmem:[%s142 + $0x90] sm:$0xff]
        %181 = vst [vmem:[%s143 + $0x90] sm:$0xff] %v180
        %v182 = vld [vmem:[%s142 + $0x98] sm:$0xff]
        %183 = vst [vmem:[%s143 + $0x98] sm:$0xff] %v182
        %v184 = vld [vmem:[%s142 + $0xa0] sm:$0xff]
        %185 = vst [vmem:[%s143 + $0xa0] sm:$0xff] %v184
        %v186 = vld [vmem:[%s142 + $0xa8] sm:$0xff]
        %187 = vst [vmem:[%s143 + $0xa8] sm:$0xff] %v186
        %v188 = vld [vmem:[%s142 + $0xb0] sm:$0xff]
        %189 = vst [vmem:[%s143 + $0xb0] sm:$0xff] %v188
        %v190 = vld [vmem:[%s142 + $0xb8] sm:$0xff]
        %191 = vst [vmem:[%s143 + $0xb8] sm:$0xff] %v190
        %v192 = vld [vmem:[%s142 + $0xc0] sm:$0xff]
        %193 = vst [vmem:[%s143 + $0xc0] sm:$0xff] %v192
        %v194 = vld [vmem:[%s142 + $0xc8] sm:$0xff]
        %195 = vst [vmem:[%s143 + $0xc8] sm:$0xff] %v194
        %v196 = vld [vmem:[%s142 + $0xd0] sm:$0xff]
        %197 = vst [vmem:[%s143 + $0xd0] sm:$0xff] %v196
      $region45: #{res_basic_block.3} parent=39 // loop_footer
        %s141 = sadd.s32 1, %s137
      $region46: #{res_basic_block.3} parent=39 // loop_footer_branch
        %136 = sbr.rel target = $region42
      $region47: #{res_basic_block.3} parent=39 // loop_exit
        _
    $region40: #{res_basic_block.3} parent=35 // pred_fallthru
      _
    // Predicated region
    $region48: #{res_basic_block.3} parent=35 // pred_check
      _
    $region49: #{res_basic_block.3} parent=35 // pred_check_branch
      %199 = sbr.rel target = $region51
    $region50: #{res_basic_block.3} parent=35 // pred_region
      _
    $region51: #{res_basic_block.3} parent=35 // pred_fallthru
      _
    // Predicated region
    $region52: #{res_basic_block.3} parent=35 // pred_check
      _
    $region53: #{res_basic_block.3} parent=35 // pred_check_branch
      %202 = sbr.rel (0) target = $region55
    $region54: #{res_basic_block.3} parent=35 // pred_region
      %203 = vsyncadd %s133, 3456
    $region55: #{res_basic_block.3} parent=35 // pred_fallthru
      _
  $region36: #{res_basic_block.3} parent=0 // pred_fallthru
    _
  %s204 = smul.u32 %s26, 384
  %s205 = smul.u32 %s34, 54
  %s206 = smul.addr %s205, 4
  %s207 = scalar_lea.vmem [#allocation2], %s206
  %s208 = scalar_lea.sflag [#allocation3], %s34
  %s209 = smul.u32 4, 54
  %s210 = smul.u32 %s209, 1
  %s211 = sshll.u32 %s210, 4
  %212 = dma.done %s208, %s211
  %v213 = vld [vmem:[%s207] sm:$0xf]
  %v214 = vld [vmem:[%s207 + $0x4] sm:$0xf]
  %v215 = vld [vmem:[%s207 + $0x8] sm:$0xf]
  %v216 = vld [vmem:[%s207 + $0xc] sm:$0xf]
  %v217 = vld [vmem:[%s207 + $0x10] sm:$0xf]
  %v218 = vld [vmem:[%s207 + $0x14] sm:$0xf]
  %v219 = vld [vmem:[%s207 + $0x18] sm:$0xf]
  %v220 = vld [vmem:[%s207 + $0x1c] sm:$0xf]
  %v221 = vld [vmem:[%s207 + $0x20] sm:$0xf]
  %v222 = vld [vmem:[%s207 + $0x24] sm:$0xf]
  %v223 = vld [vmem:[%s207 + $0x28] sm:$0xf]
  %v224 = vld [vmem:[%s207 + $0x2c] sm:$0xf]
  %v225 = vld [vmem:[%s207 + $0x30] sm:$0xf]
  %v226 = vld [vmem:[%s207 + $0x34] sm:$0xf]
  %v227 = vld [vmem:[%s207 + $0x38] sm:$0xf]
  %v228 = vld [vmem:[%s207 + $0x3c] sm:$0xf]
  %v229 = vld [vmem:[%s207 + $0x40] sm:$0xf]
  %v230 = vld [vmem:[%s207 + $0x44] sm:$0xf]
  %v231 = vld [vmem:[%s207 + $0x48] sm:$0xf]
  %v232 = vld [vmem:[%s207 + $0x4c] sm:$0xf]
  %v233 = vld [vmem:[%s207 + $0x50] sm:$0xf]
  %v234 = vld [vmem:[%s207 + $0x54] sm:$0xf]
  %v235 = vld [vmem:[%s207 + $0x58] sm:$0xf]
  %v236 = vld [vmem:[%s207 + $0x5c] sm:$0xf]
  %v237 = vld [vmem:[%s207 + $0x60] sm:$0xf]
  %v238 = vld [vmem:[%s207 + $0x64] sm:$0xf]
  %v239 = vld [vmem:[%s207 + $0x68] sm:$0xf]
  %v240 = vld [vmem:[%s207 + $0x6c] sm:$0xf]
  %v241 = vld [vmem:[%s207 + $0x70] sm:$0xf]
  %v242 = vld [vmem:[%s207 + $0x74] sm:$0xf]
  %v243 = vld [vmem:[%s207 + $0x78] sm:$0xf]
  %v244 = vld [vmem:[%s207 + $0x7c] sm:$0xf]
  %v245 = vld [vmem:[%s207 + $0x80] sm:$0xf]
  %v246 = vld [vmem:[%s207 + $0x84] sm:$0xf]
  %v247 = vld [vmem:[%s207 + $0x88] sm:$0xf]
  %v248 = vld [vmem:[%s207 + $0x8c] sm:$0xf]
  %v249 = vld [vmem:[%s207 + $0x90] sm:$0xf]
  %v250 = vld [vmem:[%s207 + $0x94] sm:$0xf]
  %v251 = vld [vmem:[%s207 + $0x98] sm:$0xf]
  %v252 = vld [vmem:[%s207 + $0x9c] sm:$0xf]
  %v253 = vld [vmem:[%s207 + $0xa0] sm:$0xf]
  %v254 = vld [vmem:[%s207 + $0xa4] sm:$0xf]
  %v255 = vld [vmem:[%s207 + $0xa8] sm:$0xf]
  %v256 = vld [vmem:[%s207 + $0xac] sm:$0xf]
  %v257 = vld [vmem:[%s207 + $0xb0] sm:$0xf]
  %v258 = vld [vmem:[%s207 + $0xb4] sm:$0xf]
  %v259 = vld [vmem:[%s207 + $0xb8] sm:$0xf]
  %v260 = vld [vmem:[%s207 + $0xbc] sm:$0xf]
  %v261 = vld [vmem:[%s207 + $0xc0] sm:$0xf]
  %v262 = vld [vmem:[%s207 + $0xc4] sm:$0xf]
  %v263 = vld [vmem:[%s207 + $0xc8] sm:$0xf]
  %v264 = vld [vmem:[%s207 + $0xcc] sm:$0xf]
  %v265 = vld [vmem:[%s207 + $0xd0] sm:$0xf]
  %v314 = vunpack.c.l.b16 %v213
  %v315 = vunpack.c.l.b16 %v214
  %v316 = vunpack.c.l.b16 %v215
  %v317 = vunpack.c.l.b16 %v216
  %v318 = vunpack.c.l.b16 %v217
  %v319 = vunpack.c.l.b16 %v218
  %v320 = vunpack.c.l.b16 %v219
  %v321 = vunpack.c.l.b16 %v220
  %v322 = vunpack.c.l.b16 %v221
  %v323 = vunpack.c.l.b16 %v222
  %v324 = vunpack.c.l.b16 %v223
  %v325 = vunpack.c.l.b16 %v224
  %v326 = vunpack.c.l.b16 %v225
  %v327 = vunpack.c.l.b16 %v226
  %v328 = vunpack.c.l.b16 %v227
  %v329 = vunpack.c.l.b16 %v228
  %v330 = vunpack.c.l.b16 %v229
  %v331 = vunpack.c.l.b16 %v230
  %v332 = vunpack.c.l.b16 %v231
  %v333 = vunpack.c.l.b16 %v232
  %v334 = vunpack.c.l.b16 %v233
  %v335 = vunpack.c.l.b16 %v234
  %v336 = vunpack.c.l.b16 %v235
  %v337 = vunpack.c.l.b16 %v236
  %v338 = vunpack.c.l.b16 %v237
  %v339 = vunpack.c.l.b16 %v238
  %v340 = vunpack.c.l.b16 %v239
  %v341 = vunpack.c.l.b16 %v240
  %v342 = vunpack.c.l.b16 %v241
  %v343 = vunpack.c.l.b16 %v242
  %v344 = vunpack.c.l.b16 %v243
  %v345 = vunpack.c.l.b16 %v244
  %v346 = vunpack.c.l.b16 %v245
  %v347 = vunpack.c.l.b16 %v246
  %v348 = vunpack.c.l.b16 %v247
  %v349 = vunpack.c.l.b16 %v248
  %v350 = vunpack.c.l.b16 %v249
  %v351 = vunpack.c.l.b16 %v250
  %v352 = vunpack.c.l.b16 %v251
  %v353 = vunpack.c.l.b16 %v252
  %v354 = vunpack.c.l.b16 %v253
  %v355 = vunpack.c.l.b16 %v254
  %v356 = vunpack.c.l.b16 %v255
  %v357 = vunpack.c.l.b16 %v256
  %v358 = vunpack.c.l.b16 %v257
  %v359 = vunpack.c.l.b16 %v258
  %v360 = vunpack.c.l.b16 %v259
  %v361 = vunpack.c.l.b16 %v260
  %v362 = vpack.c.b16 %v315, %v314
  %v363 = vpack.c.b16 %v317, %v316
  %v364 = vpack.c.b16 %v319, %v318
  %v365 = vpack.c.b16 %v321, %v320
  %v366 = vpack.c.b16 %v323, %v322
  %v367 = vpack.c.b16 %v325, %v324
  %v368 = vpack.c.b16 %v327, %v326
  %v369 = vpack.c.b16 %v329, %v328
  %v370 = vpack.c.b16 %v331, %v330
  %v371 = vpack.c.b16 %v333, %v332
  %v372 = vpack.c.b16 %v335, %v334
  %v373 = vpack.c.b16 %v337, %v336
  %v374 = vpack.c.b16 %v339, %v338
  %v375 = vpack.c.b16 %v341, %v340
  %v376 = vpack.c.b16 %v343, %v342
  %v377 = vpack.c.b16 %v345, %v344
  %v378 = vpack.c.b16 %v347, %v346
  %v379 = vpack.c.b16 %v349, %v348
  %v380 = vpack.c.b16 %v351, %v350
  %v381 = vpack.c.b16 %v353, %v352
  %v382 = vpack.c.b16 %v355, %v354
  %v383 = vpack.c.b16 %v357, %v356
  %v384 = vpack.c.b16 %v359, %v358
  %v385 = vpack.c.b16 %v361, %v360
  %v411 = vunpack.c.l.b16 %v261
  %v412 = vpack.c.b16 %v411, %v411
  %vm413 = vsmask.f32 7424
  %v415 = vshrl.u32 %v362, 16
  %v417 = vshll.u32 %v362, 16
  %v419 = vrot.slane %v417, 1
  %v420 = vor.u32 %v415, %v419
  %v422 = vshll.u32 %v363, 16
  %v424 = vrot.slane %v422, 1
  %v425 = vsel %vm413, %v420, %v424
  %v426 = vshrl.u32 %v363, 16
  %v428 = vor.u32 %v426, %v424
  %v430 = vshll.u32 %v364, 16
  %v432 = vrot.slane %v430, 1
  %v433 = vsel %vm413, %v428, %v432
  %v434 = vshrl.u32 %v364, 16
  %v436 = vor.u32 %v434, %v432
  %v438 = vshll.u32 %v365, 16
  %v440 = vrot.slane %v438, 1
  %v441 = vsel %vm413, %v436, %v440
  %v442 = vshrl.u32 %v365, 16
  %v444 = vor.u32 %v442, %v440
  %v446 = vshll.u32 %v366, 16
  %v448 = vrot.slane %v446, 1
  %v449 = vsel %vm413, %v444, %v448
  %v450 = vshrl.u32 %v366, 16
  %v452 = vor.u32 %v450, %v448
  %v454 = vshll.u32 %v367, 16
  %v456 = vrot.slane %v454, 1
  %v457 = vsel %vm413, %v452, %v456
  %v458 = vshrl.u32 %v367, 16
  %v460 = vor.u32 %v458, %v456
  %v462 = vshll.u32 %v368, 16
  %v464 = vrot.slane %v462, 1
  %v465 = vsel %vm413, %v460, %v464
  %v466 = vshrl.u32 %v368, 16
  %v468 = vor.u32 %v466, %v464
  %v470 = vshll.u32 %v369, 16
  %v472 = vrot.slane %v470, 1
  %v473 = vsel %vm413, %v468, %v472
  %v474 = vshrl.u32 %v369, 16
  %v476 = vor.u32 %v474, %v472
  %v478 = vshll.u32 %v370, 16
  %v480 = vrot.slane %v478, 1
  %v481 = vsel %vm413, %v476, %v480
  %v482 = vshrl.u32 %v370, 16
  %v484 = vor.u32 %v482, %v480
  %v486 = vshll.u32 %v371, 16
  %v488 = vrot.slane %v486, 1
  %v489 = vsel %vm413, %v484, %v488
  %v490 = vshrl.u32 %v371, 16
  %v492 = vor.u32 %v490, %v488
  %v494 = vshll.u32 %v372, 16
  %v496 = vrot.slane %v494, 1
  %v497 = vsel %vm413, %v492, %v496
  %v498 = vshrl.u32 %v372, 16
  %v500 = vor.u32 %v498, %v496
  %v502 = vshll.u32 %v373, 16
  %v504 = vrot.slane %v502, 1
  %v505 = vsel %vm413, %v500, %v504
  %v506 = vshrl.u32 %v373, 16
  %v508 = vor.u32 %v506, %v504
  %v510 = vshll.u32 %v374, 16
  %v512 = vrot.slane %v510, 1
  %v513 = vsel %vm413, %v508, %v512
  %v514 = vshrl.u32 %v374, 16
  %v516 = vor.u32 %v514, %v512
  %v518 = vshll.u32 %v375, 16
  %v520 = vrot.slane %v518, 1
  %v521 = vsel %vm413, %v516, %v520
  %v522 = vshrl.u32 %v375, 16
  %v524 = vor.u32 %v522, %v520
  %v526 = vshll.u32 %v376, 16
  %v528 = vrot.slane %v526, 1
  %v529 = vsel %vm413, %v524, %v528
  %v530 = vshrl.u32 %v376, 16
  %v532 = vor.u32 %v530, %v528
  %v534 = vshll.u32 %v377, 16
  %v536 = vrot.slane %v534, 1
  %v537 = vsel %vm413, %v532, %v536
  %v538 = vshrl.u32 %v377, 16
  %v540 = vor.u32 %v538, %v536
  %v542 = vshll.u32 %v378, 16
  %v544 = vrot.slane %v542, 1
  %v545 = vsel %vm413, %v540, %v544
  %v546 = vshrl.u32 %v378, 16
  %v548 = vor.u32 %v546, %v544
  %v550 = vshll.u32 %v379, 16
  %v552 = vrot.slane %v550, 1
  %v553 = vsel %vm413, %v548, %v552
  %v554 = vshrl.u32 %v379, 16
  %v556 = vor.u32 %v554, %v552
  %v558 = vshll.u32 %v380, 16
  %v560 = vrot.slane %v558, 1
  %v561 = vsel %vm413, %v556, %v560
  %v562 = vshrl.u32 %v380, 16
  %v564 = vor.u32 %v562, %v560
  %v566 = vshll.u32 %v381, 16
  %v568 = vrot.slane %v566, 1
  %v569 = vsel %vm413, %v564, %v568
  %v570 = vshrl.u32 %v381, 16
  %v572 = vor.u32 %v570, %v568
  %v574 = vshll.u32 %v382, 16
  %v576 = vrot.slane %v574, 1
  %v577 = vsel %vm413, %v572, %v576
  %v578 = vshrl.u32 %v382, 16
  %v580 = vor.u32 %v578, %v576
  %v582 = vshll.u32 %v383, 16
  %v584 = vrot.slane %v582, 1
  %v585 = vsel %vm413, %v580, %v584
  %v586 = vshrl.u32 %v383, 16
  %v588 = vor.u32 %v586, %v584
  %v590 = vshll.u32 %v384, 16
  %v592 = vrot.slane %v590, 1
  %v593 = vsel %vm413, %v588, %v592
  %v594 = vshrl.u32 %v384, 16
  %v596 = vor.u32 %v594, %v592
  %v598 = vshll.u32 %v385, 16
  %v600 = vrot.slane %v598, 1
  %v601 = vsel %vm413, %v596, %v600
  %v602 = vshrl.u32 %v385, 16
  %v604 = vor.u32 %v602, %v600
  %v606 = vshll.u32 %v412, 16
  %v608 = vrot.slane %v606, 1
  %v609 = vsel %vm413, %v604, %v608
  %vm634 = vcmask 1046528
  %v635 = vrot.slane %v362, 1
  %v636 = vrot.slane %v363, 1
  %v637 = vsel %vm634, %v635, %v636
  %v638 = vrot.slane %v364, 1
  %v639 = vsel %vm634, %v636, %v638
  %v640 = vrot.slane %v365, 1
  %v641 = vsel %vm634, %v638, %v640
  %v642 = vrot.slane %v366, 1
  %v643 = vsel %vm634, %v640, %v642
  %v644 = vrot.slane %v367, 1
  %v645 = vsel %vm634, %v642, %v644
  %v646 = vrot.slane %v368, 1
  %v647 = vsel %vm634, %v644, %v646
  %v648 = vrot.slane %v369, 1
  %v649 = vsel %vm634, %v646, %v648
  %v650 = vrot.slane %v370, 1
  %v651 = vsel %vm634, %v648, %v650
  %v652 = vrot.slane %v371, 1
  %v653 = vsel %vm634, %v650, %v652
  %v654 = vrot.slane %v372, 1
  %v655 = vsel %vm634, %v652, %v654
  %v656 = vrot.slane %v373, 1
  %v657 = vsel %vm634, %v654, %v656
  %v658 = vrot.slane %v374, 1
  %v659 = vsel %vm634, %v656, %v658
  %v660 = vrot.slane %v375, 1
  %v661 = vsel %vm634, %v658, %v660
  %v662 = vrot.slane %v376, 1
  %v663 = vsel %vm634, %v660, %v662
  %v664 = vrot.slane %v377, 1
  %v665 = vsel %vm634, %v662, %v664
  %v666 = vrot.slane %v378, 1
  %v667 = vsel %vm634, %v664, %v666
  %v668 = vrot.slane %v379, 1
  %v669 = vsel %vm634, %v666, %v668
  %v670 = vrot.slane %v380, 1
  %v671 = vsel %vm634, %v668, %v670
  %v672 = vrot.slane %v381, 1
  %v673 = vsel %vm634, %v670, %v672
  %v674 = vrot.slane %v382, 1
  %v675 = vsel %vm634, %v672, %v674
  %v676 = vrot.slane %v383, 1
  %v677 = vsel %vm634, %v674, %v676
  %v678 = vrot.slane %v384, 1
  %v679 = vsel %vm634, %v676, %v678
  %v680 = vrot.slane %v385, 1
  %v681 = vsel %vm634, %v678, %v680
  %v682 = vrot.slane %v412, 1
  %v683 = vsel %vm634, %v680, %v682
  %v708 = vld [vmem:[%s1] sm:$0xf]
  %v709 = vld [vmem:[%s1 + $0x4] sm:$0xf]
  %v710 = vld [vmem:[%s1 + $0x8] sm:$0xf]
  %v711 = vld [vmem:[%s1 + $0xc] sm:$0xf]
  %v712 = vld [vmem:[%s1 + $0x10] sm:$0xf]
  %v713 = vld [vmem:[%s1 + $0x14] sm:$0xf]
  %v714 = vld [vmem:[%s1 + $0x18] sm:$0xf]
  %v715 = vld [vmem:[%s1 + $0x1c] sm:$0xf]
  %v716 = vld [vmem:[%s1 + $0x20] sm:$0xf]
  %v717 = vld [vmem:[%s1 + $0x24] sm:$0xf]
  %v718 = vld [vmem:[%s1 + $0x28] sm:$0xf]
  %v719 = vld [vmem:[%s1 + $0x2c] sm:$0xf]
  %v720 = vld [vmem:[%s1 + $0x30] sm:$0xf]
  %v721 = vld [vmem:[%s1 + $0x34] sm:$0xf]
  %v722 = vld [vmem:[%s1 + $0x38] sm:$0xf]
  %v723 = vld [vmem:[%s1 + $0x3c] sm:$0xf]
  %v724 = vld [vmem:[%s1 + $0x40] sm:$0xf]
  %v725 = vld [vmem:[%s1 + $0x44] sm:$0xf]
  %v726 = vld [vmem:[%s1 + $0x48] sm:$0xf]
  %v727 = vld [vmem:[%s1 + $0x4c] sm:$0xf]
  %v728 = vld [vmem:[%s1 + $0x50] sm:$0xf]
  %v729 = vld [vmem:[%s1 + $0x54] sm:$0xf]
  %v730 = vld [vmem:[%s1 + $0x58] sm:$0xf]
  %v731 = vld [vmem:[%s1 + $0x5c] sm:$0xf]
  %v732 = vld [vmem:[%s1 + $0x60] sm:$0xf]
  %v733 = vld [vmem:[%s1 + $0x64] sm:$0xf]
  %v734 = vld [vmem:[%s1 + $0x68] sm:$0xf]
  %v735 = vld [vmem:[%s1 + $0x6c] sm:$0xf]
  %v736 = vld [vmem:[%s1 + $0x70] sm:$0xf]
  %v737 = vld [vmem:[%s1 + $0x74] sm:$0xf]
  %v738 = vld [vmem:[%s1 + $0x78] sm:$0xf]
  %v739 = vld [vmem:[%s1 + $0x7c] sm:$0xf]
  %v740 = vld [vmem:[%s1 + $0x80] sm:$0xf]
  %v741 = vld [vmem:[%s1 + $0x84] sm:$0xf]
  %v742 = vld [vmem:[%s1 + $0x88] sm:$0xf]
  %v743 = vld [vmem:[%s1 + $0x8c] sm:$0xf]
  %v744 = vld [vmem:[%s1 + $0x90] sm:$0xf]
  %v745 = vld [vmem:[%s1 + $0x94] sm:$0xf]
  %v746 = vld [vmem:[%s1 + $0x98] sm:$0xf]
  %v747 = vld [vmem:[%s1 + $0x9c] sm:$0xf]
  %v748 = vld [vmem:[%s1 + $0xa0] sm:$0xf]
  %v749 = vld [vmem:[%s1 + $0xa4] sm:$0xf]
  %v750 = vld [vmem:[%s1 + $0xa8] sm:$0xf]
  %v751 = vld [vmem:[%s1 + $0xac] sm:$0xf]
  %v752 = vld [vmem:[%s1 + $0xb0] sm:$0xf]
  %v753 = vld [vmem:[%s1 + $0xb4] sm:$0xf]
  %v754 = vld [vmem:[%s1 + $0xb8] sm:$0xf]
  %v755 = vld [vmem:[%s1 + $0xbc] sm:$0xf]
  %v757 = vunpack.c.l.b16 %v262
  %v758 = vpack.c.b16 %v757, %v411
  %v761 = vunpack.c.l.b16 %v263
  %v762 = vpack.c.b16 %v761, %v761
  %v764 = vshll.u32 %v758, 16
  %v766 = vrot.slane %v764, 1
  %v767 = vsel %vm413, %v604, %v766
  %v768 = vshrl.u32 %v758, 16
  %v770 = vor.u32 %v768, %v766
  %v772 = vshll.u32 %v762, 16
  %v774 = vrot.slane %v772, 1
  %v775 = vsel %vm413, %v770, %v774
  %v778 = vrot.slane %v758, 1
  %v779 = vsel %vm634, %v680, %v778
  %v780 = vrot.slane %v762, 1
  %v781 = vsel %vm634, %v778, %v780
  %s784 = scalar_lea.vmem %s1, 192
  %v785 = vld [vmem:[%s784] sm:$0xf]
  %v786 = vld [vmem:[%s784 + $0x4] sm:$0xf]
  %v787 = vld [vmem:[%s784 + $0x8] sm:$0xf]
  %v788 = vld [vmem:[%s784 + $0xc] sm:$0xf]
  %v789 = vld [vmem:[%s784 + $0x10] sm:$0xf]
  %v790 = vld [vmem:[%s784 + $0x14] sm:$0xf]
  %v791 = vld [vmem:[%s784 + $0x18] sm:$0xf]
  %v792 = vld [vmem:[%s784 + $0x1c] sm:$0xf]
  %v793 = vld [vmem:[%s784 + $0x20] sm:$0xf]
  %v794 = vld [vmem:[%s784 + $0x24] sm:$0xf]
  %v795 = vld [vmem:[%s784 + $0x28] sm:$0xf]
  %v796 = vld [vmem:[%s784 + $0x2c] sm:$0xf]
  %v797 = vld [vmem:[%s784 + $0x30] sm:$0xf]
  %v798 = vld [vmem:[%s784 + $0x34] sm:$0xf]
  %v799 = vld [vmem:[%s784 + $0x38] sm:$0xf]
  %v800 = vld [vmem:[%s784 + $0x3c] sm:$0xf]
  %v801 = vld [vmem:[%s784 + $0x40] sm:$0xf]
  %v802 = vld [vmem:[%s784 + $0x44] sm:$0xf]
  %v803 = vld [vmem:[%s784 + $0x48] sm:$0xf]
  %v804 = vld [vmem:[%s784 + $0x4c] sm:$0xf]
  %v805 = vld [vmem:[%s784 + $0x50] sm:$0xf]
  %v806 = vld [vmem:[%s784 + $0x54] sm:$0xf]
  %v807 = vld [vmem:[%s784 + $0x58] sm:$0xf]
  %v808 = vld [vmem:[%s784 + $0x5c] sm:$0xf]
  %v809 = vld [vmem:[%s784 + $0x60] sm:$0xf]
  %v810 = vld [vmem:[%s784 + $0x64] sm:$0xf]
  %v811 = vld [vmem:[%s784 + $0x68] sm:$0xf]
  %v812 = vld [vmem:[%s784 + $0x6c] sm:$0xf]
  %v813 = vld [vmem:[%s784 + $0x70] sm:$0xf]
  %v814 = vld [vmem:[%s784 + $0x74] sm:$0xf]
  %v815 = vld [vmem:[%s784 + $0x78] sm:$0xf]
  %v816 = vld [vmem:[%s784 + $0x7c] sm:$0xf]
  %v817 = vld [vmem:[%s784 + $0x80] sm:$0xf]
  %v818 = vld [vmem:[%s784 + $0x84] sm:$0xf]
  %v819 = vld [vmem:[%s784 + $0x88] sm:$0xf]
  %v820 = vld [vmem:[%s784 + $0x8c] sm:$0xf]
  %v821 = vld [vmem:[%s784 + $0x90] sm:$0xf]
  %v822 = vld [vmem:[%s784 + $0x94] sm:$0xf]
  %v823 = vld [vmem:[%s784 + $0x98] sm:$0xf]
  %v824 = vld [vmem:[%s784 + $0x9c] sm:$0xf]
  %v825 = vld [vmem:[%s784 + $0xa0] sm:$0xf]
  %v826 = vld [vmem:[%s784 + $0xa4] sm:$0xf]
  %v827 = vld [vmem:[%s784 + $0xa8] sm:$0xf]
  %v828 = vld [vmem:[%s784 + $0xac] sm:$0xf]
  %v829 = vld [vmem:[%s784 + $0xb0] sm:$0xf]
  %v830 = vld [vmem:[%s784 + $0xb4] sm:$0xf]
  %v831 = vld [vmem:[%s784 + $0xb8] sm:$0xf]
  %v832 = vld [vmem:[%s784 + $0xbc] sm:$0xf]
  %v881 = vunpack.c.l.b16 %v785
  %v882 = vunpack.c.l.b16 %v786
  %v883 = vunpack.c.l.b16 %v787
  %v884 = vunpack.c.l.b16 %v788
  %v885 = vunpack.c.l.b16 %v789
  %v886 = vunpack.c.l.b16 %v790
  %v887 = vunpack.c.l.b16 %v791
  %v888 = vunpack.c.l.b16 %v792
  %v889 = vunpack.c.l.b16 %v793
  %v890 = vunpack.c.l.b16 %v794
  %v891 = vunpack.c.l.b16 %v795
  %v892 = vunpack.c.l.b16 %v796
  %v893 = vunpack.c.l.b16 %v797
  %v894 = vunpack.c.l.b16 %v798
  %v895 = vunpack.c.l.b16 %v799
  %v896 = vunpack.c.l.b16 %v800
  %v897 = vunpack.c.l.b16 %v801
  %v898 = vunpack.c.l.b16 %v802
  %v899 = vunpack.c.l.b16 %v803
  %v900 = vunpack.c.l.b16 %v804
  %v901 = vunpack.c.l.b16 %v805
  %v902 = vunpack.c.l.b16 %v806
  %v903 = vunpack.c.l.b16 %v807
  %v904 = vunpack.c.l.b16 %v808
  %v905 = vunpack.c.l.b16 %v809
  %v906 = vunpack.c.l.b16 %v810
  %v907 = vunpack.c.l.b16 %v811
  %v908 = vunpack.c.l.b16 %v812
  %v909 = vunpack.c.l.b16 %v813
  %v910 = vunpack.c.l.b16 %v814
  %v911 = vunpack.c.l.b16 %v815
  %v912 = vunpack.c.l.b16 %v816
  %v913 = vunpack.c.l.b16 %v817
  %v914 = vunpack.c.l.b16 %v818
  %v915 = vunpack.c.l.b16 %v819
  %v916 = vunpack.c.l.b16 %v820
  %v917 = vunpack.c.l.b16 %v821
  %v918 = vunpack.c.l.b16 %v822
  %v919 = vunpack.c.l.b16 %v823
  %v920 = vunpack.c.l.b16 %v824
  %v921 = vunpack.c.l.b16 %v825
  %v922 = vunpack.c.l.b16 %v826
  %v923 = vunpack.c.l.b16 %v827
  %v924 = vunpack.c.l.b16 %v828
  %v925 = vunpack.c.l.b16 %v829
  %v926 = vunpack.c.l.b16 %v830
  %v927 = vunpack.c.l.b16 %v831
  %v928 = vunpack.c.l.b16 %v832
  %v929 = vpack.c.b16 %v882, %v881
  %v930 = vpack.c.b16 %v884, %v883
  %v931 = vpack.c.b16 %v886, %v885
  %v932 = vpack.c.b16 %v888, %v887
  %v933 = vpack.c.b16 %v890, %v889
  %v934 = vpack.c.b16 %v892, %v891
  %v935 = vpack.c.b16 %v894, %v893
  %v936 = vpack.c.b16 %v896, %v895
  %v937 = vpack.c.b16 %v898, %v897
  %v938 = vpack.c.b16 %v900, %v899
  %v939 = vpack.c.b16 %v902, %v901
  %v940 = vpack.c.b16 %v904, %v903
  %v941 = vpack.c.b16 %v906, %v905
  %v942 = vpack.c.b16 %v908, %v907
  %v943 = vpack.c.b16 %v910, %v909
  %v944 = vpack.c.b16 %v912, %v911
  %v945 = vpack.c.b16 %v914, %v913
  %v946 = vpack.c.b16 %v916, %v915
  %v947 = vpack.c.b16 %v918, %v917
  %v948 = vpack.c.b16 %v920, %v919
  %v949 = vpack.c.b16 %v922, %v921
  %v950 = vpack.c.b16 %v924, %v923
  %v951 = vpack.c.b16 %v926, %v925
  %v952 = vpack.c.b16 %v928, %v927
  %977 = vmatpush.bf16.msra.mxu0 %v936
  %978 = vmatpush.bf16.msra.mxu0 %v935
  %979 = vmatpush.bf16.msra.mxu0 %v934
  %980 = vmatpush.bf16.msra.mxu0 %v933
  %981 = vmatpush.bf16.msra.mxu0 %v932
  %982 = vmatpush.bf16.msra.mxu0 %v931
  %983 = vmatpush.bf16.msra.mxu0 %v930
  %984 = vmatpush.bf16.msra.mxu0 %v929
  %985 = vmatmul.bf16.gmra.mxu0 %v363
  %v986 = vpop.f32.mrf.mxu0
  %v987 = vadd.f32 0.0, %v986
  %v988 = vpop.f32.mrf.mxu0
  %v989 = vadd.f32 0.0, %v988
  %990 = vmatmul.bf16.gmra.mxu0 %v364
  %v991 = vpop.f32.mrf.mxu0
  %v992 = vadd.f32 0.0, %v991
  %v993 = vpop.f32.mrf.mxu0
  %v994 = vadd.f32 0.0, %v993
  %995 = vmatmul.bf16.gmra.mxu0 %v365
  %v996 = vpop.f32.mrf.mxu0
  %v997 = vadd.f32 0.0, %v996
  %v998 = vpop.f32.mrf.mxu0
  %v999 = vadd.f32 0.0, %v998
  %1000 = vmatmul.bf16.gmra.mxu0 %v366
  %v1001 = vpop.f32.mrf.mxu0
  %v1002 = vadd.f32 0.0, %v1001
  %v1003 = vpop.f32.mrf.mxu0
  %v1004 = vadd.f32 0.0, %v1003
  %1005 = vmatmul.bf16.gmra.mxu0 %v367
  %v1006 = vpop.f32.mrf.mxu0
  %v1007 = vadd.f32 0.0, %v1006
  %v1008 = vpop.f32.mrf.mxu0
  %v1009 = vadd.f32 0.0, %v1008
  %1010 = vmatmul.bf16.gmra.mxu0 %v368
  %v1011 = vpop.f32.mrf.mxu0
  %v1012 = vadd.f32 0.0, %v1011
  %v1013 = vpop.f32.mrf.mxu0
  %v1014 = vadd.f32 0.0, %v1013
  %1015 = vmatmul.bf16.gmra.mxu0 %v369
  %v1016 = vpop.f32.mrf.mxu0
  %v1017 = vadd.f32 0.0, %v1016
  %v1018 = vpop.f32.mrf.mxu0
  %v1019 = vadd.f32 0.0, %v1018
  %1020 = vmatmul.bf16.gmra.mxu0 %v370
  %v1021 = vpop.f32.mrf.mxu0
  %v1022 = vadd.f32 0.0, %v1021
  %v1023 = vpop.f32.mrf.mxu0
  %v1024 = vadd.f32 0.0, %v1023
  %1025 = vmatmul.bf16.gmra.mxu0 %v371
  %v1026 = vpop.f32.mrf.mxu0
  %v1027 = vadd.f32 0.0, %v1026
  %v1028 = vpop.f32.mrf.mxu0
  %v1029 = vadd.f32 0.0, %v1028
  %1030 = vmatmul.bf16.gmra.mxu0 %v372
  %v1031 = vpop.f32.mrf.mxu0
  %v1032 = vadd.f32 0.0, %v1031
  %v1033 = vpop.f32.mrf.mxu0
  %v1034 = vadd.f32 0.0, %v1033
  %1035 = vmatmul.bf16.gmra.mxu0 %v373
  %v1036 = vpop.f32.mrf.mxu0
  %v1037 = vadd.f32 0.0, %v1036
  %v1038 = vpop.f32.mrf.mxu0
  %v1039 = vadd.f32 0.0, %v1038
  %1040 = vmatmul.bf16.gmra.mxu0 %v374
  %v1041 = vpop.f32.mrf.mxu0
  %v1042 = vadd.f32 0.0, %v1041
  %v1043 = vpop.f32.mrf.mxu0
  %v1044 = vadd.f32 0.0, %v1043
  %1045 = vmatmul.bf16.gmra.mxu0 %v375
  %v1046 = vpop.f32.mrf.mxu0
  %v1047 = vadd.f32 0.0, %v1046
  %v1048 = vpop.f32.mrf.mxu0
  %v1049 = vadd.f32 0.0, %v1048
  %1050 = vmatmul.bf16.gmra.mxu0 %v376
  %v1051 = vpop.f32.mrf.mxu0
  %v1052 = vadd.f32 0.0, %v1051
  %v1053 = vpop.f32.mrf.mxu0
  %v1054 = vadd.f32 0.0, %v1053
  %1055 = vmatmul.bf16.gmra.mxu0 %v377
  %v1056 = vpop.f32.mrf.mxu0
  %v1057 = vadd.f32 0.0, %v1056
  %v1058 = vpop.f32.mrf.mxu0
  %v1059 = vadd.f32 0.0, %v1058
  %1060 = vmatmul.bf16.gmra.mxu0 %v378
  %v1061 = vpop.f32.mrf.mxu0
  %v1062 = vadd.f32 0.0, %v1061
  %v1063 = vpop.f32.mrf.mxu0
  %v1064 = vadd.f32 0.0, %v1063
  %1065 = vmatmul.bf16.gmra.mxu0 %v379
  %v1066 = vpop.f32.mrf.mxu0
  %v1067 = vadd.f32 0.0, %v1066
  %v1068 = vpop.f32.mrf.mxu0
  %v1069 = vadd.f32 0.0, %v1068
  %1070 = vmatmul.bf16.gmra.mxu0 %v380
  %v1071 = vpop.f32.mrf.mxu0
  %v1072 = vadd.f32 0.0, %v1071
  %v1073 = vpop.f32.mrf.mxu0
  %v1074 = vadd.f32 0.0, %v1073
  %1075 = vmatmul.bf16.gmra.mxu0 %v381
  %v1076 = vpop.f32.mrf.mxu0
  %v1077 = vadd.f32 0.0, %v1076
  %v1078 = vpop.f32.mrf.mxu0
  %v1079 = vadd.f32 0.0, %v1078
  %1080 = vmatmul.bf16.gmra.mxu0 %v382
  %v1081 = vpop.f32.mrf.mxu0
  %v1082 = vadd.f32 0.0, %v1081
  %v1083 = vpop.f32.mrf.mxu0
  %v1084 = vadd.f32 0.0, %v1083
  %1085 = vmatmul.bf16.gmra.mxu0 %v383
  %v1086 = vpop.f32.mrf.mxu0
  %v1087 = vadd.f32 0.0, %v1086
  %v1088 = vpop.f32.mrf.mxu0
  %v1089 = vadd.f32 0.0, %v1088
  %1090 = vmatmul.bf16.gmra.mxu0 %v384
  %v1091 = vpop.f32.mrf.mxu0
  %v1092 = vadd.f32 0.0, %v1091
  %v1093 = vpop.f32.mrf.mxu0
  %v1094 = vadd.f32 0.0, %v1093
  %1095 = vmatmul.bf16.gmra.mxu0 %v385
  %v1096 = vpop.f32.mrf.mxu0
  %v1097 = vadd.f32 0.0, %v1096
  %v1098 = vpop.f32.mrf.mxu0
  %v1099 = vadd.f32 0.0, %v1098
  %1100 = vmatmul.bf16.gmra.mxu0 %v758
  %v1101 = vpop.f32.mrf.mxu0
  %v1102 = vadd.f32 0.0, %v1101
  %v1103 = vpop.f32.mrf.mxu0
  %v1104 = vadd.f32 0.0, %v1103
  %1105 = vdwg.mxu0
  %1106 = vmatpush.bf16.msra.mxu0 %v944
  %1107 = vmatpush.bf16.msra.mxu0 %v943
  %1108 = vmatpush.bf16.msra.mxu0 %v942
  %1109 = vmatpush.bf16.msra.mxu0 %v941
  %1110 = vmatpush.bf16.msra.mxu0 %v940
  %1111 = vmatpush.bf16.msra.mxu0 %v939
  %1112 = vmatpush.bf16.msra.mxu0 %v938
  %1113 = vmatpush.bf16.msra.mxu0 %v937
  %1114 = vmatmul.bf16.gmra.mxu0 %v433
  %v1115 = vpop.f32.mrf.mxu0
  %v1116 = vadd.f32 %v987, %v1115
  %v1117 = vpop.f32.mrf.mxu0
  %v1118 = vadd.f32 %v989, %v1117
  %1119 = vmatmul.bf16.gmra.mxu0 %v441
  %v1120 = vpop.f32.mrf.mxu0
  %v1121 = vadd.f32 %v992, %v1120
  %v1122 = vpop.f32.mrf.mxu0
  %v1123 = vadd.f32 %v994, %v1122
  %1124 = vmatmul.bf16.gmra.mxu0 %v449
  %v1125 = vpop.f32.mrf.mxu0
  %v1126 = vadd.f32 %v997, %v1125
  %v1127 = vpop.f32.mrf.mxu0
  %v1128 = vadd.f32 %v999, %v1127
  %1129 = vmatmul.bf16.gmra.mxu0 %v457
  %v1130 = vpop.f32.mrf.mxu0
  %v1131 = vadd.f32 %v1002, %v1130
  %v1132 = vpop.f32.mrf.mxu0
  %v1133 = vadd.f32 %v1004, %v1132
  %1134 = vmatmul.bf16.gmra.mxu0 %v465
  %v1135 = vpop.f32.mrf.mxu0
  %v1136 = vadd.f32 %v1007, %v1135
  %v1137 = vpop.f32.mrf.mxu0
  %v1138 = vadd.f32 %v1009, %v1137
  %1139 = vmatmul.bf16.gmra.mxu0 %v473
  %v1140 = vpop.f32.mrf.mxu0
  %v1141 = vadd.f32 %v1012, %v1140
  %v1142 = vpop.f32.mrf.mxu0
  %v1143 = vadd.f32 %v1014, %v1142
  %1144 = vmatmul.bf16.gmra.mxu0 %v481
  %v1145 = vpop.f32.mrf.mxu0
  %v1146 = vadd.f32 %v1017, %v1145
  %v1147 = vpop.f32.mrf.mxu0
  %v1148 = vadd.f32 %v1019, %v1147
  %1149 = vmatmul.bf16.gmra.mxu0 %v489
  %v1150 = vpop.f32.mrf.mxu0
  %v1151 = vadd.f32 %v1022, %v1150
  %v1152 = vpop.f32.mrf.mxu0
  %v1153 = vadd.f32 %v1024, %v1152
  %1154 = vmatmul.bf16.gmra.mxu0 %v497
  %v1155 = vpop.f32.mrf.mxu0
  %v1156 = vadd.f32 %v1027, %v1155
  %v1157 = vpop.f32.mrf.mxu0
  %v1158 = vadd.f32 %v1029, %v1157
  %1159 = vmatmul.bf16.gmra.mxu0 %v505
  %v1160 = vpop.f32.mrf.mxu0
  %v1161 = vadd.f32 %v1032, %v1160
  %v1162 = vpop.f32.mrf.mxu0
  %v1163 = vadd.f32 %v1034, %v1162
  %1164 = vmatmul.bf16.gmra.mxu0 %v513
  %v1165 = vpop.f32.mrf.mxu0
  %v1166 = vadd.f32 %v1037, %v1165
  %v1167 = vpop.f32.mrf.mxu0
  %v1168 = vadd.f32 %v1039, %v1167
  %1169 = vmatmul.bf16.gmra.mxu0 %v521
  %v1170 = vpop.f32.mrf.mxu0
  %v1171 = vadd.f32 %v1042, %v1170
  %v1172 = vpop.f32.mrf.mxu0
  %v1173 = vadd.f32 %v1044, %v1172
  %1174 = vmatmul.bf16.gmra.mxu0 %v529
  %v1175 = vpop.f32.mrf.mxu0
  %v1176 = vadd.f32 %v1047, %v1175
  %v1177 = vpop.f32.mrf.mxu0
  %v1178 = vadd.f32 %v1049, %v1177
  %1179 = vmatmul.bf16.gmra.mxu0 %v537
  %v1180 = vpop.f32.mrf.mxu0
  %v1181 = vadd.f32 %v1052, %v1180
  %v1182 = vpop.f32.mrf.mxu0
  %v1183 = vadd.f32 %v1054, %v1182
  %1184 = vmatmul.bf16.gmra.mxu0 %v545
  %v1185 = vpop.f32.mrf.mxu0
  %v1186 = vadd.f32 %v1057, %v1185
  %v1187 = vpop.f32.mrf.mxu0
  %v1188 = vadd.f32 %v1059, %v1187
  %1189 = vmatmul.bf16.gmra.mxu0 %v553
  %v1190 = vpop.f32.mrf.mxu0
  %v1191 = vadd.f32 %v1062, %v1190
  %v1192 = vpop.f32.mrf.mxu0
  %v1193 = vadd.f32 %v1064, %v1192
  %1194 = vmatmul.bf16.gmra.mxu0 %v561
  %v1195 = vpop.f32.mrf.mxu0
  %v1196 = vadd.f32 %v1067, %v1195
  %v1197 = vpop.f32.mrf.mxu0
  %v1198 = vadd.f32 %v1069, %v1197
  %1199 = vmatmul.bf16.gmra.mxu0 %v569
  %v1200 = vpop.f32.mrf.mxu0
  %v1201 = vadd.f32 %v1072, %v1200
  %v1202 = vpop.f32.mrf.mxu0
  %v1203 = vadd.f32 %v1074, %v1202
  %1204 = vmatmul.bf16.gmra.mxu0 %v577
  %v1205 = vpop.f32.mrf.mxu0
  %v1206 = vadd.f32 %v1077, %v1205
  %v1207 = vpop.f32.mrf.mxu0
  %v1208 = vadd.f32 %v1079, %v1207
  %1209 = vmatmul.bf16.gmra.mxu0 %v585
  %v1210 = vpop.f32.mrf.mxu0
  %v1211 = vadd.f32 %v1082, %v1210
  %v1212 = vpop.f32.mrf.mxu0
  %v1213 = vadd.f32 %v1084, %v1212
  %1214 = vmatmul.bf16.gmra.mxu0 %v593
  %v1215 = vpop.f32.mrf.mxu0
  %v1216 = vadd.f32 %v1087, %v1215
  %v1217 = vpop.f32.mrf.mxu0
  %v1218 = vadd.f32 %v1089, %v1217
  %1219 = vmatmul.bf16.gmra.mxu0 %v601
  %v1220 = vpop.f32.mrf.mxu0
  %v1221 = vadd.f32 %v1092, %v1220
  %v1222 = vpop.f32.mrf.mxu0
  %v1223 = vadd.f32 %v1094, %v1222
  %1224 = vmatmul.bf16.gmra.mxu0 %v767
  %v1225 = vpop.f32.mrf.mxu0
  %v1226 = vadd.f32 %v1097, %v1225
  %v1227 = vpop.f32.mrf.mxu0
  %v1228 = vadd.f32 %v1099, %v1227
  %1229 = vmatmul.bf16.gmra.mxu0 %v775
  %v1230 = vpop.f32.mrf.mxu0
  %v1231 = vadd.f32 %v1102, %v1230
  %v1232 = vpop.f32.mrf.mxu0
  %v1233 = vadd.f32 %v1104, %v1232
  %1234 = vdwg.mxu0
  %1235 = vmatpush.bf16.msra.mxu0 %v952
  %1236 = vmatpush.bf16.msra.mxu0 %v951
  %1237 = vmatpush.bf16.msra.mxu0 %v950
  %1238 = vmatpush.bf16.msra.mxu0 %v949
  %1239 = vmatpush.bf16.msra.mxu0 %v948
  %1240 = vmatpush.bf16.msra.mxu0 %v947
  %1241 = vmatpush.bf16.msra.mxu0 %v946
  %1242 = vmatpush.bf16.msra.mxu0 %v945
  %1243 = vmatmul.bf16.gmra.mxu0 %v639
  %v1244 = vpop.f32.mrf.mxu0
  %v1245 = vadd.f32 %v1116, %v1244
  %v1246 = vpop.f32.mrf.mxu0
  %v1247 = vadd.f32 %v1118, %v1246
  %1248 = vmatmul.bf16.gmra.mxu0 %v641
  %v1249 = vpop.f32.mrf.mxu0
  %v1250 = vadd.f32 %v1121, %v1249
  %v1251 = vpop.f32.mrf.mxu0
  %v1252 = vadd.f32 %v1123, %v1251
  %1253 = vmatmul.bf16.gmra.mxu0 %v643
  %v1254 = vpop.f32.mrf.mxu0
  %v1255 = vadd.f32 %v1126, %v1254
  %v1256 = vpop.f32.mrf.mxu0
  %v1257 = vadd.f32 %v1128, %v1256
  %1258 = vmatmul.bf16.gmra.mxu0 %v645
  %v1259 = vpop.f32.mrf.mxu0
  %v1260 = vadd.f32 %v1131, %v1259
  %v1261 = vpop.f32.mrf.mxu0
  %v1262 = vadd.f32 %v1133, %v1261
  %1263 = vmatmul.bf16.gmra.mxu0 %v647
  %v1264 = vpop.f32.mrf.mxu0
  %v1265 = vadd.f32 %v1136, %v1264
  %v1266 = vpop.f32.mrf.mxu0
  %v1267 = vadd.f32 %v1138, %v1266
  %1268 = vmatmul.bf16.gmra.mxu0 %v649
  %v1269 = vpop.f32.mrf.mxu0
  %v1270 = vadd.f32 %v1141, %v1269
  %v1271 = vpop.f32.mrf.mxu0
  %v1272 = vadd.f32 %v1143, %v1271
  %1273 = vmatmul.bf16.gmra.mxu0 %v651
  %v1274 = vpop.f32.mrf.mxu0
  %v1275 = vadd.f32 %v1146, %v1274
  %v1276 = vpop.f32.mrf.mxu0
  %v1277 = vadd.f32 %v1148, %v1276
  %1278 = vmatmul.bf16.gmra.mxu0 %v653
  %v1279 = vpop.f32.mrf.mxu0
  %v1280 = vadd.f32 %v1151, %v1279
  %v1281 = vpop.f32.mrf.mxu0
  %v1282 = vadd.f32 %v1153, %v1281
  %1283 = vmatmul.bf16.gmra.mxu0 %v655
  %v1284 = vpop.f32.mrf.mxu0
  %v1285 = vadd.f32 %v1156, %v1284
  %v1286 = vpop.f32.mrf.mxu0
  %v1287 = vadd.f32 %v1158, %v1286
  %1288 = vmatmul.bf16.gmra.mxu0 %v657
  %v1289 = vpop.f32.mrf.mxu0
  %v1290 = vadd.f32 %v1161, %v1289
  %v1291 = vpop.f32.mrf.mxu0
  %v1292 = vadd.f32 %v1163, %v1291
  %1293 = vmatmul.bf16.gmra.mxu0 %v659
  %v1294 = vpop.f32.mrf.mxu0
  %v1295 = vadd.f32 %v1166, %v1294
  %v1296 = vpop.f32.mrf.mxu0
  %v1297 = vadd.f32 %v1168, %v1296
  %1298 = vmatmul.bf16.gmra.mxu0 %v661
  %v1299 = vpop.f32.mrf.mxu0
  %v1300 = vadd.f32 %v1171, %v1299
  %v1301 = vpop.f32.mrf.mxu0
  %v1302 = vadd.f32 %v1173, %v1301
  %1303 = vmatmul.bf16.gmra.mxu0 %v663
  %v1304 = vpop.f32.mrf.mxu0
  %v1305 = vadd.f32 %v1176, %v1304
  %v1306 = vpop.f32.mrf.mxu0
  %v1307 = vadd.f32 %v1178, %v1306
  %1308 = vmatmul.bf16.gmra.mxu0 %v665
  %v1309 = vpop.f32.mrf.mxu0
  %v1310 = vadd.f32 %v1181, %v1309
  %v1311 = vpop.f32.mrf.mxu0
  %v1312 = vadd.f32 %v1183, %v1311
  %1313 = vmatmul.bf16.gmra.mxu0 %v667
  %v1314 = vpop.f32.mrf.mxu0
  %v1315 = vadd.f32 %v1186, %v1314
  %v1316 = vpop.f32.mrf.mxu0
  %v1317 = vadd.f32 %v1188, %v1316
  %1318 = vmatmul.bf16.gmra.mxu0 %v669
  %v1319 = vpop.f32.mrf.mxu0
  %v1320 = vadd.f32 %v1191, %v1319
  %v1321 = vpop.f32.mrf.mxu0
  %v1322 = vadd.f32 %v1193, %v1321
  %1323 = vmatmul.bf16.gmra.mxu0 %v671
  %v1324 = vpop.f32.mrf.mxu0
  %v1325 = vadd.f32 %v1196, %v1324
  %v1326 = vpop.f32.mrf.mxu0
  %v1327 = vadd.f32 %v1198, %v1326
  %1328 = vmatmul.bf16.gmra.mxu0 %v673
  %v1329 = vpop.f32.mrf.mxu0
  %v1330 = vadd.f32 %v1201, %v1329
  %v1331 = vpop.f32.mrf.mxu0
  %v1332 = vadd.f32 %v1203, %v1331
  %1333 = vmatmul.bf16.gmra.mxu0 %v675
  %v1334 = vpop.f32.mrf.mxu0
  %v1335 = vadd.f32 %v1206, %v1334
  %v1336 = vpop.f32.mrf.mxu0
  %v1337 = vadd.f32 %v1208, %v1336
  %1338 = vmatmul.bf16.gmra.mxu0 %v677
  %v1339 = vpop.f32.mrf.mxu0
  %v1340 = vadd.f32 %v1211, %v1339
  %v1341 = vpop.f32.mrf.mxu0
  %v1342 = vadd.f32 %v1213, %v1341
  %1343 = vmatmul.bf16.gmra.mxu0 %v679
  %v1344 = vpop.f32.mrf.mxu0
  %v1345 = vadd.f32 %v1216, %v1344
  %v1346 = vpop.f32.mrf.mxu0
  %v1347 = vadd.f32 %v1218, %v1346
  %1348 = vmatmul.bf16.gmra.mxu0 %v681
  %v1349 = vpop.f32.mrf.mxu0
  %v1350 = vadd.f32 %v1221, %v1349
  %v1351 = vpop.f32.mrf.mxu0
  %v1352 = vadd.f32 %v1223, %v1351
  %1353 = vmatmul.bf16.gmra.mxu0 %v779
  %v1354 = vpop.f32.mrf.mxu0
  %v1355 = vadd.f32 %v1226, %v1354
  %v1356 = vpop.f32.mrf.mxu0
  %v1357 = vadd.f32 %v1228, %v1356
  %1358 = vmatmul.bf16.gmra.mxu0 %v781
  %v1359 = vpop.f32.mrf.mxu0
  %v1360 = vadd.f32 %v1231, %v1359
  %v1361 = vpop.f32.mrf.mxu0
  %v1362 = vadd.f32 %v1233, %v1361
  %1363 = vdwg.mxu0
  %v1412 = vunpack.c.l.b16 %v708
  %v1413 = vunpack.c.l.b16 %v709
  %v1414 = vunpack.c.l.b16 %v710
  %v1415 = vunpack.c.l.b16 %v711
  %v1416 = vunpack.c.l.b16 %v712
  %v1417 = vunpack.c.l.b16 %v713
  %v1418 = vunpack.c.l.b16 %v714
  %v1419 = vunpack.c.l.b16 %v715
  %v1420 = vunpack.c.l.b16 %v716
  %v1421 = vunpack.c.l.b16 %v717
  %v1422 = vunpack.c.l.b16 %v718
  %v1423 = vunpack.c.l.b16 %v719
  %v1424 = vunpack.c.l.b16 %v720
  %v1425 = vunpack.c.l.b16 %v721
  %v1426 = vunpack.c.l.b16 %v722
  %v1427 = vunpack.c.l.b16 %v723
  %v1428 = vunpack.c.l.b16 %v724
  %v1429 = vunpack.c.l.b16 %v725
  %v1430 = vunpack.c.l.b16 %v726
  %v1431 = vunpack.c.l.b16 %v727
  %v1432 = vunpack.c.l.b16 %v728
  %v1433 = vunpack.c.l.b16 %v729
  %v1434 = vunpack.c.l.b16 %v730
  %v1435 = vunpack.c.l.b16 %v731
  %v1436 = vunpack.c.l.b16 %v732
  %v1437 = vunpack.c.l.b16 %v733
  %v1438 = vunpack.c.l.b16 %v734
  %v1439 = vunpack.c.l.b16 %v735
  %v1440 = vunpack.c.l.b16 %v736
  %v1441 = vunpack.c.l.b16 %v737
  %v1442 = vunpack.c.l.b16 %v738
  %v1443 = vunpack.c.l.b16 %v739
  %v1444 = vunpack.c.l.b16 %v740
  %v1445 = vunpack.c.l.b16 %v741
  %v1446 = vunpack.c.l.b16 %v742
  %v1447 = vunpack.c.l.b16 %v743
  %v1448 = vunpack.c.l.b16 %v744
  %v1449 = vunpack.c.l.b16 %v745
  %v1450 = vunpack.c.l.b16 %v746
  %v1451 = vunpack.c.l.b16 %v747
  %v1452 = vunpack.c.l.b16 %v748
  %v1453 = vunpack.c.l.b16 %v749
  %v1454 = vunpack.c.l.b16 %v750
  %v1455 = vunpack.c.l.b16 %v751
  %v1456 = vunpack.c.l.b16 %v752
  %v1457 = vunpack.c.l.b16 %v753
  %v1458 = vunpack.c.l.b16 %v754
  %v1459 = vunpack.c.l.b16 %v755
  %v1460 = vpack.c.b16 %v1413, %v1412
  %v1461 = vpack.c.b16 %v1415, %v1414
  %v1462 = vpack.c.b16 %v1417, %v1416
  %v1463 = vpack.c.b16 %v1419, %v1418
  %v1464 = vpack.c.b16 %v1421, %v1420
  %v1465 = vpack.c.b16 %v1423, %v1422
  %v1466 = vpack.c.b16 %v1425, %v1424
  %v1467 = vpack.c.b16 %v1427, %v1426
  %v1468 = vpack.c.b16 %v1429, %v1428
  %v1469 = vpack.c.b16 %v1431, %v1430
  %v1470 = vpack.c.b16 %v1433, %v1432
  %v1471 = vpack.c.b16 %v1435, %v1434
  %v1472 = vpack.c.b16 %v1437, %v1436
  %v1473 = vpack.c.b16 %v1439, %v1438
  %v1474 = vpack.c.b16 %v1441, %v1440
  %v1475 = vpack.c.b16 %v1443, %v1442
  %v1476 = vpack.c.b16 %v1445, %v1444
  %v1477 = vpack.c.b16 %v1447, %v1446
  %v1478 = vpack.c.b16 %v1449, %v1448
  %v1479 = vpack.c.b16 %v1451, %v1450
  %v1480 = vpack.c.b16 %v1453, %v1452
  %v1481 = vpack.c.b16 %v1455, %v1454
  %v1482 = vpack.c.b16 %v1457, %v1456
  %v1483 = vpack.c.b16 %v1459, %v1458
  %1508 = vmatpush.bf16.msra.mxu0 %v1467
  %1509 = vmatpush.bf16.msra.mxu0 %v1466
  %1510 = vmatpush.bf16.msra.mxu0 %v1465
  %1511 = vmatpush.bf16.msra.mxu0 %v1464
  %1512 = vmatpush.bf16.msra.mxu0 %v1463
  %1513 = vmatpush.bf16.msra.mxu0 %v1462
  %1514 = vmatpush.bf16.msra.mxu0 %v1461
  %1515 = vmatpush.bf16.msra.mxu0 %v1460
  %1516 = vmatmul.bf16.gmra.mxu0 %v362
  %v1517 = vpop.f32.mrf.mxu0
  %v1518 = vadd.f32 %v1245, %v1517
  %v1519 = vpop.f32.mrf.mxu0
  %v1520 = vadd.f32 %v1247, %v1519
  %1521 = vmatmul.bf16.gmra.mxu0 %v363
  %v1522 = vpop.f32.mrf.mxu0
  %v1523 = vadd.f32 %v1250, %v1522
  %v1524 = vpop.f32.mrf.mxu0
  %v1525 = vadd.f32 %v1252, %v1524
  %1526 = vmatmul.bf16.gmra.mxu0 %v364
  %v1527 = vpop.f32.mrf.mxu0
  %v1528 = vadd.f32 %v1255, %v1527
  %v1529 = vpop.f32.mrf.mxu0
  %v1530 = vadd.f32 %v1257, %v1529
  %1531 = vmatmul.bf16.gmra.mxu0 %v365
  %v1532 = vpop.f32.mrf.mxu0
  %v1533 = vadd.f32 %v1260, %v1532
  %v1534 = vpop.f32.mrf.mxu0
  %v1535 = vadd.f32 %v1262, %v1534
  %1536 = vmatmul.bf16.gmra.mxu0 %v366
  %v1537 = vpop.f32.mrf.mxu0
  %v1538 = vadd.f32 %v1265, %v1537
  %v1539 = vpop.f32.mrf.mxu0
  %v1540 = vadd.f32 %v1267, %v1539
  %1541 = vmatmul.bf16.gmra.mxu0 %v367
  %v1542 = vpop.f32.mrf.mxu0
  %v1543 = vadd.f32 %v1270, %v1542
  %v1544 = vpop.f32.mrf.mxu0
  %v1545 = vadd.f32 %v1272, %v1544
  %1546 = vmatmul.bf16.gmra.mxu0 %v368
  %v1547 = vpop.f32.mrf.mxu0
  %v1548 = vadd.f32 %v1275, %v1547
  %v1549 = vpop.f32.mrf.mxu0
  %v1550 = vadd.f32 %v1277, %v1549
  %1551 = vmatmul.bf16.gmra.mxu0 %v369
  %v1552 = vpop.f32.mrf.mxu0
  %v1553 = vadd.f32 %v1280, %v1552
  %v1554 = vpop.f32.mrf.mxu0
  %v1555 = vadd.f32 %v1282, %v1554
  %1556 = vmatmul.bf16.gmra.mxu0 %v370
  %v1557 = vpop.f32.mrf.mxu0
  %v1558 = vadd.f32 %v1285, %v1557
  %v1559 = vpop.f32.mrf.mxu0
  %v1560 = vadd.f32 %v1287, %v1559
  %1561 = vmatmul.bf16.gmra.mxu0 %v371
  %v1562 = vpop.f32.mrf.mxu0
  %v1563 = vadd.f32 %v1290, %v1562
  %v1564 = vpop.f32.mrf.mxu0
  %v1565 = vadd.f32 %v1292, %v1564
  %1566 = vmatmul.bf16.gmra.mxu0 %v372
  %v1567 = vpop.f32.mrf.mxu0
  %v1568 = vadd.f32 %v1295, %v1567
  %v1569 = vpop.f32.mrf.mxu0
  %v1570 = vadd.f32 %v1297, %v1569
  %1571 = vmatmul.bf16.gmra.mxu0 %v373
  %v1572 = vpop.f32.mrf.mxu0
  %v1573 = vadd.f32 %v1300, %v1572
  %v1574 = vpop.f32.mrf.mxu0
  %v1575 = vadd.f32 %v1302, %v1574
  %1576 = vmatmul.bf16.gmra.mxu0 %v374
  %v1577 = vpop.f32.mrf.mxu0
  %v1578 = vadd.f32 %v1305, %v1577
  %v1579 = vpop.f32.mrf.mxu0
  %v1580 = vadd.f32 %v1307, %v1579
  %1581 = vmatmul.bf16.gmra.mxu0 %v375
  %v1582 = vpop.f32.mrf.mxu0
  %v1583 = vadd.f32 %v1310, %v1582
  %v1584 = vpop.f32.mrf.mxu0
  %v1585 = vadd.f32 %v1312, %v1584
  %1586 = vmatmul.bf16.gmra.mxu0 %v376
  %v1587 = vpop.f32.mrf.mxu0
  %v1588 = vadd.f32 %v1315, %v1587
  %v1589 = vpop.f32.mrf.mxu0
  %v1590 = vadd.f32 %v1317, %v1589
  %1591 = vmatmul.bf16.gmra.mxu0 %v377
  %v1592 = vpop.f32.mrf.mxu0
  %v1593 = vadd.f32 %v1320, %v1592
  %v1594 = vpop.f32.mrf.mxu0
  %v1595 = vadd.f32 %v1322, %v1594
  %1596 = vmatmul.bf16.gmra.mxu0 %v378
  %v1597 = vpop.f32.mrf.mxu0
  %v1598 = vadd.f32 %v1325, %v1597
  %v1599 = vpop.f32.mrf.mxu0
  %v1600 = vadd.f32 %v1327, %v1599
  %1601 = vmatmul.bf16.gmra.mxu0 %v379
  %v1602 = vpop.f32.mrf.mxu0
  %v1603 = vadd.f32 %v1330, %v1602
  %v1604 = vpop.f32.mrf.mxu0
  %v1605 = vadd.f32 %v1332, %v1604
  %1606 = vmatmul.bf16.gmra.mxu0 %v380
  %v1607 = vpop.f32.mrf.mxu0
  %v1608 = vadd.f32 %v1335, %v1607
  %v1609 = vpop.f32.mrf.mxu0
  %v1610 = vadd.f32 %v1337, %v1609
  %1611 = vmatmul.bf16.gmra.mxu0 %v381
  %v1612 = vpop.f32.mrf.mxu0
  %v1613 = vadd.f32 %v1340, %v1612
  %v1614 = vpop.f32.mrf.mxu0
  %v1615 = vadd.f32 %v1342, %v1614
  %1616 = vmatmul.bf16.gmra.mxu0 %v382
  %v1617 = vpop.f32.mrf.mxu0
  %v1618 = vadd.f32 %v1345, %v1617
  %v1619 = vpop.f32.mrf.mxu0
  %v1620 = vadd.f32 %v1347, %v1619
  %1621 = vmatmul.bf16.gmra.mxu0 %v383
  %v1622 = vpop.f32.mrf.mxu0
  %v1623 = vadd.f32 %v1350, %v1622
  %v1624 = vpop.f32.mrf.mxu0
  %v1625 = vadd.f32 %v1352, %v1624
  %1626 = vmatmul.bf16.gmra.mxu0 %v384
  %v1627 = vpop.f32.mrf.mxu0
  %v1628 = vadd.f32 %v1355, %v1627
  %v1629 = vpop.f32.mrf.mxu0
  %v1630 = vadd.f32 %v1357, %v1629
  %1631 = vmatmul.bf16.gmra.mxu0 %v385
  %v1632 = vpop.f32.mrf.mxu0
  %v1633 = vadd.f32 %v1360, %v1632
  %v1634 = vpop.f32.mrf.mxu0
  %v1635 = vadd.f32 %v1362, %v1634
  %1636 = vdwg.mxu0
  %1637 = vmatpush.bf16.msra.mxu0 %v1475
  %1638 = vmatpush.bf16.msra.mxu0 %v1474
  %1639 = vmatpush.bf16.msra.mxu0 %v1473
  %1640 = vmatpush.bf16.msra.mxu0 %v1472
  %1641 = vmatpush.bf16.msra.mxu0 %v1471
  %1642 = vmatpush.bf16.msra.mxu0 %v1470
  %1643 = vmatpush.bf16.msra.mxu0 %v1469
  %1644 = vmatpush.bf16.msra.mxu0 %v1468
  %1645 = vmatmul.bf16.gmra.mxu0 %v425
  %v1646 = vpop.f32.mrf.mxu0
  %v1647 = vadd.f32 %v1518, %v1646
  %v1648 = vpop.f32.mrf.mxu0
  %v1649 = vadd.f32 %v1520, %v1648
  %1650 = vmatmul.bf16.gmra.mxu0 %v433
  %v1651 = vpop.f32.mrf.mxu0
  %v1652 = vadd.f32 %v1523, %v1651
  %v1653 = vpop.f32.mrf.mxu0
  %v1654 = vadd.f32 %v1525, %v1653
  %1655 = vmatmul.bf16.gmra.mxu0 %v441
  %v1656 = vpop.f32.mrf.mxu0
  %v1657 = vadd.f32 %v1528, %v1656
  %v1658 = vpop.f32.mrf.mxu0
  %v1659 = vadd.f32 %v1530, %v1658
  %1660 = vmatmul.bf16.gmra.mxu0 %v449
  %v1661 = vpop.f32.mrf.mxu0
  %v1662 = vadd.f32 %v1533, %v1661
  %v1663 = vpop.f32.mrf.mxu0
  %v1664 = vadd.f32 %v1535, %v1663
  %1665 = vmatmul.bf16.gmra.mxu0 %v457
  %v1666 = vpop.f32.mrf.mxu0
  %v1667 = vadd.f32 %v1538, %v1666
  %v1668 = vpop.f32.mrf.mxu0
  %v1669 = vadd.f32 %v1540, %v1668
  %1670 = vmatmul.bf16.gmra.mxu0 %v465
  %v1671 = vpop.f32.mrf.mxu0
  %v1672 = vadd.f32 %v1543, %v1671
  %v1673 = vpop.f32.mrf.mxu0
  %v1674 = vadd.f32 %v1545, %v1673
  %1675 = vmatmul.bf16.gmra.mxu0 %v473
  %v1676 = vpop.f32.mrf.mxu0
  %v1677 = vadd.f32 %v1548, %v1676
  %v1678 = vpop.f32.mrf.mxu0
  %v1679 = vadd.f32 %v1550, %v1678
  %1680 = vmatmul.bf16.gmra.mxu0 %v481
  %v1681 = vpop.f32.mrf.mxu0
  %v1682 = vadd.f32 %v1553, %v1681
  %v1683 = vpop.f32.mrf.mxu0
  %v1684 = vadd.f32 %v1555, %v1683
  %1685 = vmatmul.bf16.gmra.mxu0 %v489
  %v1686 = vpop.f32.mrf.mxu0
  %v1687 = vadd.f32 %v1558, %v1686
  %v1688 = vpop.f32.mrf.mxu0
  %v1689 = vadd.f32 %v1560, %v1688
  %1690 = vmatmul.bf16.gmra.mxu0 %v497
  %v1691 = vpop.f32.mrf.mxu0
  %v1692 = vadd.f32 %v1563, %v1691
  %v1693 = vpop.f32.mrf.mxu0
  %v1694 = vadd.f32 %v1565, %v1693
  %1695 = vmatmul.bf16.gmra.mxu0 %v505
  %v1696 = vpop.f32.mrf.mxu0
  %v1697 = vadd.f32 %v1568, %v1696
  %v1698 = vpop.f32.mrf.mxu0
  %v1699 = vadd.f32 %v1570, %v1698
  %1700 = vmatmul.bf16.gmra.mxu0 %v513
  %v1701 = vpop.f32.mrf.mxu0
  %v1702 = vadd.f32 %v1573, %v1701
  %v1703 = vpop.f32.mrf.mxu0
  %v1704 = vadd.f32 %v1575, %v1703
  %1705 = vmatmul.bf16.gmra.mxu0 %v521
  %v1706 = vpop.f32.mrf.mxu0
  %v1707 = vadd.f32 %v1578, %v1706
  %v1708 = vpop.f32.mrf.mxu0
  %v1709 = vadd.f32 %v1580, %v1708
  %1710 = vmatmul.bf16.gmra.mxu0 %v529
  %v1711 = vpop.f32.mrf.mxu0
  %v1712 = vadd.f32 %v1583, %v1711
  %v1713 = vpop.f32.mrf.mxu0
  %v1714 = vadd.f32 %v1585, %v1713
  %1715 = vmatmul.bf16.gmra.mxu0 %v537
  %v1716 = vpop.f32.mrf.mxu0
  %v1717 = vadd.f32 %v1588, %v1716
  %v1718 = vpop.f32.mrf.mxu0
  %v1719 = vadd.f32 %v1590, %v1718
  %1720 = vmatmul.bf16.gmra.mxu0 %v545
  %v1721 = vpop.f32.mrf.mxu0
  %v1722 = vadd.f32 %v1593, %v1721
  %v1723 = vpop.f32.mrf.mxu0
  %v1724 = vadd.f32 %v1595, %v1723
  %1725 = vmatmul.bf16.gmra.mxu0 %v553
  %v1726 = vpop.f32.mrf.mxu0
  %v1727 = vadd.f32 %v1598, %v1726
  %v1728 = vpop.f32.mrf.mxu0
  %v1729 = vadd.f32 %v1600, %v1728
  %1730 = vmatmul.bf16.gmra.mxu0 %v561
  %v1731 = vpop.f32.mrf.mxu0
  %v1732 = vadd.f32 %v1603, %v1731
  %v1733 = vpop.f32.mrf.mxu0
  %v1734 = vadd.f32 %v1605, %v1733
  %1735 = vmatmul.bf16.gmra.mxu0 %v569
  %v1736 = vpop.f32.mrf.mxu0
  %v1737 = vadd.f32 %v1608, %v1736
  %v1738 = vpop.f32.mrf.mxu0
  %v1739 = vadd.f32 %v1610, %v1738
  %1740 = vmatmul.bf16.gmra.mxu0 %v577
  %v1741 = vpop.f32.mrf.mxu0
  %v1742 = vadd.f32 %v1613, %v1741
  %v1743 = vpop.f32.mrf.mxu0
  %v1744 = vadd.f32 %v1615, %v1743
  %1745 = vmatmul.bf16.gmra.mxu0 %v585
  %v1746 = vpop.f32.mrf.mxu0
  %v1747 = vadd.f32 %v1618, %v1746
  %v1748 = vpop.f32.mrf.mxu0
  %v1749 = vadd.f32 %v1620, %v1748
  %1750 = vmatmul.bf16.gmra.mxu0 %v593
  %v1751 = vpop.f32.mrf.mxu0
  %v1752 = vadd.f32 %v1623, %v1751
  %v1753 = vpop.f32.mrf.mxu0
  %v1754 = vadd.f32 %v1625, %v1753
  %1755 = vmatmul.bf16.gmra.mxu0 %v601
  %v1756 = vpop.f32.mrf.mxu0
  %v1757 = vadd.f32 %v1628, %v1756
  %v1758 = vpop.f32.mrf.mxu0
  %v1759 = vadd.f32 %v1630, %v1758
  %1760 = vmatmul.bf16.gmra.mxu0 %v609
  %v1761 = vpop.f32.mrf.mxu0
  %v1762 = vadd.f32 %v1633, %v1761
  %v1763 = vpop.f32.mrf.mxu0
  %v1764 = vadd.f32 %v1635, %v1763
  %1765 = vdwg.mxu0
  %1766 = vmatpush.bf16.msra.mxu0 %v1483
  %1767 = vmatpush.bf16.msra.mxu0 %v1482
  %1768 = vmatpush.bf16.msra.mxu0 %v1481
  %1769 = vmatpush.bf16.msra.mxu0 %v1480
  %1770 = vmatpush.bf16.msra.mxu0 %v1479
  %1771 = vmatpush.bf16.msra.mxu0 %v1478
  %1772 = vmatpush.bf16.msra.mxu0 %v1477
  %1773 = vmatpush.bf16.msra.mxu0 %v1476
  %1774 = vmatmul.bf16.gmra.mxu0 %v637
  %v1775 = vpop.f32.mrf.mxu0
  %v1776 = vadd.f32 %v1647, %v1775
  %v1777 = vpop.f32.mrf.mxu0
  %v1778 = vadd.f32 %v1649, %v1777
  %1779 = vmatmul.bf16.gmra.mxu0 %v639
  %v1780 = vpop.f32.mrf.mxu0
  %v1781 = vadd.f32 %v1652, %v1780
  %v1782 = vpop.f32.mrf.mxu0
  %v1783 = vadd.f32 %v1654, %v1782
  %1784 = vmatmul.bf16.gmra.mxu0 %v641
  %v1785 = vpop.f32.mrf.mxu0
  %v1786 = vadd.f32 %v1657, %v1785
  %v1787 = vpop.f32.mrf.mxu0
  %v1788 = vadd.f32 %v1659, %v1787
  %1789 = vmatmul.bf16.gmra.mxu0 %v643
  %v1790 = vpop.f32.mrf.mxu0
  %v1791 = vadd.f32 %v1662, %v1790
  %v1792 = vpop.f32.mrf.mxu0
  %v1793 = vadd.f32 %v1664, %v1792
  %1794 = vmatmul.bf16.gmra.mxu0 %v645
  %v1795 = vpop.f32.mrf.mxu0
  %v1796 = vadd.f32 %v1667, %v1795
  %v1797 = vpop.f32.mrf.mxu0
  %v1798 = vadd.f32 %v1669, %v1797
  %1799 = vmatmul.bf16.gmra.mxu0 %v647
  %v1800 = vpop.f32.mrf.mxu0
  %v1801 = vadd.f32 %v1672, %v1800
  %v1802 = vpop.f32.mrf.mxu0
  %v1803 = vadd.f32 %v1674, %v1802
  %1804 = vmatmul.bf16.gmra.mxu0 %v649
  %v1805 = vpop.f32.mrf.mxu0
  %v1806 = vadd.f32 %v1677, %v1805
  %v1807 = vpop.f32.mrf.mxu0
  %v1808 = vadd.f32 %v1679, %v1807
  %1809 = vmatmul.bf16.gmra.mxu0 %v651
  %v1810 = vpop.f32.mrf.mxu0
  %v1811 = vadd.f32 %v1682, %v1810
  %v1812 = vpop.f32.mrf.mxu0
  %v1813 = vadd.f32 %v1684, %v1812
  %1814 = vmatmul.bf16.gmra.mxu0 %v653
  %v1815 = vpop.f32.mrf.mxu0
  %v1816 = vadd.f32 %v1687, %v1815
  %v1817 = vpop.f32.mrf.mxu0
  %v1818 = vadd.f32 %v1689, %v1817
  %1819 = vmatmul.bf16.gmra.mxu0 %v655
  %v1820 = vpop.f32.mrf.mxu0
  %v1821 = vadd.f32 %v1692, %v1820
  %v1822 = vpop.f32.mrf.mxu0
  %v1823 = vadd.f32 %v1694, %v1822
  %1824 = vmatmul.bf16.gmra.mxu0 %v657
  %v1825 = vpop.f32.mrf.mxu0
  %v1826 = vadd.f32 %v1697, %v1825
  %v1827 = vpop.f32.mrf.mxu0
  %v1828 = vadd.f32 %v1699, %v1827
  %1829 = vmatmul.bf16.gmra.mxu0 %v659
  %v1830 = vpop.f32.mrf.mxu0
  %v1831 = vadd.f32 %v1702, %v1830
  %v1832 = vpop.f32.mrf.mxu0
  %v1833 = vadd.f32 %v1704, %v1832
  %1834 = vmatmul.bf16.gmra.mxu0 %v661
  %v1835 = vpop.f32.mrf.mxu0
  %v1836 = vadd.f32 %v1707, %v1835
  %v1837 = vpop.f32.mrf.mxu0
  %v1838 = vadd.f32 %v1709, %v1837
  %1839 = vmatmul.bf16.gmra.mxu0 %v663
  %v1840 = vpop.f32.mrf.mxu0
  %v1841 = vadd.f32 %v1712, %v1840
  %v1842 = vpop.f32.mrf.mxu0
  %v1843 = vadd.f32 %v1714, %v1842
  %1844 = vmatmul.bf16.gmra.mxu0 %v665
  %v1845 = vpop.f32.mrf.mxu0
  %v1846 = vadd.f32 %v1717, %v1845
  %v1847 = vpop.f32.mrf.mxu0
  %v1848 = vadd.f32 %v1719, %v1847
  %1849 = vmatmul.bf16.gmra.mxu0 %v667
  %v1850 = vpop.f32.mrf.mxu0
  %v1851 = vadd.f32 %v1722, %v1850
  %v1852 = vpop.f32.mrf.mxu0
  %v1853 = vadd.f32 %v1724, %v1852
  %1854 = vmatmul.bf16.gmra.mxu0 %v669
  %v1855 = vpop.f32.mrf.mxu0
  %v1856 = vadd.f32 %v1727, %v1855
  %v1857 = vpop.f32.mrf.mxu0
  %v1858 = vadd.f32 %v1729, %v1857
  %1859 = vmatmul.bf16.gmra.mxu0 %v671
  %v1860 = vpop.f32.mrf.mxu0
  %v1861 = vadd.f32 %v1732, %v1860
  %v1862 = vpop.f32.mrf.mxu0
  %v1863 = vadd.f32 %v1734, %v1862
  %1864 = vmatmul.bf16.gmra.mxu0 %v673
  %v1865 = vpop.f32.mrf.mxu0
  %v1866 = vadd.f32 %v1737, %v1865
  %v1867 = vpop.f32.mrf.mxu0
  %v1868 = vadd.f32 %v1739, %v1867
  %1869 = vmatmul.bf16.gmra.mxu0 %v675
  %v1870 = vpop.f32.mrf.mxu0
  %v1871 = vadd.f32 %v1742, %v1870
  %v1872 = vpop.f32.mrf.mxu0
  %v1873 = vadd.f32 %v1744, %v1872
  %1874 = vmatmul.bf16.gmra.mxu0 %v677
  %v1875 = vpop.f32.mrf.mxu0
  %v1876 = vadd.f32 %v1747, %v1875
  %v1877 = vpop.f32.mrf.mxu0
  %v1878 = vadd.f32 %v1749, %v1877
  %1879 = vmatmul.bf16.gmra.mxu0 %v679
  %v1880 = vpop.f32.mrf.mxu0
  %v1881 = vadd.f32 %v1752, %v1880
  %v1882 = vpop.f32.mrf.mxu0
  %v1883 = vadd.f32 %v1754, %v1882
  %1884 = vmatmul.bf16.gmra.mxu0 %v681
  %v1885 = vpop.f32.mrf.mxu0
  %v1886 = vadd.f32 %v1757, %v1885
  %v1887 = vpop.f32.mrf.mxu0
  %v1888 = vadd.f32 %v1759, %v1887
  %1889 = vmatmul.bf16.gmra.mxu0 %v683
  %v1890 = vpop.f32.mrf.mxu0
  %v1891 = vadd.f32 %v1762, %v1890
  %v1892 = vpop.f32.mrf.mxu0
  %v1893 = vadd.f32 %v1764, %v1892
  %1894 = vdwg.mxu0
  %v1896 = vunpack.c.l.b16 %v264
  %v1897 = vpack.c.b16 %v1896, %v761
  %v1900 = vunpack.c.l.b16 %v265
  %v1901 = vpack.c.b16 %v1900, %v1900
  %v1903 = vshll.u32 %v1897, 16
  %v1905 = vrot.slane %v1903, 1
  %v1906 = vsel %vm413, %v770, %v1905
  %v1907 = vshrl.u32 %v1897, 16
  %v1909 = vor.u32 %v1907, %v1905
  %v1911 = vshll.u32 %v1901, 16
  %v1913 = vrot.slane %v1911, 1
  %v1914 = vsel %vm413, %v1909, %v1913
  %v1917 = vrot.slane %v1897, 1
  %v1918 = vsel %vm634, %v778, %v1917
  %v1919 = vrot.slane %v1901, 1
  %v1920 = vsel %vm634, %v1917, %v1919
  %s1923 = scalar_lea.vmem %s1, 384
  %v1924 = vld [vmem:[%s1923] sm:$0xf]
  %v1925 = vld [vmem:[%s1923 + $0x4] sm:$0xf]
  %v1926 = vld [vmem:[%s1923 + $0x8] sm:$0xf]
  %v1927 = vld [vmem:[%s1923 + $0xc] sm:$0xf]
  %v1928 = vld [vmem:[%s1923 + $0x10] sm:$0xf]
  %v1929 = vld [vmem:[%s1923 + $0x14] sm:$0xf]
  %v1930 = vld [vmem:[%s1923 + $0x18] sm:$0xf]
  %v1931 = vld [vmem:[%s1923 + $0x1c] sm:$0xf]
  %v1932 = vld [vmem:[%s1923 + $0x20] sm:$0xf]
  %v1933 = vld [vmem:[%s1923 + $0x24] sm:$0xf]
  %v1934 = vld [vmem:[%s1923 + $0x28] sm:$0xf]
  %v1935 = vld [vmem:[%s1923 + $0x2c] sm:$0xf]
  %v1936 = vld [vmem:[%s1923 + $0x30] sm:$0xf]
  %v1937 = vld [vmem:[%s1923 + $0x34] sm:$0xf]
  %v1938 = vld [vmem:[%s1923 + $0x38] sm:$0xf]
  %v1939 = vld [vmem:[%s1923 + $0x3c] sm:$0xf]
  %v1940 = vld [vmem:[%s1923 + $0x40] sm:$0xf]
  %v1941 = vld [vmem:[%s1923 + $0x44] sm:$0xf]
  %v1942 = vld [vmem:[%s1923 + $0x48] sm:$0xf]
  %v1943 = vld [vmem:[%s1923 + $0x4c] sm:$0xf]
  %v1944 = vld [vmem:[%s1923 + $0x50] sm:$0xf]
  %v1945 = vld [vmem:[%s1923 + $0x54] sm:$0xf]
  %v1946 = vld [vmem:[%s1923 + $0x58] sm:$0xf]
  %v1947 = vld [vmem:[%s1923 + $0x5c] sm:$0xf]
  %v1948 = vld [vmem:[%s1923 + $0x60] sm:$0xf]
  %v1949 = vld [vmem:[%s1923 + $0x64] sm:$0xf]
  %v1950 = vld [vmem:[%s1923 + $0x68] sm:$0xf]
  %v1951 = vld [vmem:[%s1923 + $0x6c] sm:$0xf]
  %v1952 = vld [vmem:[%s1923 + $0x70] sm:$0xf]
  %v1953 = vld [vmem:[%s1923 + $0x74] sm:$0xf]
  %v1954 = vld [vmem:[%s1923 + $0x78] sm:$0xf]
  %v1955 = vld [vmem:[%s1923 + $0x7c] sm:$0xf]
  %v1956 = vld [vmem:[%s1923 + $0x80] sm:$0xf]
  %v1957 = vld [vmem:[%s1923 + $0x84] sm:$0xf]
  %v1958 = vld [vmem:[%s1923 + $0x88] sm:$0xf]
  %v1959 = vld [vmem:[%s1923 + $0x8c] sm:$0xf]
  %v1960 = vld [vmem:[%s1923 + $0x90] sm:$0xf]
  %v1961 = vld [vmem:[%s1923 + $0x94] sm:$0xf]
  %v1962 = vld [vmem:[%s1923 + $0x98] sm:$0xf]
  %v1963 = vld [vmem:[%s1923 + $0x9c] sm:$0xf]
  %v1964 = vld [vmem:[%s1923 + $0xa0] sm:$0xf]
  %v1965 = vld [vmem:[%s1923 + $0xa4] sm:$0xf]
  %v1966 = vld [vmem:[%s1923 + $0xa8] sm:$0xf]
  %v1967 = vld [vmem:[%s1923 + $0xac] sm:$0xf]
  %v1968 = vld [vmem:[%s1923 + $0xb0] sm:$0xf]
  %v1969 = vld [vmem:[%s1923 + $0xb4] sm:$0xf]
  %v1970 = vld [vmem:[%s1923 + $0xb8] sm:$0xf]
  %v1971 = vld [vmem:[%s1923 + $0xbc] sm:$0xf]
  %v2020 = vunpack.c.l.b16 %v1924
  %v2021 = vunpack.c.l.b16 %v1925
  %v2022 = vunpack.c.l.b16 %v1926
  %v2023 = vunpack.c.l.b16 %v1927
  %v2024 = vunpack.c.l.b16 %v1928
  %v2025 = vunpack.c.l.b16 %v1929
  %v2026 = vunpack.c.l.b16 %v1930
  %v2027 = vunpack.c.l.b16 %v1931
  %v2028 = vunpack.c.l.b16 %v1932
  %v2029 = vunpack.c.l.b16 %v1933
  %v2030 = vunpack.c.l.b16 %v1934
  %v2031 = vunpack.c.l.b16 %v1935
  %v2032 = vunpack.c.l.b16 %v1936
  %v2033 = vunpack.c.l.b16 %v1937
  %v2034 = vunpack.c.l.b16 %v1938
  %v2035 = vunpack.c.l.b16 %v1939
  %v2036 = vunpack.c.l.b16 %v1940
  %v2037 = vunpack.c.l.b16 %v1941
  %v2038 = vunpack.c.l.b16 %v1942
  %v2039 = vunpack.c.l.b16 %v1943
  %v2040 = vunpack.c.l.b16 %v1944
  %v2041 = vunpack.c.l.b16 %v1945
  %v2042 = vunpack.c.l.b16 %v1946
  %v2043 = vunpack.c.l.b16 %v1947
  %v2044 = vunpack.c.l.b16 %v1948
  %v2045 = vunpack.c.l.b16 %v1949
  %v2046 = vunpack.c.l.b16 %v1950
  %v2047 = vunpack.c.l.b16 %v1951
  %v2048 = vunpack.c.l.b16 %v1952
  %v2049 = vunpack.c.l.b16 %v1953
  %v2050 = vunpack.c.l.b16 %v1954
  %v2051 = vunpack.c.l.b16 %v1955
  %v2052 = vunpack.c.l.b16 %v1956
  %v2053 = vunpack.c.l.b16 %v1957
  %v2054 = vunpack.c.l.b16 %v1958
  %v2055 = vunpack.c.l.b16 %v1959
  %v2056 = vunpack.c.l.b16 %v1960
  %v2057 = vunpack.c.l.b16 %v1961
  %v2058 = vunpack.c.l.b16 %v1962
  %v2059 = vunpack.c.l.b16 %v1963
  %v2060 = vunpack.c.l.b16 %v1964
  %v2061 = vunpack.c.l.b16 %v1965
  %v2062 = vunpack.c.l.b16 %v1966
  %v2063 = vunpack.c.l.b16 %v1967
  %v2064 = vunpack.c.l.b16 %v1968
  %v2065 = vunpack.c.l.b16 %v1969
  %v2066 = vunpack.c.l.b16 %v1970
  %v2067 = vunpack.c.l.b16 %v1971
  %v2068 = vpack.c.b16 %v2021, %v2020
  %v2069 = vpack.c.b16 %v2023, %v2022
  %v2070 = vpack.c.b16 %v2025, %v2024
  %v2071 = vpack.c.b16 %v2027, %v2026
  %v2072 = vpack.c.b16 %v2029, %v2028
  %v2073 = vpack.c.b16 %v2031, %v2030
  %v2074 = vpack.c.b16 %v2033, %v2032
  %v2075 = vpack.c.b16 %v2035, %v2034
  %v2076 = vpack.c.b16 %v2037, %v2036
  %v2077 = vpack.c.b16 %v2039, %v2038
  %v2078 = vpack.c.b16 %v2041, %v2040
  %v2079 = vpack.c.b16 %v2043, %v2042
  %v2080 = vpack.c.b16 %v2045, %v2044
  %v2081 = vpack.c.b16 %v2047, %v2046
  %v2082 = vpack.c.b16 %v2049, %v2048
  %v2083 = vpack.c.b16 %v2051, %v2050
  %v2084 = vpack.c.b16 %v2053, %v2052
  %v2085 = vpack.c.b16 %v2055, %v2054
  %v2086 = vpack.c.b16 %v2057, %v2056
  %v2087 = vpack.c.b16 %v2059, %v2058
  %v2088 = vpack.c.b16 %v2061, %v2060
  %v2089 = vpack.c.b16 %v2063, %v2062
  %v2090 = vpack.c.b16 %v2065, %v2064
  %v2091 = vpack.c.b16 %v2067, %v2066
  %2116 = vmatpush.bf16.msra.mxu0 %v2075
  %2117 = vmatpush.bf16.msra.mxu0 %v2074
  %2118 = vmatpush.bf16.msra.mxu0 %v2073
  %2119 = vmatpush.bf16.msra.mxu0 %v2072
  %2120 = vmatpush.bf16.msra.mxu0 %v2071
  %2121 = vmatpush.bf16.msra.mxu0 %v2070
  %2122 = vmatpush.bf16.msra.mxu0 %v2069
  %2123 = vmatpush.bf16.msra.mxu0 %v2068
  %2124 = vmatmul.bf16.gmra.mxu0 %v364
  %v2125 = vpop.f32.mrf.mxu0
  %v2126 = vadd.f32 0.0, %v2125
  %v2127 = vpop.f32.mrf.mxu0
  %v2128 = vadd.f32 0.0, %v2127
  %2129 = vmatmul.bf16.gmra.mxu0 %v365
  %v2130 = vpop.f32.mrf.mxu0
  %v2131 = vadd.f32 0.0, %v2130
  %v2132 = vpop.f32.mrf.mxu0
  %v2133 = vadd.f32 0.0, %v2132
  %2134 = vmatmul.bf16.gmra.mxu0 %v366
  %v2135 = vpop.f32.mrf.mxu0
  %v2136 = vadd.f32 0.0, %v2135
  %v2137 = vpop.f32.mrf.mxu0
  %v2138 = vadd.f32 0.0, %v2137
  %2139 = vmatmul.bf16.gmra.mxu0 %v367
  %v2140 = vpop.f32.mrf.mxu0
  %v2141 = vadd.f32 0.0, %v2140
  %v2142 = vpop.f32.mrf.mxu0
  %v2143 = vadd.f32 0.0, %v2142
  %2144 = vmatmul.bf16.gmra.mxu0 %v368
  %v2145 = vpop.f32.mrf.mxu0
  %v2146 = vadd.f32 0.0, %v2145
  %v2147 = vpop.f32.mrf.mxu0
  %v2148 = vadd.f32 0.0, %v2147
  %2149 = vmatmul.bf16.gmra.mxu0 %v369
  %v2150 = vpop.f32.mrf.mxu0
  %v2151 = vadd.f32 0.0, %v2150
  %v2152 = vpop.f32.mrf.mxu0
  %v2153 = vadd.f32 0.0, %v2152
  %2154 = vmatmul.bf16.gmra.mxu0 %v370
  %v2155 = vpop.f32.mrf.mxu0
  %v2156 = vadd.f32 0.0, %v2155
  %v2157 = vpop.f32.mrf.mxu0
  %v2158 = vadd.f32 0.0, %v2157
  %2159 = vmatmul.bf16.gmra.mxu0 %v371
  %v2160 = vpop.f32.mrf.mxu0
  %v2161 = vadd.f32 0.0, %v2160
  %v2162 = vpop.f32.mrf.mxu0
  %v2163 = vadd.f32 0.0, %v2162
  %2164 = vmatmul.bf16.gmra.mxu0 %v372
  %v2165 = vpop.f32.mrf.mxu0
  %v2166 = vadd.f32 0.0, %v2165
  %v2167 = vpop.f32.mrf.mxu0
  %v2168 = vadd.f32 0.0, %v2167
  %2169 = vmatmul.bf16.gmra.mxu0 %v373
  %v2170 = vpop.f32.mrf.mxu0
  %v2171 = vadd.f32 0.0, %v2170
  %v2172 = vpop.f32.mrf.mxu0
  %v2173 = vadd.f32 0.0, %v2172
  %2174 = vmatmul.bf16.gmra.mxu0 %v374
  %v2175 = vpop.f32.mrf.mxu0
  %v2176 = vadd.f32 0.0, %v2175
  %v2177 = vpop.f32.mrf.mxu0
  %v2178 = vadd.f32 0.0, %v2177
  %2179 = vmatmul.bf16.gmra.mxu0 %v375
  %v2180 = vpop.f32.mrf.mxu0
  %v2181 = vadd.f32 0.0, %v2180
  %v2182 = vpop.f32.mrf.mxu0
  %v2183 = vadd.f32 0.0, %v2182
  %2184 = vmatmul.bf16.gmra.mxu0 %v376
  %v2185 = vpop.f32.mrf.mxu0
  %v2186 = vadd.f32 0.0, %v2185
  %v2187 = vpop.f32.mrf.mxu0
  %v2188 = vadd.f32 0.0, %v2187
  %2189 = vmatmul.bf16.gmra.mxu0 %v377
  %v2190 = vpop.f32.mrf.mxu0
  %v2191 = vadd.f32 0.0, %v2190
  %v2192 = vpop.f32.mrf.mxu0
  %v2193 = vadd.f32 0.0, %v2192
  %2194 = vmatmul.bf16.gmra.mxu0 %v378
  %v2195 = vpop.f32.mrf.mxu0
  %v2196 = vadd.f32 0.0, %v2195
  %v2197 = vpop.f32.mrf.mxu0
  %v2198 = vadd.f32 0.0, %v2197
  %2199 = vmatmul.bf16.gmra.mxu0 %v379
  %v2200 = vpop.f32.mrf.mxu0
  %v2201 = vadd.f32 0.0, %v2200
  %v2202 = vpop.f32.mrf.mxu0
  %v2203 = vadd.f32 0.0, %v2202
  %2204 = vmatmul.bf16.gmra.mxu0 %v380
  %v2205 = vpop.f32.mrf.mxu0
  %v2206 = vadd.f32 0.0, %v2205
  %v2207 = vpop.f32.mrf.mxu0
  %v2208 = vadd.f32 0.0, %v2207
  %2209 = vmatmul.bf16.gmra.mxu0 %v381
  %v2210 = vpop.f32.mrf.mxu0
  %v2211 = vadd.f32 0.0, %v2210
  %v2212 = vpop.f32.mrf.mxu0
  %v2213 = vadd.f32 0.0, %v2212
  %2214 = vmatmul.bf16.gmra.mxu0 %v382
  %v2215 = vpop.f32.mrf.mxu0
  %v2216 = vadd.f32 0.0, %v2215
  %v2217 = vpop.f32.mrf.mxu0
  %v2218 = vadd.f32 0.0, %v2217
  %2219 = vmatmul.bf16.gmra.mxu0 %v383
  %v2220 = vpop.f32.mrf.mxu0
  %v2221 = vadd.f32 0.0, %v2220
  %v2222 = vpop.f32.mrf.mxu0
  %v2223 = vadd.f32 0.0, %v2222
  %2224 = vmatmul.bf16.gmra.mxu0 %v384
  %v2225 = vpop.f32.mrf.mxu0
  %v2226 = vadd.f32 0.0, %v2225
  %v2227 = vpop.f32.mrf.mxu0
  %v2228 = vadd.f32 0.0, %v2227
  %2229 = vmatmul.bf16.gmra.mxu0 %v385
  %v2230 = vpop.f32.mrf.mxu0
  %v2231 = vadd.f32 0.0, %v2230
  %v2232 = vpop.f32.mrf.mxu0
  %v2233 = vadd.f32 0.0, %v2232
  %2234 = vmatmul.bf16.gmra.mxu0 %v758
  %v2235 = vpop.f32.mrf.mxu0
  %v2236 = vadd.f32 0.0, %v2235
  %v2237 = vpop.f32.mrf.mxu0
  %v2238 = vadd.f32 0.0, %v2237
  %2239 = vmatmul.bf16.gmra.mxu0 %v1897
  %v2240 = vpop.f32.mrf.mxu0
  %v2241 = vadd.f32 0.0, %v2240
  %v2242 = vpop.f32.mrf.mxu0
  %v2243 = vadd.f32 0.0, %v2242
  %2244 = vdwg.mxu0
  %2245 = vmatpush.bf16.msra.mxu0 %v2083
  %2246 = vmatpush.bf16.msra.mxu0 %v2082
  %2247 = vmatpush.bf16.msra.mxu0 %v2081
  %2248 = vmatpush.bf16.msra.mxu0 %v2080
  %2249 = vmatpush.bf16.msra.mxu0 %v2079
  %2250 = vmatpush.bf16.msra.mxu0 %v2078
  %2251 = vmatpush.bf16.msra.mxu0 %v2077
  %2252 = vmatpush.bf16.msra.mxu0 %v2076
  %2253 = vmatmul.bf16.gmra.mxu0 %v441
  %v2254 = vpop.f32.mrf.mxu0
  %v2255 = vadd.f32 %v2126, %v2254
  %v2256 = vpop.f32.mrf.mxu0
  %v2257 = vadd.f32 %v2128, %v2256
  %2258 = vmatmul.bf16.gmra.mxu0 %v449
  %v2259 = vpop.f32.mrf.mxu0
  %v2260 = vadd.f32 %v2131, %v2259
  %v2261 = vpop.f32.mrf.mxu0
  %v2262 = vadd.f32 %v2133, %v2261
  %2263 = vmatmul.bf16.gmra.mxu0 %v457
  %v2264 = vpop.f32.mrf.mxu0
  %v2265 = vadd.f32 %v2136, %v2264
  %v2266 = vpop.f32.mrf.mxu0
  %v2267 = vadd.f32 %v2138, %v2266
  %2268 = vmatmul.bf16.gmra.mxu0 %v465
  %v2269 = vpop.f32.mrf.mxu0
  %v2270 = vadd.f32 %v2141, %v2269
  %v2271 = vpop.f32.mrf.mxu0
  %v2272 = vadd.f32 %v2143, %v2271
  %2273 = vmatmul.bf16.gmra.mxu0 %v473
  %v2274 = vpop.f32.mrf.mxu0
  %v2275 = vadd.f32 %v2146, %v2274
  %v2276 = vpop.f32.mrf.mxu0
  %v2277 = vadd.f32 %v2148, %v2276
  %2278 = vmatmul.bf16.gmra.mxu0 %v481
  %v2279 = vpop.f32.mrf.mxu0
  %v2280 = vadd.f32 %v2151, %v2279
  %v2281 = vpop.f32.mrf.mxu0
  %v2282 = vadd.f32 %v2153, %v2281
  %2283 = vmatmul.bf16.gmra.mxu0 %v489
  %v2284 = vpop.f32.mrf.mxu0
  %v2285 = vadd.f32 %v2156, %v2284
  %v2286 = vpop.f32.mrf.mxu0
  %v2287 = vadd.f32 %v2158, %v2286
  %2288 = vmatmul.bf16.gmra.mxu0 %v497
  %v2289 = vpop.f32.mrf.mxu0
  %v2290 = vadd.f32 %v2161, %v2289
  %v2291 = vpop.f32.mrf.mxu0
  %v2292 = vadd.f32 %v2163, %v2291
  %2293 = vmatmul.bf16.gmra.mxu0 %v505
  %v2294 = vpop.f32.mrf.mxu0
  %v2295 = vadd.f32 %v2166, %v2294
  %v2296 = vpop.f32.mrf.mxu0
  %v2297 = vadd.f32 %v2168, %v2296
  %2298 = vmatmul.bf16.gmra.mxu0 %v513
  %v2299 = vpop.f32.mrf.mxu0
  %v2300 = vadd.f32 %v2171, %v2299
  %v2301 = vpop.f32.mrf.mxu0
  %v2302 = vadd.f32 %v2173, %v2301
  %2303 = vmatmul.bf16.gmra.mxu0 %v521
  %v2304 = vpop.f32.mrf.mxu0
  %v2305 = vadd.f32 %v2176, %v2304
  %v2306 = vpop.f32.mrf.mxu0
  %v2307 = vadd.f32 %v2178, %v2306
  %2308 = vmatmul.bf16.gmra.mxu0 %v529
  %v2309 = vpop.f32.mrf.mxu0
  %v2310 = vadd.f32 %v2181, %v2309
  %v2311 = vpop.f32.mrf.mxu0
  %v2312 = vadd.f32 %v2183, %v2311
  %2313 = vmatmul.bf16.gmra.mxu0 %v537
  %v2314 = vpop.f32.mrf.mxu0
  %v2315 = vadd.f32 %v2186, %v2314
  %v2316 = vpop.f32.mrf.mxu0
  %v2317 = vadd.f32 %v2188, %v2316
  %2318 = vmatmul.bf16.gmra.mxu0 %v545
  %v2319 = vpop.f32.mrf.mxu0
  %v2320 = vadd.f32 %v2191, %v2319
  %v2321 = vpop.f32.mrf.mxu0
  %v2322 = vadd.f32 %v2193, %v2321
  %2323 = vmatmul.bf16.gmra.mxu0 %v553
  %v2324 = vpop.f32.mrf.mxu0
  %v2325 = vadd.f32 %v2196, %v2324
  %v2326 = vpop.f32.mrf.mxu0
  %v2327 = vadd.f32 %v2198, %v2326
  %2328 = vmatmul.bf16.gmra.mxu0 %v561
  %v2329 = vpop.f32.mrf.mxu0
  %v2330 = vadd.f32 %v2201, %v2329
  %v2331 = vpop.f32.mrf.mxu0
  %v2332 = vadd.f32 %v2203, %v2331
  %2333 = vmatmul.bf16.gmra.mxu0 %v569
  %v2334 = vpop.f32.mrf.mxu0
  %v2335 = vadd.f32 %v2206, %v2334
  %v2336 = vpop.f32.mrf.mxu0
  %v2337 = vadd.f32 %v2208, %v2336
  %2338 = vmatmul.bf16.gmra.mxu0 %v577
  %v2339 = vpop.f32.mrf.mxu0
  %v2340 = vadd.f32 %v2211, %v2339
  %v2341 = vpop.f32.mrf.mxu0
  %v2342 = vadd.f32 %v2213, %v2341
  %2343 = vmatmul.bf16.gmra.mxu0 %v585
  %v2344 = vpop.f32.mrf.mxu0
  %v2345 = vadd.f32 %v2216, %v2344
  %v2346 = vpop.f32.mrf.mxu0
  %v2347 = vadd.f32 %v2218, %v2346
  %2348 = vmatmul.bf16.gmra.mxu0 %v593
  %v2349 = vpop.f32.mrf.mxu0
  %v2350 = vadd.f32 %v2221, %v2349
  %v2351 = vpop.f32.mrf.mxu0
  %v2352 = vadd.f32 %v2223, %v2351
  %2353 = vmatmul.bf16.gmra.mxu0 %v601
  %v2354 = vpop.f32.mrf.mxu0
  %v2355 = vadd.f32 %v2226, %v2354
  %v2356 = vpop.f32.mrf.mxu0
  %v2357 = vadd.f32 %v2228, %v2356
  %2358 = vmatmul.bf16.gmra.mxu0 %v767
  %v2359 = vpop.f32.mrf.mxu0
  %v2360 = vadd.f32 %v2231, %v2359
  %v2361 = vpop.f32.mrf.mxu0
  %v2362 = vadd.f32 %v2233, %v2361
  %2363 = vmatmul.bf16.gmra.mxu0 %v1906
  %v2364 = vpop.f32.mrf.mxu0
  %v2365 = vadd.f32 %v2236, %v2364
  %v2366 = vpop.f32.mrf.mxu0
  %v2367 = vadd.f32 %v2238, %v2366
  %2368 = vmatmul.bf16.gmra.mxu0 %v1914
  %v2369 = vpop.f32.mrf.mxu0
  %v2370 = vadd.f32 %v2241, %v2369
  %v2371 = vpop.f32.mrf.mxu0
  %v2372 = vadd.f32 %v2243, %v2371
  %2373 = vdwg.mxu0
  %2374 = vmatpush.bf16.msra.mxu0 %v2091
  %2375 = vmatpush.bf16.msra.mxu0 %v2090
  %2376 = vmatpush.bf16.msra.mxu0 %v2089
  %2377 = vmatpush.bf16.msra.mxu0 %v2088
  %2378 = vmatpush.bf16.msra.mxu0 %v2087
  %2379 = vmatpush.bf16.msra.mxu0 %v2086
  %2380 = vmatpush.bf16.msra.mxu0 %v2085
  %2381 = vmatpush.bf16.msra.mxu0 %v2084
  %2382 = vmatmul.bf16.gmra.mxu0 %v641
  %v2383 = vpop.f32.mrf.mxu0
  %v2384 = vadd.f32 %v2255, %v2383
  %v2385 = vpop.f32.mrf.mxu0
  %v2386 = vadd.f32 %v2257, %v2385
  %2387 = vmatmul.bf16.gmra.mxu0 %v643
  %v2388 = vpop.f32.mrf.mxu0
  %v2389 = vadd.f32 %v2260, %v2388
  %v2390 = vpop.f32.mrf.mxu0
  %v2391 = vadd.f32 %v2262, %v2390
  %2392 = vmatmul.bf16.gmra.mxu0 %v645
  %v2393 = vpop.f32.mrf.mxu0
  %v2394 = vadd.f32 %v2265, %v2393
  %v2395 = vpop.f32.mrf.mxu0
  %v2396 = vadd.f32 %v2267, %v2395
  %2397 = vmatmul.bf16.gmra.mxu0 %v647
  %v2398 = vpop.f32.mrf.mxu0
  %v2399 = vadd.f32 %v2270, %v2398
  %v2400 = vpop.f32.mrf.mxu0
  %v2401 = vadd.f32 %v2272, %v2400
  %2402 = vmatmul.bf16.gmra.mxu0 %v649
  %v2403 = vpop.f32.mrf.mxu0
  %v2404 = vadd.f32 %v2275, %v2403
  %v2405 = vpop.f32.mrf.mxu0
  %v2406 = vadd.f32 %v2277, %v2405
  %2407 = vmatmul.bf16.gmra.mxu0 %v651
  %v2408 = vpop.f32.mrf.mxu0
  %v2409 = vadd.f32 %v2280, %v2408
  %v2410 = vpop.f32.mrf.mxu0
  %v2411 = vadd.f32 %v2282, %v2410
  %2412 = vmatmul.bf16.gmra.mxu0 %v653
  %v2413 = vpop.f32.mrf.mxu0
  %v2414 = vadd.f32 %v2285, %v2413
  %v2415 = vpop.f32.mrf.mxu0
  %v2416 = vadd.f32 %v2287, %v2415
  %2417 = vmatmul.bf16.gmra.mxu0 %v655
  %v2418 = vpop.f32.mrf.mxu0
  %v2419 = vadd.f32 %v2290, %v2418
  %v2420 = vpop.f32.mrf.mxu0
  %v2421 = vadd.f32 %v2292, %v2420
  %2422 = vmatmul.bf16.gmra.mxu0 %v657
  %v2423 = vpop.f32.mrf.mxu0
  %v2424 = vadd.f32 %v2295, %v2423
  %v2425 = vpop.f32.mrf.mxu0
  %v2426 = vadd.f32 %v2297, %v2425
  %2427 = vmatmul.bf16.gmra.mxu0 %v659
  %v2428 = vpop.f32.mrf.mxu0
  %v2429 = vadd.f32 %v2300, %v2428
  %v2430 = vpop.f32.mrf.mxu0
  %v2431 = vadd.f32 %v2302, %v2430
  %2432 = vmatmul.bf16.gmra.mxu0 %v661
  %v2433 = vpop.f32.mrf.mxu0
  %v2434 = vadd.f32 %v2305, %v2433
  %v2435 = vpop.f32.mrf.mxu0
  %v2436 = vadd.f32 %v2307, %v2435
  %2437 = vmatmul.bf16.gmra.mxu0 %v663
  %v2438 = vpop.f32.mrf.mxu0
  %v2439 = vadd.f32 %v2310, %v2438
  %v2440 = vpop.f32.mrf.mxu0
  %v2441 = vadd.f32 %v2312, %v2440
  %2442 = vmatmul.bf16.gmra.mxu0 %v665
  %v2443 = vpop.f32.mrf.mxu0
  %v2444 = vadd.f32 %v2315, %v2443
  %v2445 = vpop.f32.mrf.mxu0
  %v2446 = vadd.f32 %v2317, %v2445
  %2447 = vmatmul.bf16.gmra.mxu0 %v667
  %v2448 = vpop.f32.mrf.mxu0
  %v2449 = vadd.f32 %v2320, %v2448
  %v2450 = vpop.f32.mrf.mxu0
  %v2451 = vadd.f32 %v2322, %v2450
  %2452 = vmatmul.bf16.gmra.mxu0 %v669
  %v2453 = vpop.f32.mrf.mxu0
  %v2454 = vadd.f32 %v2325, %v2453
  %v2455 = vpop.f32.mrf.mxu0
  %v2456 = vadd.f32 %v2327, %v2455
  %2457 = vmatmul.bf16.gmra.mxu0 %v671
  %v2458 = vpop.f32.mrf.mxu0
  %v2459 = vadd.f32 %v2330, %v2458
  %v2460 = vpop.f32.mrf.mxu0
  %v2461 = vadd.f32 %v2332, %v2460
  %2462 = vmatmul.bf16.gmra.mxu0 %v673
  %v2463 = vpop.f32.mrf.mxu0
  %v2464 = vadd.f32 %v2335, %v2463
  %v2465 = vpop.f32.mrf.mxu0
  %v2466 = vadd.f32 %v2337, %v2465
  %2467 = vmatmul.bf16.gmra.mxu0 %v675
  %v2468 = vpop.f32.mrf.mxu0
  %v2469 = vadd.f32 %v2340, %v2468
  %v2470 = vpop.f32.mrf.mxu0
  %v2471 = vadd.f32 %v2342, %v2470
  %2472 = vmatmul.bf16.gmra.mxu0 %v677
  %v2473 = vpop.f32.mrf.mxu0
  %v2474 = vadd.f32 %v2345, %v2473
  %v2475 = vpop.f32.mrf.mxu0
  %v2476 = vadd.f32 %v2347, %v2475
  %2477 = vmatmul.bf16.gmra.mxu0 %v679
  %v2478 = vpop.f32.mrf.mxu0
  %v2479 = vadd.f32 %v2350, %v2478
  %v2480 = vpop.f32.mrf.mxu0
  %v2481 = vadd.f32 %v2352, %v2480
  %2482 = vmatmul.bf16.gmra.mxu0 %v681
  %v2483 = vpop.f32.mrf.mxu0
  %v2484 = vadd.f32 %v2355, %v2483
  %v2485 = vpop.f32.mrf.mxu0
  %v2486 = vadd.f32 %v2357, %v2485
  %2487 = vmatmul.bf16.gmra.mxu0 %v779
  %v2488 = vpop.f32.mrf.mxu0
  %v2489 = vadd.f32 %v2360, %v2488
  %v2490 = vpop.f32.mrf.mxu0
  %v2491 = vadd.f32 %v2362, %v2490
  %2492 = vmatmul.bf16.gmra.mxu0 %v1918
  %v2493 = vpop.f32.mrf.mxu0
  %v2494 = vadd.f32 %v2365, %v2493
  %v2495 = vpop.f32.mrf.mxu0
  %v2496 = vadd.f32 %v2367, %v2495
  %2497 = vmatmul.bf16.gmra.mxu0 %v1920
  %v2498 = vpop.f32.mrf.mxu0
  %v2499 = vadd.f32 %v2370, %v2498
  %v2500 = vpop.f32.mrf.mxu0
  %v2501 = vadd.f32 %v2372, %v2500
  %2502 = vdwg.mxu0
  %v2503 = vadd.f32 %v1776, %v2384
  %v2504 = vadd.f32 %v1778, %v2386
  %v2505 = vadd.f32 %v1781, %v2389
  %v2506 = vadd.f32 %v1783, %v2391
  %v2507 = vadd.f32 %v1786, %v2394
  %v2508 = vadd.f32 %v1788, %v2396
  %v2509 = vadd.f32 %v1791, %v2399
  %v2510 = vadd.f32 %v1793, %v2401
  %v2511 = vadd.f32 %v1796, %v2404
  %v2512 = vadd.f32 %v1798, %v2406
  %v2513 = vadd.f32 %v1801, %v2409
  %v2514 = vadd.f32 %v1803, %v2411
  %v2515 = vadd.f32 %v1806, %v2414
  %v2516 = vadd.f32 %v1808, %v2416
  %v2517 = vadd.f32 %v1811, %v2419
  %v2518 = vadd.f32 %v1813, %v2421
  %v2519 = vadd.f32 %v1816, %v2424
  %v2520 = vadd.f32 %v1818, %v2426
  %v2521 = vadd.f32 %v1821, %v2429
  %v2522 = vadd.f32 %v1823, %v2431
  %v2523 = vadd.f32 %v1826, %v2434
  %v2524 = vadd.f32 %v1828, %v2436
  %v2525 = vadd.f32 %v1831, %v2439
  %v2526 = vadd.f32 %v1833, %v2441
  %v2527 = vadd.f32 %v1836, %v2444
  %v2528 = vadd.f32 %v1838, %v2446
  %v2529 = vadd.f32 %v1841, %v2449
  %v2530 = vadd.f32 %v1843, %v2451
  %v2531 = vadd.f32 %v1846, %v2454
  %v2532 = vadd.f32 %v1848, %v2456
  %v2533 = vadd.f32 %v1851, %v2459
  %v2534 = vadd.f32 %v1853, %v2461
  %v2535 = vadd.f32 %v1856, %v2464
  %v2536 = vadd.f32 %v1858, %v2466
  %v2537 = vadd.f32 %v1861, %v2469
  %v2538 = vadd.f32 %v1863, %v2471
  %v2539 = vadd.f32 %v1866, %v2474
  %v2540 = vadd.f32 %v1868, %v2476
  %v2541 = vadd.f32 %v1871, %v2479
  %v2542 = vadd.f32 %v1873, %v2481
  %v2543 = vadd.f32 %v1876, %v2484
  %v2544 = vadd.f32 %v1878, %v2486
  %v2545 = vadd.f32 %v1881, %v2489
  %v2546 = vadd.f32 %v1883, %v2491
  %v2547 = vadd.f32 %v1886, %v2494
  %v2548 = vadd.f32 %v1888, %v2496
  %v2549 = vadd.f32 %v1891, %v2499
  %v2550 = vadd.f32 %v1893, %v2501
  %v2551 = vld [vmem:[%s2] sm:$0x1]
  %v2553 = vperm.slane %v2551, 0
  %v2555 = vadd.f32 %v2503, %v2553
  %v2556 = vadd.f32 %v2504, %v2553
  %v2557 = vadd.f32 %v2505, %v2553
  %v2558 = vadd.f32 %v2506, %v2553
  %v2559 = vadd.f32 %v2507, %v2553
  %v2560 = vadd.f32 %v2508, %v2553
  %v2561 = vadd.f32 %v2509, %v2553
  %v2562 = vadd.f32 %v2510, %v2553
  %v2563 = vadd.f32 %v2511, %v2553
  %v2564 = vadd.f32 %v2512, %v2553
  %v2565 = vadd.f32 %v2513, %v2553
  %v2566 = vadd.f32 %v2514, %v2553
  %v2567 = vadd.f32 %v2515, %v2553
  %v2568 = vadd.f32 %v2516, %v2553
  %v2569 = vadd.f32 %v2517, %v2553
  %v2570 = vadd.f32 %v2518, %v2553
  %v2571 = vadd.f32 %v2519, %v2553
  %v2572 = vadd.f32 %v2520, %v2553
  %v2573 = vadd.f32 %v2521, %v2553
  %v2574 = vadd.f32 %v2522, %v2553
  %v2575 = vadd.f32 %v2523, %v2553
  %v2576 = vadd.f32 %v2524, %v2553
  %v2577 = vadd.f32 %v2525, %v2553
  %v2578 = vadd.f32 %v2526, %v2553
  %v2579 = vadd.f32 %v2527, %v2553
  %v2580 = vadd.f32 %v2528, %v2553
  %v2581 = vadd.f32 %v2529, %v2553
  %v2582 = vadd.f32 %v2530, %v2553
  %v2583 = vadd.f32 %v2531, %v2553
  %v2584 = vadd.f32 %v2532, %v2553
  %v2585 = vadd.f32 %v2533, %v2553
  %v2586 = vadd.f32 %v2534, %v2553
  %v2587 = vadd.f32 %v2535, %v2553
  %v2588 = vadd.f32 %v2536, %v2553
  %v2589 = vadd.f32 %v2537, %v2553
  %v2590 = vadd.f32 %v2538, %v2553
  %v2591 = vadd.f32 %v2539, %v2553
  %v2592 = vadd.f32 %v2540, %v2553
  %v2593 = vadd.f32 %v2541, %v2553
  %v2594 = vadd.f32 %v2542, %v2553
  %v2595 = vadd.f32 %v2543, %v2553
  %v2596 = vadd.f32 %v2544, %v2553
  %v2597 = vadd.f32 %v2545, %v2553
  %v2598 = vadd.f32 %v2546, %v2553
  %v2599 = vadd.f32 %v2547, %v2553
  %v2600 = vadd.f32 %v2548, %v2553
  %v2601 = vadd.f32 %v2549, %v2553
  %v2602 = vadd.f32 %v2550, %v2553
  %v2603 = vpack.c.bf16 %v2555, %v2555
  %v2604 = vpack.c.bf16 %v2556, %v2556
  %v2605 = vpack.c.bf16 %v2557, %v2557
  %v2606 = vpack.c.bf16 %v2558, %v2558
  %v2607 = vpack.c.bf16 %v2559, %v2559
  %v2608 = vpack.c.bf16 %v2560, %v2560
  %v2609 = vpack.c.bf16 %v2561, %v2561
  %v2610 = vpack.c.bf16 %v2562, %v2562
  %v2611 = vpack.c.bf16 %v2563, %v2563
  %v2612 = vpack.c.bf16 %v2564, %v2564
  %v2613 = vpack.c.bf16 %v2565, %v2565
  %v2614 = vpack.c.bf16 %v2566, %v2566
  %v2615 = vpack.c.bf16 %v2567, %v2567
  %v2616 = vpack.c.bf16 %v2568, %v2568
  %v2617 = vpack.c.bf16 %v2569, %v2569
  %v2618 = vpack.c.bf16 %v2570, %v2570
  %v2619 = vpack.c.bf16 %v2571, %v2571
  %v2620 = vpack.c.bf16 %v2572, %v2572
  %v2621 = vpack.c.bf16 %v2573, %v2573
  %v2622 = vpack.c.bf16 %v2574, %v2574
  %v2623 = vpack.c.bf16 %v2575, %v2575
  %v2624 = vpack.c.bf16 %v2576, %v2576
  %v2625 = vpack.c.bf16 %v2577, %v2577
  %v2626 = vpack.c.bf16 %v2578, %v2578
  %v2627 = vpack.c.bf16 %v2579, %v2579
  %v2628 = vpack.c.bf16 %v2580, %v2580
  %v2629 = vpack.c.bf16 %v2581, %v2581
  %v2630 = vpack.c.bf16 %v2582, %v2582
  %v2631 = vpack.c.bf16 %v2583, %v2583
  %v2632 = vpack.c.bf16 %v2584, %v2584
  %v2633 = vpack.c.bf16 %v2585, %v2585
  %v2634 = vpack.c.bf16 %v2586, %v2586
  %v2635 = vpack.c.bf16 %v2587, %v2587
  %v2636 = vpack.c.bf16 %v2588, %v2588
  %v2637 = vpack.c.bf16 %v2589, %v2589
  %v2638 = vpack.c.bf16 %v2590, %v2590
  %v2639 = vpack.c.bf16 %v2591, %v2591
  %v2640 = vpack.c.bf16 %v2592, %v2592
  %v2641 = vpack.c.bf16 %v2593, %v2593
  %v2642 = vpack.c.bf16 %v2594, %v2594
  %v2643 = vpack.c.bf16 %v2595, %v2595
  %v2644 = vpack.c.bf16 %v2596, %v2596
  %v2645 = vpack.c.bf16 %v2597, %v2597
  %v2646 = vpack.c.bf16 %v2598, %v2598
  %v2647 = vpack.c.bf16 %v2599, %v2599
  %v2648 = vpack.c.bf16 %v2600, %v2600
  %v2649 = vpack.c.bf16 %v2601, %v2601
  %v2650 = vpack.c.bf16 %v2602, %v2602
  %2651 = vst [vmem:[%s23] sm:$0xf] %v2603
  %2652 = vst [vmem:[%s23 + $0x4] sm:$0xf] %v2604
  %2653 = vst [vmem:[%s23 + $0x8] sm:$0xf] %v2605
  %2654 = vst [vmem:[%s23 + $0xc] sm:$0xf] %v2606
  %2655 = vst [vmem:[%s23 + $0x10] sm:$0xf] %v2607
  %2656 = vst [vmem:[%s23 + $0x14] sm:$0xf] %v2608
  %2657 = vst [vmem:[%s23 + $0x18] sm:$0xf] %v2609
  %2658 = vst [vmem:[%s23 + $0x1c] sm:$0xf] %v2610
  %2659 = vst [vmem:[%s23 + $0x20] sm:$0xf] %v2611
  %2660 = vst [vmem:[%s23 + $0x24] sm:$0xf] %v2612
  %2661 = vst [vmem:[%s23 + $0x28] sm:$0xf] %v2613
  %2662 = vst [vmem:[%s23 + $0x2c] sm:$0xf] %v2614
  %2663 = vst [vmem:[%s23 + $0x30] sm:$0xf] %v2615
  %2664 = vst [vmem:[%s23 + $0x34] sm:$0xf] %v2616
  %2665 = vst [vmem:[%s23 + $0x38] sm:$0xf] %v2617
  %2666 = vst [vmem:[%s23 + $0x3c] sm:$0xf] %v2618
  %2667 = vst [vmem:[%s23 + $0x40] sm:$0xf] %v2619
  %2668 = vst [vmem:[%s23 + $0x44] sm:$0xf] %v2620
  %2669 = vst [vmem:[%s23 + $0x48] sm:$0xf] %v2621
  %2670 = vst [vmem:[%s23 + $0x4c] sm:$0xf] %v2622
  %2671 = vst [vmem:[%s23 + $0x50] sm:$0xf] %v2623
  %2672 = vst [vmem:[%s23 + $0x54] sm:$0xf] %v2624
  %2673 = vst [vmem:[%s23 + $0x58] sm:$0xf] %v2625
  %2674 = vst [vmem:[%s23 + $0x5c] sm:$0xf] %v2626
  %2675 = vst [vmem:[%s23 + $0x60] sm:$0xf] %v2627
  %2676 = vst [vmem:[%s23 + $0x64] sm:$0xf] %v2628
  %2677 = vst [vmem:[%s23 + $0x68] sm:$0xf] %v2629
  %2678 = vst [vmem:[%s23 + $0x6c] sm:$0xf] %v2630
  %2679 = vst [vmem:[%s23 + $0x70] sm:$0xf] %v2631
  %2680 = vst [vmem:[%s23 + $0x74] sm:$0xf] %v2632
  %2681 = vst [vmem:[%s23 + $0x78] sm:$0xf] %v2633
  %2682 = vst [vmem:[%s23 + $0x7c] sm:$0xf] %v2634
  %2683 = vst [vmem:[%s23 + $0x80] sm:$0xf] %v2635
  %2684 = vst [vmem:[%s23 + $0x84] sm:$0xf] %v2636
  %2685 = vst [vmem:[%s23 + $0x88] sm:$0xf] %v2637
  %2686 = vst [vmem:[%s23 + $0x8c] sm:$0xf] %v2638
  %2687 = vst [vmem:[%s23 + $0x90] sm:$0xf] %v2639
  %2688 = vst [vmem:[%s23 + $0x94] sm:$0xf] %v2640
  %2689 = vst [vmem:[%s23 + $0x98] sm:$0xf] %v2641
  %2690 = vst [vmem:[%s23 + $0x9c] sm:$0xf] %v2642
  %2691 = vst [vmem:[%s23 + $0xa0] sm:$0xf] %v2643
  %2692 = vst [vmem:[%s23 + $0xa4] sm:$0xf] %v2644
  %2693 = vst [vmem:[%s23 + $0xa8] sm:$0xf] %v2645
  %2694 = vst [vmem:[%s23 + $0xac] sm:$0xf] %v2646
  %2695 = vst [vmem:[%s23 + $0xb0] sm:$0xf] %v2647
  %2696 = vst [vmem:[%s23 + $0xb4] sm:$0xf] %v2648
  %2697 = vst [vmem:[%s23 + $0xb8] sm:$0xf] %v2649
  %2698 = vst [vmem:[%s23 + $0xbc] sm:$0xf] %v2650
  %s2699 = sadd.s32 0, 0
  %s2700 = smul.u32 48, %s2699
  %p2701 = scmp.lt.s32.totalorder %s2700, 47
  %s2702 = scalar_select %p2701, %s2700, 47
  %s2703 = smul.addr %s2702, 4
  %s2704 = scalar_lea.vmem %s3, %s2703
  // Predicated region
  $region56: #{res_basic_block.3} parent=0 // pred_check
    _
  $region57: #{res_basic_block.3} parent=0 // pred_check_branch
    %2706 = sbr.rel (0) target = $region59
  $region58: #{res_basic_block.3} parent=0 // pred_region
    %s2707 = sadd.s32 0, 0
    %s2708 = smul.u32 48, %s2707
  $region59: #{res_basic_block.3} parent=0 // pred_fallthru
    _
  // Predicated region
  $region60: #{res_basic_block.3} parent=0 // pred_check
    _
  $region61: #{res_basic_block.3} parent=0 // pred_check_branch
    %2710 = sbr.rel (0) target = $region63
  $region62: #{res_basic_block.3} parent=0 // pred_region
    %s2711 = sadd.s32 0, 0
    %s2712 = smul.u32 48, %s2711
    %p2713 = scmp.lt.s32.totalorder %s2712, 47
    %s2714 = scalar_select %p2713, %s2712, 47
    %s2715 = smul.addr %s2714, 4
    %s2716 = scalar_lea.vmem %s3, %s2715
  $region63: #{res_basic_block.3} parent=0 // pred_fallthru
    _
  %2717 = vsyncmov [#allocation3]
  %s2718 = vpop.sfrf %2717
  %p2719 = scmp.eq.s32.totalorder %s2718, 0
  %p2720 = pneg %p2719
  %2722 = shalt.err (%p2720)
  %s2723 = scalar_lea.sflag [#allocation3], 1
  %2724 = vsyncmov %s2723
  %s2725 = vpop.sfrf %2724
  %p2726 = scmp.eq.s32.totalorder %s2725, 0
  %p2727 = pneg %p2726
  %2729 = shalt.err (%p2727)

</llo_original>
